<compile_context>
chip_gen: v5e
topology: v5e:2x2
jax: 0.10.0
libtpu: 0.0.40
codegen_flags: <defaults>
</compile_context>

<pallas_src>
import functools
import math

import jax
import jax.numpy as jnp
from jax.experimental import pallas as pl
from jax.experimental.pallas import tpu as pltpu


# ----------------------------------------------------------------------------
# Fully fused DFENet forward kernel
# ----------------------------------------------------------------------------
def _dfenet_kernel(x_ref, dct_ref,
                   wqkv_ref, bqkv_ref, wo_ref, bo_ref,
                   w1_ref, b1_ref, w2_ref, b2_ref,
                   g1_ref, be1_ref, g2_ref, be2_ref,
                   hsum_ref, hbc_ref,
                   wq_ref, bq_ref, wk_ref, bk_ref, wv_ref, bv_ref,
                   wc1_ref, bc1_ref, se1a_ref, se1b_ref,
                   wc2_ref, bc2_ref, se2a_ref, se2b_ref,
                   wc3_ref, bc3_ref,
                   wfc1_ref, wfc2_ref, bfc_ref,
                   logit_ref, prob_ref,
                   *, B, S, F, n_layers, ks, eps, attn_scale, fdfem_scale):
    E = F

    # ---------------- branch 1: DCT along the time axis, per batch ----------
    D = dct_ref[...]                                  # (S, S)
    xb = [jnp.dot(D, x_ref[b], preferred_element_type=jnp.float32)
          for b in range(B)]
    h = jnp.concatenate(xb, axis=0) if B > 1 else xb[0]   # (B*S, F), row = b*S+s

    hsum = hsum_ref[...]                              # (E, H) head segment-sum
    hbc = hbc_ref[...]                                # (H, E) head broadcast

    # ------------- TransformerEncoder (post-norm, relu) ---------------------
    # Sequence axis == original batch axis (batch_first=False semantics).
    for li in range(n_layers):
        qkv = (jnp.dot(h, wqkv_ref[li], preferred_element_type=jnp.float32)
               + bqkv_ref[li])
        q = qkv[:, :E] * attn_scale
        k = qkv[:, E:2 * E]
        v = qkv[:, 2 * E:]

        outs = []
        for ti in range(B):                           # B (== seq length) is tiny
            qi = q[ti * S:(ti + 1) * S, :]            # (S, E)
            s_list = [jnp.dot(qi * k[tj * S:(tj + 1) * S, :], hsum,
                              preferred_element_type=jnp.float32)   # (S, H)
                      for tj in range(B)]
            m = s_list[0]
            for sc in s_list[1:]:
                m = jnp.maximum(m, sc)
            e_list = [jnp.exp(sc - m) for sc in s_list]
            den = e_list[0]
            for e in e_list[1:]:
                den = den + e
            inv = pl.reciprocal(den, approx=True)     # EUP slot, ~free
            acc = jnp.zeros((S, E), jnp.float32)
            for tj in range(B):
                p = jnp.dot(e_list[tj] * inv, hbc,
                            preferred_element_type=jnp.float32)     # (S, E)
                acc = acc + p * v[tj * S:(tj + 1) * S, :]
            outs.append(acc)
        attn = jnp.concatenate(outs, axis=0) if B > 1 else outs[0]
        attn = (jnp.dot(attn, wo_ref[li], preferred_element_type=jnp.float32)
                + bo_ref[li])

        # residual + LayerNorm 1  (dropout = identity)
        h1 = h + attn
        mu = jnp.mean(h1, axis=-1, keepdims=True)
        var = jnp.mean(jnp.square(h1 - mu), axis=-1, keepdims=True)
        h1 = (h1 - mu) * jax.lax.rsqrt(var + eps) * g1_ref[li] + be1_ref[li]

        # feed-forward (relu)
        ff = jnp.maximum(
            jnp.dot(h1, w1_ref[li], preferred_element_type=jnp.float32)
            + b1_ref[li], 0.0)
        ff = (jnp.dot(ff, w2_ref[li], preferred_element_type=jnp.float32)
              + b2_ref[li])

        # residual + LayerNorm 2
        h2 = h1 + ff
        mu2 = jnp.mean(h2, axis=-1, keepdims=True)
        var2 = jnp.mean(jnp.square(h2 - mu2), axis=-1, keepdims=True)
        h = (h2 - mu2) * jax.lax.rsqrt(var2 + eps) * g2_ref[li] + be2_ref[li]

    # ---------------- per-batch: FDFEM(last row) + conv branch --------------
    def conv_bn_relu(hb, w_ref, b_ref, ksz):
        # depthwise + pointwise + BatchNorm folded into one im2col matmul.
        L, cin = hb.shape
        left = (ksz - 1) // 2
        right = ksz - 1 - left
        parts = []
        if left:
            parts.append(jnp.zeros((left, cin), jnp.float32))
        parts.append(hb)
        if right:
            parts.append(jnp.zeros((right, cin), jnp.float32))
        hp = jnp.concatenate(parts, axis=0) if len(parts) > 1 else hb
        cols = jnp.concatenate([hp[j:j + L, :] for j in range(ksz)], axis=1)
        y = (jnp.dot(cols, w_ref[...], preferred_element_type=jnp.float32)
             + b_ref[...])
        return jnp.maximum(y, 0.0)                    # ReLU after folded BN

    def se(hb, wa_ref, wb_ref):
        y = jnp.mean(hb, axis=0, keepdims=True)       # (1, C) squeeze
        a = jnp.maximum(jnp.dot(y, wa_ref[...],
                                preferred_element_type=jnp.float32), 0.0)
        g = jax.nn.sigmoid(jnp.dot(a, wb_ref[...],
                                   preferred_element_type=jnp.float32))
        return hb * g                                 # excite

    # TODO(synk): convDrop / encoder dropouts treated as identity (inference).
    x1_parts, x2_parts = [], []
    for b in range(B):
        # FDFEM: only out[:, -1, :] feeds the head.
        tb = h[b * S:(b + 1) * S, :]                  # (S, F)
        ql = (jnp.dot(tb[S - 1:S, :], wq_ref[...],
                      preferred_element_type=jnp.float32) + bq_ref[...])
        kb = (jnp.dot(tb, wk_ref[...], preferred_element_type=jnp.float32)
              + bk_ref[...])
        vb = (jnp.dot(tb, wv_ref[...], preferred_element_type=jnp.float32)
              + bv_ref[...])
        sc = jax.lax.dot_general(ql, kb, (((1,), (1,)), ((), ())),
                                 preferred_element_type=jnp.float32) * fdfem_scale
        sc = sc - jnp.max(sc, axis=-1, keepdims=True)
        e = jnp.exp(sc)
        p = e * pl.reciprocal(jnp.sum(e, axis=-1, keepdims=True), approx=True)
        x1_parts.append(jnp.dot(p, vb, preferred_element_type=jnp.float32))

        # conv branch, channel-last (L, C) layout.
        hb = x_ref[b]                                 # (S, F) == (L, Cin)
        hb = conv_bn_relu(hb, wc1_ref, bc1_ref, ks[0])
        hb = se(hb, se1a_ref, se1b_ref)
        hb = conv_bn_relu(hb, wc2_ref, bc2_ref, ks[1])
        hb = se(hb, se2a_ref, se2b_ref)
        hb = conv_bn_relu(hb, wc3_ref, bc3_ref, ks[2])
        x2_parts.append(jnp.mean(hb, axis=0, keepdims=True))   # (1, c3)

    x1 = jnp.concatenate(x1_parts, axis=0) if B > 1 else x1_parts[0]   # (B, F)
    x2 = jnp.concatenate(x2_parts, axis=0) if B > 1 else x2_parts[0]   # (B, c3)

    # ---------------- head: split fc (across concat boundary) + softmax -----
    logits = (jnp.dot(x1, wfc1_ref[...], preferred_element_type=jnp.float32)
              + jnp.dot(x2, wfc2_ref[...], preferred_element_type=jnp.float32)
              + bfc_ref[...])                         # (B, nc)
    z = logits - jnp.max(logits, axis=-1, keepdims=True)
    ez = jnp.exp(z)
    logit_ref[...] = logits
    prob_ref[...] = ez / jnp.sum(ez, axis=-1, keepdims=True)


# ----------------------------------------------------------------------------
# Parameter init (torch layout, deterministic) and one-time kernel-layout prep
# ----------------------------------------------------------------------------
def init_params(key, num_classes, F, n_layers, c1, c2, c3, dff=2048, red=16):
    keys = iter(jax.random.split(key, 256))

    def nrm(shape, s=0.05):
        return s * jax.random.normal(next(keys), shape, jnp.float32)

    params = {}
    params["layers"] = [dict(
        in_proj_w=nrm((3 * F, F)), in_proj_b=nrm((3 * F,)),
        out_proj_w=nrm((F, F)), out_proj_b=nrm((F,)),
        lin1_w=nrm((dff, F)), lin1_b=nrm((dff,)),
        lin2_w=nrm((F, dff)), lin2_b=nrm((F,)),
        ln1_g=1.0 + nrm((F,)), ln1_b=nrm((F,)),
        ln2_g=1.0 + nrm((F,)), ln2_b=nrm((F,)),
    ) for _ in range(n_layers)]
    params["fdfem"] = dict(q_w=nrm((F, F)), q_b=nrm((F,)),
                           k_w=nrm((F, F)), k_b=nrm((F,)),
                           v_w=nrm((F, F)), v_b=nrm((F,)))

    def conv_block(cin, cout, k):
        return dict(wd=nrm((cin, k)), bd=nrm((cin,)),
                    wp=nrm((cout, cin)), bp=nrm((cout,)),
                    bn_g=1.0 + nrm((cout,)), bn_b=nrm((cout,)),
                    bn_m=nrm((cout,)),
                    bn_v=1.0 + 0.1 * jnp.abs(nrm((cout,))))

    params["conv1"] = conv_block(F, c1, 8)
    params["conv2"] = conv_block(c1, c2, 5)
    params["conv3"] = conv_block(c2, c3, 3)
    params["se1"] = dict(w1=nrm((c1 // red, c1)), w2=nrm((c1, c1 // red)))
    params["se2"] = dict(w1=nrm((c2 // red, c2)), w2=nrm((c2, c2 // red)))
    params["fc_w"] = nrm((num_classes, c3 + F))
    params["fc_b"] = nrm((num_classes,))
    return params


def dct_matrix(S):
    """DCT-II, norm='ortho' (scipy.fft.dct type=2, norm='ortho')."""
    n = jnp.arange(S, dtype=jnp.float32)
    k = n[:, None]
    D = jnp.cos(jnp.pi * (n[None, :] + 0.5) * k / S)
    scale = jnp.where(jnp.arange(S) == 0,
                      jnp.sqrt(1.0 / S), jnp.sqrt(2.0 / S)).astype(jnp.float32)
    return D * scale[:, None]


def prepare_params(params, *, S, F, nhead, bn_eps=1e-5):
    """One-time weight re-layout / folding (pre-transpose, BN fold, DCT, stacking)."""
    H = nhead
    Dh = F // H
    kp = {}
    kp["dct"] = dct_matrix(S)
    hbc = jnp.repeat(jnp.eye(H, dtype=jnp.float32), Dh, axis=1)   # (H, E)
    kp["head_bcast"] = hbc
    kp["head_sum"] = hbc.T                                        # (E, H)

    def stk(fn):
        return jnp.stack([fn(lp) for lp in params["layers"]])

    kp["wqkv"] = stk(lambda lp: lp["in_proj_w"].T)
    kp["bqkv"] = stk(lambda lp: lp["in_proj_b"].reshape(1, -1))
    kp["wo"] = stk(lambda lp: lp["out_proj_w"].T)
    kp["bo"] = stk(lambda lp: lp["out_proj_b"].reshape(1, -1))
    kp["w1"] = stk(lambda lp: lp["lin1_w"].T)
    kp["b1"] = stk(lambda lp: lp["lin1_b"].reshape(1, -1))
    kp["w2"] = stk(lambda lp: lp["lin2_w"].T)
    kp["b2"] = stk(lambda lp: lp["lin2_b"].reshape(1, -1))
    kp["g1"] = stk(lambda lp: lp["ln1_g"].reshape(1, -1))
    kp["be1"] = stk(lambda lp: lp["ln1_b"].reshape(1, -1))
    kp["g2"] = stk(lambda lp: lp["ln2_g"].reshape(1, -1))
    kp["be2"] = stk(lambda lp: lp["ln2_b"].reshape(1, -1))

    fd = params["fdfem"]
    kp["fdfem"] = dict(wq=fd["q_w"].T, bq=fd["q_b"].reshape(1, -1),
                       wk=fd["k_w"].T, bk=fd["k_b"].reshape(1, -1),
                       wv=fd["v_w"].T, bv=fd["v_b"].reshape(1, -1))

    convs = []
    for name in ("conv1", "conv2", "conv3"):
        c = params[name]
        wd, bd, wp, bp = c["wd"], c["bd"], c["wp"], c["bp"]
        scale = c["bn_g"] / jnp.sqrt(c["bn_v"] + bn_eps)          # BN (running stats)
        shift = c["bn_b"] - c["bn_m"] * scale
        k = wd.shape[1]
        cin, cout = wd.shape[0], wp.shape[0]
        # W_eff[j*Cin + ci, co] = wd[ci, j] * wp[co, ci] * bn_scale[co]
        w_eff = (jnp.einsum("cj,oc->jco", wd, wp).reshape(k * cin, cout)
                 * scale[None, :])
        b_eff = (bp + wp @ bd) * scale + shift
        convs.append(dict(w=w_eff, b=b_eff.reshape(1, -1)))
    kp["convs"] = convs
    kp["se1"] = dict(wa=params["se1"]["w1"].T, wb=params["se1"]["w2"].T)
    kp["se2"] = dict(wa=params["se2"]["w1"].T, wb=params["se2"]["w2"].T)
    kp["wfc1"] = params["fc_w"][:, :F].T
    kp["wfc2"] = params["fc_w"][:, F:].T
    kp["bfc"] = params["fc_b"].reshape(1, -1)
    return kp


# ----------------------------------------------------------------------------
# DFENet forward (jitted): ONE pallas_call for the whole forward
# ----------------------------------------------------------------------------
@jax.jit
def dfenet_forward(x, kp):
    B, S, F = x.shape
    n_layers = kp["wqkv"].shape[0]
    H = kp["head_bcast"].shape[0]
    Dh = F // H
    nc = kp["bfc"].shape[1]

    w1c, b1c = kp["convs"][0]["w"], kp["convs"][0]["b"]
    w2c, b2c = kp["convs"][1]["w"], kp["convs"][1]["b"]
    w3c, b3c = kp["convs"][2]["w"], kp["convs"][2]["b"]
    k1 = w1c.shape[0] // F
    k2 = w2c.shape[0] // w1c.shape[1]
    k3 = w3c.shape[0] // w2c.shape[1]

    kern = functools.partial(
        _dfenet_kernel, B=B, S=S, F=F, n_layers=n_layers,
        ks=(k1, k2, k3), eps=1e-5,
        attn_scale=1.0 / math.sqrt(Dh), fdfem_scale=1.0 / math.sqrt(F))

    fd = kp["fdfem"]
    args = (x, kp["dct"],
            kp["wqkv"], kp["bqkv"], kp["wo"], kp["bo"],
            kp["w1"], kp["b1"], kp["w2"], kp["b2"],
            kp["g1"], kp["be1"], kp["g2"], kp["be2"],
            kp["head_sum"], kp["head_bcast"],
            fd["wq"], fd["bq"], fd["wk"], fd["bk"], fd["wv"], fd["bv"],
            w1c, b1c, kp["se1"]["wa"], kp["se1"]["wb"],
            w2c, b2c, kp["se2"]["wa"], kp["se2"]["wb"],
            w3c, b3c,
            kp["wfc1"], kp["wfc2"], kp["bfc"])

    logits, probs = pl.pallas_call(
        kern,
        out_shape=(jax.ShapeDtypeStruct((B, nc), jnp.float32),
                   jax.ShapeDtypeStruct((B, nc), jnp.float32)),
        compiler_params=pltpu.CompilerParams(vmem_limit_bytes=32 * 1024 * 1024),
    )(*args)
    return logits, probs


if __name__ == "__main__":
    B, S, F = 2, 8, 16          # batch, seq_len, num_features
    num_classes = 5
    n_layers = 2
    nhead = 2
    c1 = c2 = c3 = 32           # conv1_nf, conv2_nf, conv3_nf (SE reduction=16)

    key = jax.random.PRNGKey(0)
    kx, kw = jax.random.split(key)
    x = jax.random.normal(kx, (B, S, F), jnp.float32)
    raw_params = init_params(kw, num_classes, F, n_layers, c1, c2, c3)
    kparams = prepare_params(raw_params, S=S, F=F, nhead=nhead)

    logits, probs = dfenet_forward(x, kparams)
    jax.block_until_ready((logits, probs))

    assert logits.shape == (B, num_classes)
    assert probs.shape == (B, num_classes)
    assert bool(jnp.all(jnp.isfinite(logits))) and bool(jnp.all(jnp.isfinite(probs)))
    assert bool(jnp.allclose(jnp.sum(probs, axis=-1), 1.0, atol=1e-3))
    print("KERNEL_OK")
</pallas_src>

<mosaic_0001>
module attributes {stable_mosaic.version = 11 : i64} {
  func.func @_dfenet_kernel(%arg0: memref<2x8x16xf32, #tpu.memory_space<vmem>>, %arg1: memref<8x8xf32, #tpu.memory_space<vmem>>, %arg2: memref<2x16x48xf32, #tpu.memory_space<vmem>>, %arg3: memref<2x1x48xf32, #tpu.memory_space<vmem>>, %arg4: memref<2x16x16xf32, #tpu.memory_space<vmem>>, %arg5: memref<2x1x16xf32, #tpu.memory_space<vmem>>, %arg6: memref<2x16x2048xf32, #tpu.memory_space<vmem>>, %arg7: memref<2x1x2048xf32, #tpu.memory_space<vmem>>, %arg8: memref<2x2048x16xf32, #tpu.memory_space<vmem>>, %arg9: memref<2x1x16xf32, #tpu.memory_space<vmem>>, %arg10: memref<2x1x16xf32, #tpu.memory_space<vmem>>, %arg11: memref<2x1x16xf32, #tpu.memory_space<vmem>>, %arg12: memref<2x1x16xf32, #tpu.memory_space<vmem>>, %arg13: memref<2x1x16xf32, #tpu.memory_space<vmem>>, %arg14: memref<16x2xf32, #tpu.memory_space<vmem>>, %arg15: memref<2x16xf32, #tpu.memory_space<vmem>>, %arg16: memref<16x16xf32, #tpu.memory_space<vmem>>, %arg17: memref<1x16xf32, #tpu.memory_space<vmem>>, %arg18: memref<16x16xf32, #tpu.memory_space<vmem>>, %arg19: memref<1x16xf32, #tpu.memory_space<vmem>>, %arg20: memref<16x16xf32, #tpu.memory_space<vmem>>, %arg21: memref<1x16xf32, #tpu.memory_space<vmem>>, %arg22: memref<128x32xf32, #tpu.memory_space<vmem>>, %arg23: memref<1x32xf32, #tpu.memory_space<vmem>>, %arg24: memref<32x2xf32, #tpu.memory_space<vmem>>, %arg25: memref<2x32xf32, #tpu.memory_space<vmem>>, %arg26: memref<160x32xf32, #tpu.memory_space<vmem>>, %arg27: memref<1x32xf32, #tpu.memory_space<vmem>>, %arg28: memref<32x2xf32, #tpu.memory_space<vmem>>, %arg29: memref<2x32xf32, #tpu.memory_space<vmem>>, %arg30: memref<96x32xf32, #tpu.memory_space<vmem>>, %arg31: memref<1x32xf32, #tpu.memory_space<vmem>>, %arg32: memref<16x5xf32, #tpu.memory_space<vmem>>, %arg33: memref<32x5xf32, #tpu.memory_space<vmem>>, %arg34: memref<1x5xf32, #tpu.memory_space<vmem>>, %arg35: memref<2x5xf32, #tpu.memory_space<vmem>>, %arg36: memref<2x5xf32, #tpu.memory_space<vmem>>) attributes {dimension_semantics = [], scalar_prefetch = 0 : i64, scratch_operands = 0 : i64, tpu.core_type = #tpu.core_type<tc>} {
    %c0 = arith.constant 0 : index
    %c0_0 = arith.constant 0 : index
    %0 = vector.load %arg1[%c0, %c0_0] : memref<8x8xf32, #tpu.memory_space<vmem>>, vector<8x8xf32>
    %c0_1 = arith.constant 0 : index
    %c0_2 = arith.constant 0 : index
    %c0_3 = arith.constant 0 : index
    %1 = vector.load %arg0[%c0_1, %c0_2, %c0_3] : memref<2x8x16xf32, #tpu.memory_space<vmem>>, vector<1x8x16xf32>
    %2 = vector.shape_cast %1 : vector<1x8x16xf32> to vector<8x16xf32>
    %cst = arith.constant dense<0.000000e+00> : vector<8x16xf32>
    %3 = tpu.matmul %0, %2, %cst {dimension_numbers = #tpu.dot_dimension_numbers<[1], [0], [0], [1], [0, 0, 1, 1], [], []>} : vector<8x8xf32>, vector<8x16xf32>, vector<8x16xf32> -> vector<8x16xf32>
    %c1 = arith.constant 1 : index
    %c0_4 = arith.constant 0 : index
    %c0_5 = arith.constant 0 : index
    %4 = vector.load %arg0[%c1, %c0_4, %c0_5] : memref<2x8x16xf32, #tpu.memory_space<vmem>>, vector<1x8x16xf32>
    %5 = vector.shape_cast %4 : vector<1x8x16xf32> to vector<8x16xf32>
    %cst_6 = arith.constant dense<0.000000e+00> : vector<8x16xf32>
    %6 = tpu.matmul %0, %5, %cst_6 {dimension_numbers = #tpu.dot_dimension_numbers<[1], [0], [0], [1], [0, 0, 1, 1], [], []>} : vector<8x8xf32>, vector<8x16xf32>, vector<8x16xf32> -> vector<8x16xf32>
    %7 = tpu.concatenate %3, %6 in 0 : vector<8x16xf32>, vector<8x16xf32> -> vector<16x16xf32>
    %c0_7 = arith.constant 0 : index
    %c0_8 = arith.constant 0 : index
    %8 = vector.load %arg14[%c0_7, %c0_8] : memref<16x2xf32, #tpu.memory_space<vmem>>, vector<16x2xf32>
    %c0_9 = arith.constant 0 : index
    %c0_10 = arith.constant 0 : index
    %9 = vector.load %arg15[%c0_9, %c0_10] : memref<2x16xf32, #tpu.memory_space<vmem>>, vector<2x16xf32>
    %c0_11 = arith.constant 0 : index
    %c0_12 = arith.constant 0 : index
    %c0_13 = arith.constant 0 : index
    %10 = vector.load %arg2[%c0_11, %c0_12, %c0_13] : memref<2x16x48xf32, #tpu.memory_space<vmem>>, vector<1x16x48xf32>
    %11 = vector.shape_cast %10 : vector<1x16x48xf32> to vector<16x48xf32>
    %cst_14 = arith.constant dense<0.000000e+00> : vector<16x48xf32>
    %12 = tpu.matmul %7, %11, %cst_14 {dimension_numbers = #tpu.dot_dimension_numbers<[1], [0], [0], [1], [0, 0, 1, 1], [], []>} : vector<16x16xf32>, vector<16x48xf32>, vector<16x48xf32> -> vector<16x48xf32>
    %c0_15 = arith.constant 0 : index
    %c0_16 = arith.constant 0 : index
    %c0_17 = arith.constant 0 : index
    %13 = vector.load %arg3[%c0_15, %c0_16, %c0_17] : memref<2x1x48xf32, #tpu.memory_space<vmem>>, vector<1x1x48xf32>
    %14 = vector.shape_cast %13 : vector<1x1x48xf32> to vector<1x48xf32>
    %15 = vector.broadcast %14 : vector<1x48xf32> to vector<16x48xf32>
    %16 = arith.addf %12, %15 : vector<16x48xf32>
    %17 = vector.extract_strided_slice %16 {offsets = [0, 0], sizes = [16, 16], strides = [1, 1]} : vector<16x48xf32> to vector<16x16xf32>
    %cst_18 = arith.constant 0.353553385 : f32
    %18 = vector.broadcast %cst_18 : f32 to vector<16x16xf32>
    %19 = arith.mulf %17, %18 : vector<16x16xf32>
    %20 = vector.extract_strided_slice %16 {offsets = [0, 16], sizes = [16, 16], strides = [1, 1]} : vector<16x48xf32> to vector<16x16xf32>
    %21 = vector.extract_strided_slice %16 {offsets = [0, 32], sizes = [16, 16], strides = [1, 1]} : vector<16x48xf32> to vector<16x16xf32>
    %22 = vector.extract_strided_slice %19 {offsets = [0, 0], sizes = [8, 16], strides = [1, 1]} : vector<16x16xf32> to vector<8x16xf32>
    %23 = vector.extract_strided_slice %20 {offsets = [0, 0], sizes = [8, 16], strides = [1, 1]} : vector<16x16xf32> to vector<8x16xf32>
    %24 = arith.mulf %22, %23 : vector<8x16xf32>
    %cst_19 = arith.constant dense<0.000000e+00> : vector<8x2xf32>
    %25 = tpu.matmul %24, %8, %cst_19 {dimension_numbers = #tpu.dot_dimension_numbers<[1], [0], [0], [1], [0, 0, 1, 1], [], []>} : vector<8x16xf32>, vector<16x2xf32>, vector<8x2xf32> -> vector<8x2xf32>
    %26 = vector.extract_strided_slice %20 {offsets = [8, 0], sizes = [8, 16], strides = [1, 1]} : vector<16x16xf32> to vector<8x16xf32>
    %27 = arith.mulf %22, %26 : vector<8x16xf32>
    %cst_20 = arith.constant dense<0.000000e+00> : vector<8x2xf32>
    %28 = tpu.matmul %27, %8, %cst_20 {dimension_numbers = #tpu.dot_dimension_numbers<[1], [0], [0], [1], [0, 0, 1, 1], [], []>} : vector<8x16xf32>, vector<16x2xf32>, vector<8x2xf32> -> vector<8x2xf32>
    %29 = arith.maximumf %25, %28 : vector<8x2xf32>
    %30 = arith.subf %25, %29 : vector<8x2xf32>
    %31 = math.exp %30 : vector<8x2xf32>
    %32 = arith.subf %28, %29 : vector<8x2xf32>
    %33 = math.exp %32 : vector<8x2xf32>
    %34 = arith.addf %31, %33 : vector<8x2xf32>
    %35 = tpu.reciprocal %34 {approx = true} : vector<8x2xf32> -> vector<8x2xf32>
    %cst_21 = arith.constant 0.000000e+00 : f32
    %36 = vector.broadcast %cst_21 : f32 to vector<8x16xf32>
    %37 = arith.mulf %31, %35 : vector<8x2xf32>
    %cst_22 = arith.constant dense<0.000000e+00> : vector<8x16xf32>
    %38 = tpu.matmul %37, %9, %cst_22 {dimension_numbers = #tpu.dot_dimension_numbers<[1], [0], [0], [1], [0, 0, 1, 1], [], []>} : vector<8x2xf32>, vector<2x16xf32>, vector<8x16xf32> -> vector<8x16xf32>
    %39 = vector.extract_strided_slice %21 {offsets = [0, 0], sizes = [8, 16], strides = [1, 1]} : vector<16x16xf32> to vector<8x16xf32>
    %40 = arith.mulf %38, %39 : vector<8x16xf32>
    %41 = arith.addf %36, %40 : vector<8x16xf32>
    %42 = arith.mulf %33, %35 : vector<8x2xf32>
    %cst_23 = arith.constant dense<0.000000e+00> : vector<8x16xf32>
    %43 = tpu.matmul %42, %9, %cst_23 {dimension_numbers = #tpu.dot_dimension_numbers<[1], [0], [0], [1], [0, 0, 1, 1], [], []>} : vector<8x2xf32>, vector<2x16xf32>, vector<8x16xf32> -> vector<8x16xf32>
    %44 = vector.extract_strided_slice %21 {offsets = [8, 0], sizes = [8, 16], strides = [1, 1]} : vector<16x16xf32> to vector<8x16xf32>
    %45 = arith.mulf %43, %44 : vector<8x16xf32>
    %46 = arith.addf %41, %45 : vector<8x16xf32>
    %47 = vector.extract_strided_slice %19 {offsets = [8, 0], sizes = [8, 16], strides = [1, 1]} : vector<16x16xf32> to vector<8x16xf32>
    %48 = vector.extract_strided_slice %20 {offsets = [0, 0], sizes = [8, 16], strides = [1, 1]} : vector<16x16xf32> to vector<8x16xf32>
    %49 = arith.mulf %47, %48 : vector<8x16xf32>
    %cst_24 = arith.constant dense<0.000000e+00> : vector<8x2xf32>
    %50 = tpu.matmul %49, %8, %cst_24 {dimension_numbers = #tpu.dot_dimension_numbers<[1], [0], [0], [1], [0, 0, 1, 1], [], []>} : vector<8x16xf32>, vector<16x2xf32>, vector<8x2xf32> -> vector<8x2xf32>
    %51 = vector.extract_strided_slice %20 {offsets = [8, 0], sizes = [8, 16], strides = [1, 1]} : vector<16x16xf32> to vector<8x16xf32>
    %52 = arith.mulf %47, %51 : vector<8x16xf32>
    %cst_25 = arith.constant dense<0.000000e+00> : vector<8x2xf32>
    %53 = tpu.matmul %52, %8, %cst_25 {dimension_numbers = #tpu.dot_dimension_numbers<[1], [0], [0], [1], [0, 0, 1, 1], [], []>} : vector<8x16xf32>, vector<16x2xf32>, vector<8x2xf32> -> vector<8x2xf32>
    %54 = arith.maximumf %50, %53 : vector<8x2xf32>
    %55 = arith.subf %50, %54 : vector<8x2xf32>
    %56 = math.exp %55 : vector<8x2xf32>
    %57 = arith.subf %53, %54 : vector<8x2xf32>
    %58 = math.exp %57 : vector<8x2xf32>
    %59 = arith.addf %56, %58 : vector<8x2xf32>
    %60 = tpu.reciprocal %59 {approx = true} : vector<8x2xf32> -> vector<8x2xf32>
    %cst_26 = arith.constant 0.000000e+00 : f32
    %61 = vector.broadcast %cst_26 : f32 to vector<8x16xf32>
    %62 = arith.mulf %56, %60 : vector<8x2xf32>
    %cst_27 = arith.constant dense<0.000000e+00> : vector<8x16xf32>
    %63 = tpu.matmul %62, %9, %cst_27 {dimension_numbers = #tpu.dot_dimension_numbers<[1], [0], [0], [1], [0, 0, 1, 1], [], []>} : vector<8x2xf32>, vector<2x16xf32>, vector<8x16xf32> -> vector<8x16xf32>
    %64 = vector.extract_strided_slice %21 {offsets = [0, 0], sizes = [8, 16], strides = [1, 1]} : vector<16x16xf32> to vector<8x16xf32>
    %65 = arith.mulf %63, %64 : vector<8x16xf32>
    %66 = arith.addf %61, %65 : vector<8x16xf32>
    %67 = arith.mulf %58, %60 : vector<8x2xf32>
    %cst_28 = arith.constant dense<0.000000e+00> : vector<8x16xf32>
    %68 = tpu.matmul %67, %9, %cst_28 {dimension_numbers = #tpu.dot_dimension_numbers<[1], [0], [0], [1], [0, 0, 1, 1], [], []>} : vector<8x2xf32>, vector<2x16xf32>, vector<8x16xf32> -> vector<8x16xf32>
    %69 = vector.extract_strided_slice %21 {offsets = [8, 0], sizes = [8, 16], strides = [1, 1]} : vector<16x16xf32> to vector<8x16xf32>
    %70 = arith.mulf %68, %69 : vector<8x16xf32>
    %71 = arith.addf %66, %70 : vector<8x16xf32>
    %72 = tpu.concatenate %46, %71 in 0 : vector<8x16xf32>, vector<8x16xf32> -> vector<16x16xf32>
    %c0_29 = arith.constant 0 : index
    %c0_30 = arith.constant 0 : index
    %c0_31 = arith.constant 0 : index
    %73 = vector.load %arg4[%c0_29, %c0_30, %c0_31] : memref<2x16x16xf32, #tpu.memory_space<vmem>>, vector<1x16x16xf32>
    %74 = vector.shape_cast %73 : vector<1x16x16xf32> to vector<16x16xf32>
    %cst_32 = arith.constant dense<0.000000e+00> : vector<16x16xf32>
    %75 = tpu.matmul %72, %74, %cst_32 {dimension_numbers = #tpu.dot_dimension_numbers<[1], [0], [0], [1], [0, 0, 1, 1], [], []>} : vector<16x16xf32>, vector<16x16xf32>, vector<16x16xf32> -> vector<16x16xf32>
    %c0_33 = arith.constant 0 : index
    %c0_34 = arith.constant 0 : index
    %c0_35 = arith.constant 0 : index
    %76 = vector.load %arg5[%c0_33, %c0_34, %c0_35] : memref<2x1x16xf32, #tpu.memory_space<vmem>>, vector<1x1x16xf32>
    %77 = vector.shape_cast %76 : vector<1x1x16xf32> to vector<1x16xf32>
    %78 = vector.broadcast %77 : vector<1x16xf32> to vector<16x16xf32>
    %79 = arith.addf %75, %78 : vector<16x16xf32>
    %80 = arith.addf %7, %79 : vector<16x16xf32>
    %cst_36 = arith.constant dense<0.000000e+00> : vector<16xf32>
    %81 = vector.multi_reduction <add>, %80, %cst_36 [1] : vector<16x16xf32> to vector<16xf32>
    %82 = vector.shape_cast %81 : vector<16xf32> to vector<16x1xf32>
    %cst_37 = arith.constant 1.600000e+01 : f32
    %83 = vector.broadcast %cst_37 : f32 to vector<16x1xf32>
    %84 = arith.divf %82, %83 : vector<16x1xf32>
    %85 = vector.broadcast %84 : vector<16x1xf32> to vector<16x16xf32>
    %86 = arith.subf %80, %85 : vector<16x16xf32>
    %87 = arith.mulf %86, %86 : vector<16x16xf32>
    %cst_38 = arith.constant dense<0.000000e+00> : vector<16xf32>
    %88 = vector.multi_reduction <add>, %87, %cst_38 [1] : vector<16x16xf32> to vector<16xf32>
    %89 = vector.shape_cast %88 : vector<16xf32> to vector<16x1xf32>
    %cst_39 = arith.constant 1.600000e+01 : f32
    %90 = vector.broadcast %cst_39 : f32 to vector<16x1xf32>
    %91 = arith.divf %89, %90 : vector<16x1xf32>
    %92 = vector.broadcast %84 : vector<16x1xf32> to vector<16x16xf32>
    %93 = arith.subf %80, %92 : vector<16x16xf32>
    %cst_40 = arith.constant 9.99999974E-6 : f32
    %94 = vector.broadcast %cst_40 : f32 to vector<16x1xf32>
    %95 = arith.addf %91, %94 : vector<16x1xf32>
    %96 = math.rsqrt %95 : vector<16x1xf32>
    %97 = vector.broadcast %96 : vector<16x1xf32> to vector<16x16xf32>
    %98 = arith.mulf %93, %97 : vector<16x16xf32>
    %c0_41 = arith.constant 0 : index
    %c0_42 = arith.constant 0 : index
    %c0_43 = arith.constant 0 : index
    %99 = vector.load %arg10[%c0_41, %c0_42, %c0_43] : memref<2x1x16xf32, #tpu.memory_space<vmem>>, vector<1x1x16xf32>
    %100 = vector.shape_cast %99 : vector<1x1x16xf32> to vector<1x16xf32>
    %101 = vector.broadcast %100 : vector<1x16xf32> to vector<16x16xf32>
    %102 = arith.mulf %98, %101 : vector<16x16xf32>
    %c0_44 = arith.constant 0 : index
    %c0_45 = arith.constant 0 : index
    %c0_46 = arith.constant 0 : index
    %103 = vector.load %arg11[%c0_44, %c0_45, %c0_46] : memref<2x1x16xf32, #tpu.memory_space<vmem>>, vector<1x1x16xf32>
    %104 = vector.shape_cast %103 : vector<1x1x16xf32> to vector<1x16xf32>
    %105 = vector.broadcast %104 : vector<1x16xf32> to vector<16x16xf32>
    %106 = arith.addf %102, %105 : vector<16x16xf32>
    %c0_47 = arith.constant 0 : index
    %c0_48 = arith.constant 0 : index
    %c0_49 = arith.constant 0 : index
    %107 = vector.load %arg6[%c0_47, %c0_48, %c0_49] : memref<2x16x2048xf32, #tpu.memory_space<vmem>>, vector<1x16x2048xf32>
    %108 = vector.shape_cast %107 : vector<1x16x2048xf32> to vector<16x2048xf32>
    %cst_50 = arith.constant dense<0.000000e+00> : vector<16x2048xf32>
    %109 = tpu.matmul %106, %108, %cst_50 {dimension_numbers = #tpu.dot_dimension_numbers<[1], [0], [0], [1], [0, 0, 1, 1], [], []>} : vector<16x16xf32>, vector<16x2048xf32>, vector<16x2048xf32> -> vector<16x2048xf32>
    %c0_51 = arith.constant 0 : index
    %c0_52 = arith.constant 0 : index
    %c0_53 = arith.constant 0 : index
    %110 = vector.load %arg7[%c0_51, %c0_52, %c0_53] : memref<2x1x2048xf32, #tpu.memory_space<vmem>>, vector<1x1x2048xf32>
    %111 = vector.shape_cast %110 : vector<1x1x2048xf32> to vector<1x2048xf32>
    %112 = vector.broadcast %111 : vector<1x2048xf32> to vector<16x2048xf32>
    %113 = arith.addf %109, %112 : vector<16x2048xf32>
    %cst_54 = arith.constant 0.000000e+00 : f32
    %114 = vector.broadcast %cst_54 : f32 to vector<16x2048xf32>
    %115 = arith.maximumf %113, %114 : vector<16x2048xf32>
    %c0_55 = arith.constant 0 : index
    %c0_56 = arith.constant 0 : index
    %c0_57 = arith.constant 0 : index
    %116 = vector.load %arg8[%c0_55, %c0_56, %c0_57] : memref<2x2048x16xf32, #tpu.memory_space<vmem>>, vector<1x2048x16xf32>
    %117 = vector.shape_cast %116 : vector<1x2048x16xf32> to vector<2048x16xf32>
    %cst_58 = arith.constant dense<0.000000e+00> : vector<16x16xf32>
    %118 = tpu.matmul %115, %117, %cst_58 {dimension_numbers = #tpu.dot_dimension_numbers<[1], [0], [0], [1], [0, 0, 1, 1], [], []>} : vector<16x2048xf32>, vector<2048x16xf32>, vector<16x16xf32> -> vector<16x16xf32>
    %c0_59 = arith.constant 0 : index
    %c0_60 = arith.constant 0 : index
    %c0_61 = arith.constant 0 : index
    %119 = vector.load %arg9[%c0_59, %c0_60, %c0_61] : memref<2x1x16xf32, #tpu.memory_space<vmem>>, vector<1x1x16xf32>
    %120 = vector.shape_cast %119 : vector<1x1x16xf32> to vector<1x16xf32>
    %121 = vector.broadcast %120 : vector<1x16xf32> to vector<16x16xf32>
    %122 = arith.addf %118, %121 : vector<16x16xf32>
    %123 = arith.addf %106, %122 : vector<16x16xf32>
    %cst_62 = arith.constant dense<0.000000e+00> : vector<16xf32>
    %124 = vector.multi_reduction <add>, %123, %cst_62 [1] : vector<16x16xf32> to vector<16xf32>
    %125 = vector.shape_cast %124 : vector<16xf32> to vector<16x1xf32>
    %cst_63 = arith.constant 1.600000e+01 : f32
    %126 = vector.broadcast %cst_63 : f32 to vector<16x1xf32>
    %127 = arith.divf %125, %126 : vector<16x1xf32>
    %128 = vector.broadcast %127 : vector<16x1xf32> to vector<16x16xf32>
    %129 = arith.subf %123, %128 : vector<16x16xf32>
    %130 = arith.mulf %129, %129 : vector<16x16xf32>
    %cst_64 = arith.constant dense<0.000000e+00> : vector<16xf32>
    %131 = vector.multi_reduction <add>, %130, %cst_64 [1] : vector<16x16xf32> to vector<16xf32>
    %132 = vector.shape_cast %131 : vector<16xf32> to vector<16x1xf32>
    %cst_65 = arith.constant 1.600000e+01 : f32
    %133 = vector.broadcast %cst_65 : f32 to vector<16x1xf32>
    %134 = arith.divf %132, %133 : vector<16x1xf32>
    %135 = vector.broadcast %127 : vector<16x1xf32> to vector<16x16xf32>
    %136 = arith.subf %123, %135 : vector<16x16xf32>
    %cst_66 = arith.constant 9.99999974E-6 : f32
    %137 = vector.broadcast %cst_66 : f32 to vector<16x1xf32>
    %138 = arith.addf %134, %137 : vector<16x1xf32>
    %139 = math.rsqrt %138 : vector<16x1xf32>
    %140 = vector.broadcast %139 : vector<16x1xf32> to vector<16x16xf32>
    %141 = arith.mulf %136, %140 : vector<16x16xf32>
    %c0_67 = arith.constant 0 : index
    %c0_68 = arith.constant 0 : index
    %c0_69 = arith.constant 0 : index
    %142 = vector.load %arg12[%c0_67, %c0_68, %c0_69] : memref<2x1x16xf32, #tpu.memory_space<vmem>>, vector<1x1x16xf32>
    %143 = vector.shape_cast %142 : vector<1x1x16xf32> to vector<1x16xf32>
    %144 = vector.broadcast %143 : vector<1x16xf32> to vector<16x16xf32>
    %145 = arith.mulf %141, %144 : vector<16x16xf32>
    %c0_70 = arith.constant 0 : index
    %c0_71 = arith.constant 0 : index
    %c0_72 = arith.constant 0 : index
    %146 = vector.load %arg13[%c0_70, %c0_71, %c0_72] : memref<2x1x16xf32, #tpu.memory_space<vmem>>, vector<1x1x16xf32>
    %147 = vector.shape_cast %146 : vector<1x1x16xf32> to vector<1x16xf32>
    %148 = vector.broadcast %147 : vector<1x16xf32> to vector<16x16xf32>
    %149 = arith.addf %145, %148 : vector<16x16xf32>
    %c1_73 = arith.constant 1 : index
    %c0_74 = arith.constant 0 : index
    %c0_75 = arith.constant 0 : index
    %150 = vector.load %arg2[%c1_73, %c0_74, %c0_75] : memref<2x16x48xf32, #tpu.memory_space<vmem>>, vector<1x16x48xf32>
    %151 = vector.shape_cast %150 : vector<1x16x48xf32> to vector<16x48xf32>
    %cst_76 = arith.constant dense<0.000000e+00> : vector<16x48xf32>
    %152 = tpu.matmul %149, %151, %cst_76 {dimension_numbers = #tpu.dot_dimension_numbers<[1], [0], [0], [1], [0, 0, 1, 1], [], []>} : vector<16x16xf32>, vector<16x48xf32>, vector<16x48xf32> -> vector<16x48xf32>
    %c1_77 = arith.constant 1 : index
    %c0_78 = arith.constant 0 : index
    %c0_79 = arith.constant 0 : index
    %153 = vector.load %arg3[%c1_77, %c0_78, %c0_79] : memref<2x1x48xf32, #tpu.memory_space<vmem>>, vector<1x1x48xf32>
    %154 = vector.shape_cast %153 : vector<1x1x48xf32> to vector<1x48xf32>
    %155 = vector.broadcast %154 : vector<1x48xf32> to vector<16x48xf32>
    %156 = arith.addf %152, %155 : vector<16x48xf32>
    %157 = vector.extract_strided_slice %156 {offsets = [0, 0], sizes = [16, 16], strides = [1, 1]} : vector<16x48xf32> to vector<16x16xf32>
    %cst_80 = arith.constant 0.353553385 : f32
    %158 = vector.broadcast %cst_80 : f32 to vector<16x16xf32>
    %159 = arith.mulf %157, %158 : vector<16x16xf32>
    %160 = vector.extract_strided_slice %156 {offsets = [0, 16], sizes = [16, 16], strides = [1, 1]} : vector<16x48xf32> to vector<16x16xf32>
    %161 = vector.extract_strided_slice %156 {offsets = [0, 32], sizes = [16, 16], strides = [1, 1]} : vector<16x48xf32> to vector<16x16xf32>
    %162 = vector.extract_strided_slice %159 {offsets = [0, 0], sizes = [8, 16], strides = [1, 1]} : vector<16x16xf32> to vector<8x16xf32>
    %163 = vector.extract_strided_slice %160 {offsets = [0, 0], sizes = [8, 16], strides = [1, 1]} : vector<16x16xf32> to vector<8x16xf32>
    %164 = arith.mulf %162, %163 : vector<8x16xf32>
    %cst_81 = arith.constant dense<0.000000e+00> : vector<8x2xf32>
    %165 = tpu.matmul %164, %8, %cst_81 {dimension_numbers = #tpu.dot_dimension_numbers<[1], [0], [0], [1], [0, 0, 1, 1], [], []>} : vector<8x16xf32>, vector<16x2xf32>, vector<8x2xf32> -> vector<8x2xf32>
    %166 = vector.extract_strided_slice %160 {offsets = [8, 0], sizes = [8, 16], strides = [1, 1]} : vector<16x16xf32> to vector<8x16xf32>
    %167 = arith.mulf %162, %166 : vector<8x16xf32>
    %cst_82 = arith.constant dense<0.000000e+00> : vector<8x2xf32>
    %168 = tpu.matmul %167, %8, %cst_82 {dimension_numbers = #tpu.dot_dimension_numbers<[1], [0], [0], [1], [0, 0, 1, 1], [], []>} : vector<8x16xf32>, vector<16x2xf32>, vector<8x2xf32> -> vector<8x2xf32>
    %169 = arith.maximumf %165, %168 : vector<8x2xf32>
    %170 = arith.subf %165, %169 : vector<8x2xf32>
    %171 = math.exp %170 : vector<8x2xf32>
    %172 = arith.subf %168, %169 : vector<8x2xf32>
    %173 = math.exp %172 : vector<8x2xf32>
    %174 = arith.addf %171, %173 : vector<8x2xf32>
    %175 = tpu.reciprocal %174 {approx = true} : vector<8x2xf32> -> vector<8x2xf32>
    %cst_83 = arith.constant 0.000000e+00 : f32
    %176 = vector.broadcast %cst_83 : f32 to vector<8x16xf32>
    %177 = arith.mulf %171, %175 : vector<8x2xf32>
    %cst_84 = arith.constant dense<0.000000e+00> : vector<8x16xf32>
    %178 = tpu.matmul %177, %9, %cst_84 {dimension_numbers = #tpu.dot_dimension_numbers<[1], [0], [0], [1], [0, 0, 1, 1], [], []>} : vector<8x2xf32>, vector<2x16xf32>, vector<8x16xf32> -> vector<8x16xf32>
    %179 = vector.extract_strided_slice %161 {offsets = [0, 0], sizes = [8, 16], strides = [1, 1]} : vector<16x16xf32> to vector<8x16xf32>
    %180 = arith.mulf %178, %179 : vector<8x16xf32>
    %181 = arith.addf %176, %180 : vector<8x16xf32>
    %182 = arith.mulf %173, %175 : vector<8x2xf32>
    %cst_85 = arith.constant dense<0.000000e+00> : vector<8x16xf32>
    %183 = tpu.matmul %182, %9, %cst_85 {dimension_numbers = #tpu.dot_dimension_numbers<[1], [0], [0], [1], [0, 0, 1, 1], [], []>} : vector<8x2xf32>, vector<2x16xf32>, vector<8x16xf32> -> vector<8x16xf32>
    %184 = vector.extract_strided_slice %161 {offsets = [8, 0], sizes = [8, 16], strides = [1, 1]} : vector<16x16xf32> to vector<8x16xf32>
    %185 = arith.mulf %183, %184 : vector<8x16xf32>
    %186 = arith.addf %181, %185 : vector<8x16xf32>
    %187 = vector.extract_strided_slice %159 {offsets = [8, 0], sizes = [8, 16], strides = [1, 1]} : vector<16x16xf32> to vector<8x16xf32>
    %188 = vector.extract_strided_slice %160 {offsets = [0, 0], sizes = [8, 16], strides = [1, 1]} : vector<16x16xf32> to vector<8x16xf32>
    %189 = arith.mulf %187, %188 : vector<8x16xf32>
    %cst_86 = arith.constant dense<0.000000e+00> : vector<8x2xf32>
    %190 = tpu.matmul %189, %8, %cst_86 {dimension_numbers = #tpu.dot_dimension_numbers<[1], [0], [0], [1], [0, 0, 1, 1], [], []>} : vector<8x16xf32>, vector<16x2xf32>, vector<8x2xf32> -> vector<8x2xf32>
    %191 = vector.extract_strided_slice %160 {offsets = [8, 0], sizes = [8, 16], strides = [1, 1]} : vector<16x16xf32> to vector<8x16xf32>
    %192 = arith.mulf %187, %191 : vector<8x16xf32>
    %cst_87 = arith.constant dense<0.000000e+00> : vector<8x2xf32>
    %193 = tpu.matmul %192, %8, %cst_87 {dimension_numbers = #tpu.dot_dimension_numbers<[1], [0], [0], [1], [0, 0, 1, 1], [], []>} : vector<8x16xf32>, vector<16x2xf32>, vector<8x2xf32> -> vector<8x2xf32>
    %194 = arith.maximumf %190, %193 : vector<8x2xf32>
    %195 = arith.subf %190, %194 : vector<8x2xf32>
    %196 = math.exp %195 : vector<8x2xf32>
    %197 = arith.subf %193, %194 : vector<8x2xf32>
    %198 = math.exp %197 : vector<8x2xf32>
    %199 = arith.addf %196, %198 : vector<8x2xf32>
    %200 = tpu.reciprocal %199 {approx = true} : vector<8x2xf32> -> vector<8x2xf32>
    %cst_88 = arith.constant 0.000000e+00 : f32
    %201 = vector.broadcast %cst_88 : f32 to vector<8x16xf32>
    %202 = arith.mulf %196, %200 : vector<8x2xf32>
    %cst_89 = arith.constant dense<0.000000e+00> : vector<8x16xf32>
    %203 = tpu.matmul %202, %9, %cst_89 {dimension_numbers = #tpu.dot_dimension_numbers<[1], [0], [0], [1], [0, 0, 1, 1], [], []>} : vector<8x2xf32>, vector<2x16xf32>, vector<8x16xf32> -> vector<8x16xf32>
    %204 = vector.extract_strided_slice %161 {offsets = [0, 0], sizes = [8, 16], strides = [1, 1]} : vector<16x16xf32> to vector<8x16xf32>
    %205 = arith.mulf %203, %204 : vector<8x16xf32>
    %206 = arith.addf %201, %205 : vector<8x16xf32>
    %207 = arith.mulf %198, %200 : vector<8x2xf32>
    %cst_90 = arith.constant dense<0.000000e+00> : vector<8x16xf32>
    %208 = tpu.matmul %207, %9, %cst_90 {dimension_numbers = #tpu.dot_dimension_numbers<[1], [0], [0], [1], [0, 0, 1, 1], [], []>} : vector<8x2xf32>, vector<2x16xf32>, vector<8x16xf32> -> vector<8x16xf32>
    %209 = vector.extract_strided_slice %161 {offsets = [8, 0], sizes = [8, 16], strides = [1, 1]} : vector<16x16xf32> to vector<8x16xf32>
    %210 = arith.mulf %208, %209 : vector<8x16xf32>
    %211 = arith.addf %206, %210 : vector<8x16xf32>
    %212 = tpu.concatenate %186, %211 in 0 : vector<8x16xf32>, vector<8x16xf32> -> vector<16x16xf32>
    %c1_91 = arith.constant 1 : index
    %c0_92 = arith.constant 0 : index
    %c0_93 = arith.constant 0 : index
    %213 = vector.load %arg4[%c1_91, %c0_92, %c0_93] : memref<2x16x16xf32, #tpu.memory_space<vmem>>, vector<1x16x16xf32>
    %214 = vector.shape_cast %213 : vector<1x16x16xf32> to vector<16x16xf32>
    %cst_94 = arith.constant dense<0.000000e+00> : vector<16x16xf32>
    %215 = tpu.matmul %212, %214, %cst_94 {dimension_numbers = #tpu.dot_dimension_numbers<[1], [0], [0], [1], [0, 0, 1, 1], [], []>} : vector<16x16xf32>, vector<16x16xf32>, vector<16x16xf32> -> vector<16x16xf32>
    %c1_95 = arith.constant 1 : index
    %c0_96 = arith.constant 0 : index
    %c0_97 = arith.constant 0 : index
    %216 = vector.load %arg5[%c1_95, %c0_96, %c0_97] : memref<2x1x16xf32, #tpu.memory_space<vmem>>, vector<1x1x16xf32>
    %217 = vector.shape_cast %216 : vector<1x1x16xf32> to vector<1x16xf32>
    %218 = vector.broadcast %217 : vector<1x16xf32> to vector<16x16xf32>
    %219 = arith.addf %215, %218 : vector<16x16xf32>
    %220 = arith.addf %149, %219 : vector<16x16xf32>
    %cst_98 = arith.constant dense<0.000000e+00> : vector<16xf32>
    %221 = vector.multi_reduction <add>, %220, %cst_98 [1] : vector<16x16xf32> to vector<16xf32>
    %222 = vector.shape_cast %221 : vector<16xf32> to vector<16x1xf32>
    %cst_99 = arith.constant 1.600000e+01 : f32
    %223 = vector.broadcast %cst_99 : f32 to vector<16x1xf32>
    %224 = arith.divf %222, %223 : vector<16x1xf32>
    %225 = vector.broadcast %224 : vector<16x1xf32> to vector<16x16xf32>
    %226 = arith.subf %220, %225 : vector<16x16xf32>
    %227 = arith.mulf %226, %226 : vector<16x16xf32>
    %cst_100 = arith.constant dense<0.000000e+00> : vector<16xf32>
    %228 = vector.multi_reduction <add>, %227, %cst_100 [1] : vector<16x16xf32> to vector<16xf32>
    %229 = vector.shape_cast %228 : vector<16xf32> to vector<16x1xf32>
    %cst_101 = arith.constant 1.600000e+01 : f32
    %230 = vector.broadcast %cst_101 : f32 to vector<16x1xf32>
    %231 = arith.divf %229, %230 : vector<16x1xf32>
    %232 = vector.broadcast %224 : vector<16x1xf32> to vector<16x16xf32>
    %233 = arith.subf %220, %232 : vector<16x16xf32>
    %cst_102 = arith.constant 9.99999974E-6 : f32
    %234 = vector.broadcast %cst_102 : f32 to vector<16x1xf32>
    %235 = arith.addf %231, %234 : vector<16x1xf32>
    %236 = math.rsqrt %235 : vector<16x1xf32>
    %237 = vector.broadcast %236 : vector<16x1xf32> to vector<16x16xf32>
    %238 = arith.mulf %233, %237 : vector<16x16xf32>
    %c1_103 = arith.constant 1 : index
    %c0_104 = arith.constant 0 : index
    %c0_105 = arith.constant 0 : index
    %239 = vector.load %arg10[%c1_103, %c0_104, %c0_105] : memref<2x1x16xf32, #tpu.memory_space<vmem>>, vector<1x1x16xf32>
    %240 = vector.shape_cast %239 : vector<1x1x16xf32> to vector<1x16xf32>
    %241 = vector.broadcast %240 : vector<1x16xf32> to vector<16x16xf32>
    %242 = arith.mulf %238, %241 : vector<16x16xf32>
    %c1_106 = arith.constant 1 : index
    %c0_107 = arith.constant 0 : index
    %c0_108 = arith.constant 0 : index
    %243 = vector.load %arg11[%c1_106, %c0_107, %c0_108] : memref<2x1x16xf32, #tpu.memory_space<vmem>>, vector<1x1x16xf32>
    %244 = vector.shape_cast %243 : vector<1x1x16xf32> to vector<1x16xf32>
    %245 = vector.broadcast %244 : vector<1x16xf32> to vector<16x16xf32>
    %246 = arith.addf %242, %245 : vector<16x16xf32>
    %c1_109 = arith.constant 1 : index
    %c0_110 = arith.constant 0 : index
    %c0_111 = arith.constant 0 : index
    %247 = vector.load %arg6[%c1_109, %c0_110, %c0_111] : memref<2x16x2048xf32, #tpu.memory_space<vmem>>, vector<1x16x2048xf32>
    %248 = vector.shape_cast %247 : vector<1x16x2048xf32> to vector<16x2048xf32>
    %cst_112 = arith.constant dense<0.000000e+00> : vector<16x2048xf32>
    %249 = tpu.matmul %246, %248, %cst_112 {dimension_numbers = #tpu.dot_dimension_numbers<[1], [0], [0], [1], [0, 0, 1, 1], [], []>} : vector<16x16xf32>, vector<16x2048xf32>, vector<16x2048xf32> -> vector<16x2048xf32>
    %c1_113 = arith.constant 1 : index
    %c0_114 = arith.constant 0 : index
    %c0_115 = arith.constant 0 : index
    %250 = vector.load %arg7[%c1_113, %c0_114, %c0_115] : memref<2x1x2048xf32, #tpu.memory_space<vmem>>, vector<1x1x2048xf32>
    %251 = vector.shape_cast %250 : vector<1x1x2048xf32> to vector<1x2048xf32>
    %252 = vector.broadcast %251 : vector<1x2048xf32> to vector<16x2048xf32>
    %253 = arith.addf %249, %252 : vector<16x2048xf32>
    %cst_116 = arith.constant 0.000000e+00 : f32
    %254 = vector.broadcast %cst_116 : f32 to vector<16x2048xf32>
    %255 = arith.maximumf %253, %254 : vector<16x2048xf32>
    %c1_117 = arith.constant 1 : index
    %c0_118 = arith.constant 0 : index
    %c0_119 = arith.constant 0 : index
    %256 = vector.load %arg8[%c1_117, %c0_118, %c0_119] : memref<2x2048x16xf32, #tpu.memory_space<vmem>>, vector<1x2048x16xf32>
    %257 = vector.shape_cast %256 : vector<1x2048x16xf32> to vector<2048x16xf32>
    %cst_120 = arith.constant dense<0.000000e+00> : vector<16x16xf32>
    %258 = tpu.matmul %255, %257, %cst_120 {dimension_numbers = #tpu.dot_dimension_numbers<[1], [0], [0], [1], [0, 0, 1, 1], [], []>} : vector<16x2048xf32>, vector<2048x16xf32>, vector<16x16xf32> -> vector<16x16xf32>
    %c1_121 = arith.constant 1 : index
    %c0_122 = arith.constant 0 : index
    %c0_123 = arith.constant 0 : index
    %259 = vector.load %arg9[%c1_121, %c0_122, %c0_123] : memref<2x1x16xf32, #tpu.memory_space<vmem>>, vector<1x1x16xf32>
    %260 = vector.shape_cast %259 : vector<1x1x16xf32> to vector<1x16xf32>
    %261 = vector.broadcast %260 : vector<1x16xf32> to vector<16x16xf32>
    %262 = arith.addf %258, %261 : vector<16x16xf32>
    %263 = arith.addf %246, %262 : vector<16x16xf32>
    %cst_124 = arith.constant dense<0.000000e+00> : vector<16xf32>
    %264 = vector.multi_reduction <add>, %263, %cst_124 [1] : vector<16x16xf32> to vector<16xf32>
    %265 = vector.shape_cast %264 : vector<16xf32> to vector<16x1xf32>
    %cst_125 = arith.constant 1.600000e+01 : f32
    %266 = vector.broadcast %cst_125 : f32 to vector<16x1xf32>
    %267 = arith.divf %265, %266 : vector<16x1xf32>
    %268 = vector.broadcast %267 : vector<16x1xf32> to vector<16x16xf32>
    %269 = arith.subf %263, %268 : vector<16x16xf32>
    %270 = arith.mulf %269, %269 : vector<16x16xf32>
    %cst_126 = arith.constant dense<0.000000e+00> : vector<16xf32>
    %271 = vector.multi_reduction <add>, %270, %cst_126 [1] : vector<16x16xf32> to vector<16xf32>
    %272 = vector.shape_cast %271 : vector<16xf32> to vector<16x1xf32>
    %cst_127 = arith.constant 1.600000e+01 : f32
    %273 = vector.broadcast %cst_127 : f32 to vector<16x1xf32>
    %274 = arith.divf %272, %273 : vector<16x1xf32>
    %275 = vector.broadcast %267 : vector<16x1xf32> to vector<16x16xf32>
    %276 = arith.subf %263, %275 : vector<16x16xf32>
    %cst_128 = arith.constant 9.99999974E-6 : f32
    %277 = vector.broadcast %cst_128 : f32 to vector<16x1xf32>
    %278 = arith.addf %274, %277 : vector<16x1xf32>
    %279 = math.rsqrt %278 : vector<16x1xf32>
    %280 = vector.broadcast %279 : vector<16x1xf32> to vector<16x16xf32>
    %281 = arith.mulf %276, %280 : vector<16x16xf32>
    %c1_129 = arith.constant 1 : index
    %c0_130 = arith.constant 0 : index
    %c0_131 = arith.constant 0 : index
    %282 = vector.load %arg12[%c1_129, %c0_130, %c0_131] : memref<2x1x16xf32, #tpu.memory_space<vmem>>, vector<1x1x16xf32>
    %283 = vector.shape_cast %282 : vector<1x1x16xf32> to vector<1x16xf32>
    %284 = vector.broadcast %283 : vector<1x16xf32> to vector<16x16xf32>
    %285 = arith.mulf %281, %284 : vector<16x16xf32>
    %c1_132 = arith.constant 1 : index
    %c0_133 = arith.constant 0 : index
    %c0_134 = arith.constant 0 : index
    %286 = vector.load %arg13[%c1_132, %c0_133, %c0_134] : memref<2x1x16xf32, #tpu.memory_space<vmem>>, vector<1x1x16xf32>
    %287 = vector.shape_cast %286 : vector<1x1x16xf32> to vector<1x16xf32>
    %288 = vector.broadcast %287 : vector<1x16xf32> to vector<16x16xf32>
    %289 = arith.addf %285, %288 : vector<16x16xf32>
    %290 = vector.extract_strided_slice %289 {offsets = [0, 0], sizes = [8, 16], strides = [1, 1]} : vector<16x16xf32> to vector<8x16xf32>
    %291 = vector.extract_strided_slice %290 {offsets = [7, 0], sizes = [1, 16], strides = [1, 1]} : vector<8x16xf32> to vector<1x16xf32>
    %c0_135 = arith.constant 0 : index
    %c0_136 = arith.constant 0 : index
    %292 = vector.load %arg16[%c0_135, %c0_136] : memref<16x16xf32, #tpu.memory_space<vmem>>, vector<16x16xf32>
    %cst_137 = arith.constant dense<0.000000e+00> : vector<1x16xf32>
    %293 = tpu.matmul %291, %292, %cst_137 {dimension_numbers = #tpu.dot_dimension_numbers<[1], [0], [0], [1], [0, 0, 1, 1], [], []>} : vector<1x16xf32>, vector<16x16xf32>, vector<1x16xf32> -> vector<1x16xf32>
    %c0_138 = arith.constant 0 : index
    %c0_139 = arith.constant 0 : index
    %294 = vector.load %arg17[%c0_138, %c0_139] : memref<1x16xf32, #tpu.memory_space<vmem>>, vector<1x16xf32>
    %295 = arith.addf %293, %294 : vector<1x16xf32>
    %c0_140 = arith.constant 0 : index
    %c0_141 = arith.constant 0 : index
    %296 = vector.load %arg18[%c0_140, %c0_141] : memref<16x16xf32, #tpu.memory_space<vmem>>, vector<16x16xf32>
    %cst_142 = arith.constant dense<0.000000e+00> : vector<8x16xf32>
    %297 = tpu.matmul %290, %296, %cst_142 {dimension_numbers = #tpu.dot_dimension_numbers<[1], [0], [0], [1], [0, 0, 1, 1], [], []>} : vector<8x16xf32>, vector<16x16xf32>, vector<8x16xf32> -> vector<8x16xf32>
    %c0_143 = arith.constant 0 : index
    %c0_144 = arith.constant 0 : index
    %298 = vector.load %arg19[%c0_143, %c0_144] : memref<1x16xf32, #tpu.memory_space<vmem>>, vector<1x16xf32>
    %299 = vector.broadcast %298 : vector<1x16xf32> to vector<8x16xf32>
    %300 = arith.addf %297, %299 : vector<8x16xf32>
    %c0_145 = arith.constant 0 : index
    %c0_146 = arith.constant 0 : index
    %301 = vector.load %arg20[%c0_145, %c0_146] : memref<16x16xf32, #tpu.memory_space<vmem>>, vector<16x16xf32>
    %cst_147 = arith.constant dense<0.000000e+00> : vector<8x16xf32>
    %302 = tpu.matmul %290, %301, %cst_147 {dimension_numbers = #tpu.dot_dimension_numbers<[1], [0], [0], [1], [0, 0, 1, 1], [], []>} : vector<8x16xf32>, vector<16x16xf32>, vector<8x16xf32> -> vector<8x16xf32>
    %c0_148 = arith.constant 0 : index
    %c0_149 = arith.constant 0 : index
    %303 = vector.load %arg21[%c0_148, %c0_149] : memref<1x16xf32, #tpu.memory_space<vmem>>, vector<1x16xf32>
    %304 = vector.broadcast %303 : vector<1x16xf32> to vector<8x16xf32>
    %305 = arith.addf %302, %304 : vector<8x16xf32>
    %cst_150 = arith.constant dense<0.000000e+00> : vector<1x8xf32>
    %306 = tpu.matmul %295, %300, %cst_150 {dimension_numbers = #tpu.dot_dimension_numbers<[1], [1], [0], [0], [0, 0, 1, 0], [], []>} : vector<1x16xf32>, vector<8x16xf32>, vector<1x8xf32> -> vector<1x8xf32>
    %cst_151 = arith.constant 2.500000e-01 : f32
    %307 = vector.broadcast %cst_151 : f32 to vector<1x8xf32>
    %308 = arith.mulf %306, %307 : vector<1x8xf32>
    %cst_152 = arith.constant dense<0xFF800000> : vector<1xf32>
    %309 = vector.multi_reduction <maximumf>, %308, %cst_152 [1] : vector<1x8xf32> to vector<1xf32>
    %310 = vector.shape_cast %309 : vector<1xf32> to vector<1x1xf32>
    %311 = vector.broadcast %310 : vector<1x1xf32> to vector<1x8xf32>
    %312 = arith.subf %308, %311 : vector<1x8xf32>
    %313 = math.exp %312 : vector<1x8xf32>
    %cst_153 = arith.constant dense<0.000000e+00> : vector<1xf32>
    %314 = vector.multi_reduction <add>, %313, %cst_153 [1] : vector<1x8xf32> to vector<1xf32>
    %315 = vector.shape_cast %314 : vector<1xf32> to vector<1x1xf32>
    %316 = tpu.reciprocal %315 {approx = true} : vector<1x1xf32> -> vector<1x1xf32>
    %317 = vector.broadcast %316 : vector<1x1xf32> to vector<1x8xf32>
    %318 = arith.mulf %313, %317 : vector<1x8xf32>
    %cst_154 = arith.constant dense<0.000000e+00> : vector<1x16xf32>
    %319 = tpu.matmul %318, %305, %cst_154 {dimension_numbers = #tpu.dot_dimension_numbers<[1], [0], [0], [1], [0, 0, 1, 1], [], []>} : vector<1x8xf32>, vector<8x16xf32>, vector<1x16xf32> -> vector<1x16xf32>
    %c0_155 = arith.constant 0 : index
    %c0_156 = arith.constant 0 : index
    %c0_157 = arith.constant 0 : index
    %320 = vector.load %arg0[%c0_155, %c0_156, %c0_157] : memref<2x8x16xf32, #tpu.memory_space<vmem>>, vector<1x8x16xf32>
    %321 = vector.shape_cast %320 : vector<1x8x16xf32> to vector<8x16xf32>
    %cst_158 = arith.constant 0.000000e+00 : f32
    %322 = vector.broadcast %cst_158 : f32 to vector<3x16xf32>
    %cst_159 = arith.constant 0.000000e+00 : f32
    %323 = vector.broadcast %cst_159 : f32 to vector<4x16xf32>
    %324 = tpu.concatenate %322, %321, %323 in 0 : vector<3x16xf32>, vector<8x16xf32>, vector<4x16xf32> -> vector<15x16xf32>
    %325 = vector.extract_strided_slice %324 {offsets = [0, 0], sizes = [8, 16], strides = [1, 1]} : vector<15x16xf32> to vector<8x16xf32>
    %326 = vector.extract_strided_slice %324 {offsets = [1, 0], sizes = [8, 16], strides = [1, 1]} : vector<15x16xf32> to vector<8x16xf32>
    %327 = vector.extract_strided_slice %324 {offsets = [2, 0], sizes = [8, 16], strides = [1, 1]} : vector<15x16xf32> to vector<8x16xf32>
    %328 = vector.extract_strided_slice %324 {offsets = [3, 0], sizes = [8, 16], strides = [1, 1]} : vector<15x16xf32> to vector<8x16xf32>
    %329 = vector.extract_strided_slice %324 {offsets = [4, 0], sizes = [8, 16], strides = [1, 1]} : vector<15x16xf32> to vector<8x16xf32>
    %330 = vector.extract_strided_slice %324 {offsets = [5, 0], sizes = [8, 16], strides = [1, 1]} : vector<15x16xf32> to vector<8x16xf32>
    %331 = vector.extract_strided_slice %324 {offsets = [6, 0], sizes = [8, 16], strides = [1, 1]} : vector<15x16xf32> to vector<8x16xf32>
    %332 = vector.extract_strided_slice %324 {offsets = [7, 0], sizes = [8, 16], strides = [1, 1]} : vector<15x16xf32> to vector<8x16xf32>
    %333 = tpu.concatenate %325, %326, %327, %328, %329, %330, %331, %332 in 1 : vector<8x16xf32>, vector<8x16xf32>, vector<8x16xf32>, vector<8x16xf32>, vector<8x16xf32>, vector<8x16xf32>, vector<8x16xf32>, vector<8x16xf32> -> vector<8x128xf32>
    %c0_160 = arith.constant 0 : index
    %c0_161 = arith.constant 0 : index
    %334 = vector.load %arg22[%c0_160, %c0_161] : memref<128x32xf32, #tpu.memory_space<vmem>>, vector<128x32xf32>
    %cst_162 = arith.constant dense<0.000000e+00> : vector<8x32xf32>
    %335 = tpu.matmul %333, %334, %cst_162 {dimension_numbers = #tpu.dot_dimension_numbers<[1], [0], [0], [1], [0, 0, 1, 1], [], []>} : vector<8x128xf32>, vector<128x32xf32>, vector<8x32xf32> -> vector<8x32xf32>
    %c0_163 = arith.constant 0 : index
    %c0_164 = arith.constant 0 : index
    %336 = vector.load %arg23[%c0_163, %c0_164] : memref<1x32xf32, #tpu.memory_space<vmem>>, vector<1x32xf32>
    %337 = vector.broadcast %336 : vector<1x32xf32> to vector<8x32xf32>
    %338 = arith.addf %335, %337 : vector<8x32xf32>
    %cst_165 = arith.constant 0.000000e+00 : f32
    %339 = vector.broadcast %cst_165 : f32 to vector<8x32xf32>
    %340 = arith.maximumf %338, %339 : vector<8x32xf32>
    %cst_166 = arith.constant dense<0.000000e+00> : vector<32xf32>
    %341 = vector.multi_reduction <add>, %340, %cst_166 [0] : vector<8x32xf32> to vector<32xf32>
    %342 = vector.shape_cast %341 : vector<32xf32> to vector<1x32xf32>
    %cst_167 = arith.constant 8.000000e+00 : f32
    %343 = vector.broadcast %cst_167 : f32 to vector<1x32xf32>
    %344 = arith.divf %342, %343 : vector<1x32xf32>
    %c0_168 = arith.constant 0 : index
    %c0_169 = arith.constant 0 : index
    %345 = vector.load %arg24[%c0_168, %c0_169] : memref<32x2xf32, #tpu.memory_space<vmem>>, vector<32x2xf32>
    %cst_170 = arith.constant dense<0.000000e+00> : vector<1x2xf32>
    %346 = tpu.matmul %344, %345, %cst_170 {dimension_numbers = #tpu.dot_dimension_numbers<[1], [0], [0], [1], [0, 0, 1, 1], [], []>} : vector<1x32xf32>, vector<32x2xf32>, vector<1x2xf32> -> vector<1x2xf32>
    %cst_171 = arith.constant 0.000000e+00 : f32
    %347 = vector.broadcast %cst_171 : f32 to vector<1x2xf32>
    %348 = arith.maximumf %346, %347 : vector<1x2xf32>
    %c0_172 = arith.constant 0 : index
    %c0_173 = arith.constant 0 : index
    %349 = vector.load %arg25[%c0_172, %c0_173] : memref<2x32xf32, #tpu.memory_space<vmem>>, vector<2x32xf32>
    %cst_174 = arith.constant dense<0.000000e+00> : vector<1x32xf32>
    %350 = tpu.matmul %348, %349, %cst_174 {dimension_numbers = #tpu.dot_dimension_numbers<[1], [0], [0], [1], [0, 0, 1, 1], [], []>} : vector<1x2xf32>, vector<2x32xf32>, vector<1x32xf32> -> vector<1x32xf32>
    %351 = arith.negf %350 : vector<1x32xf32>
    %352 = math.exp %351 : vector<1x32xf32>
    %cst_175 = arith.constant 1.000000e+00 : f32
    %353 = vector.broadcast %cst_175 : f32 to vector<1x32xf32>
    %354 = arith.addf %353, %352 : vector<1x32xf32>
    %355 = arith.divf %353, %354 : vector<1x32xf32>
    %356 = vector.broadcast %355 : vector<1x32xf32> to vector<8x32xf32>
    %357 = arith.mulf %340, %356 : vector<8x32xf32>
    %cst_176 = arith.constant 0.000000e+00 : f32
    %358 = vector.broadcast %cst_176 : f32 to vector<2x32xf32>
    %cst_177 = arith.constant 0.000000e+00 : f32
    %359 = vector.broadcast %cst_177 : f32 to vector<2x32xf32>
    %360 = tpu.concatenate %358, %357, %359 in 0 : vector<2x32xf32>, vector<8x32xf32>, vector<2x32xf32> -> vector<12x32xf32>
    %361 = vector.extract_strided_slice %360 {offsets = [0, 0], sizes = [8, 32], strides = [1, 1]} : vector<12x32xf32> to vector<8x32xf32>
    %362 = vector.extract_strided_slice %360 {offsets = [1, 0], sizes = [8, 32], strides = [1, 1]} : vector<12x32xf32> to vector<8x32xf32>
    %363 = vector.extract_strided_slice %360 {offsets = [2, 0], sizes = [8, 32], strides = [1, 1]} : vector<12x32xf32> to vector<8x32xf32>
    %364 = vector.extract_strided_slice %360 {offsets = [3, 0], sizes = [8, 32], strides = [1, 1]} : vector<12x32xf32> to vector<8x32xf32>
    %365 = vector.extract_strided_slice %360 {offsets = [4, 0], sizes = [8, 32], strides = [1, 1]} : vector<12x32xf32> to vector<8x32xf32>
    %366 = tpu.concatenate %361, %362, %363, %364, %365 in 1 : vector<8x32xf32>, vector<8x32xf32>, vector<8x32xf32>, vector<8x32xf32>, vector<8x32xf32> -> vector<8x160xf32>
    %c0_178 = arith.constant 0 : index
    %c0_179 = arith.constant 0 : index
    %367 = vector.load %arg26[%c0_178, %c0_179] : memref<160x32xf32, #tpu.memory_space<vmem>>, vector<160x32xf32>
    %cst_180 = arith.constant dense<0.000000e+00> : vector<8x32xf32>
    %368 = tpu.matmul %366, %367, %cst_180 {dimension_numbers = #tpu.dot_dimension_numbers<[1], [0], [0], [1], [0, 0, 1, 1], [], []>} : vector<8x160xf32>, vector<160x32xf32>, vector<8x32xf32> -> vector<8x32xf32>
    %c0_181 = arith.constant 0 : index
    %c0_182 = arith.constant 0 : index
    %369 = vector.load %arg27[%c0_181, %c0_182] : memref<1x32xf32, #tpu.memory_space<vmem>>, vector<1x32xf32>
    %370 = vector.broadcast %369 : vector<1x32xf32> to vector<8x32xf32>
    %371 = arith.addf %368, %370 : vector<8x32xf32>
    %cst_183 = arith.constant 0.000000e+00 : f32
    %372 = vector.broadcast %cst_183 : f32 to vector<8x32xf32>
    %373 = arith.maximumf %371, %372 : vector<8x32xf32>
    %cst_184 = arith.constant dense<0.000000e+00> : vector<32xf32>
    %374 = vector.multi_reduction <add>, %373, %cst_184 [0] : vector<8x32xf32> to vector<32xf32>
    %375 = vector.shape_cast %374 : vector<32xf32> to vector<1x32xf32>
    %cst_185 = arith.constant 8.000000e+00 : f32
    %376 = vector.broadcast %cst_185 : f32 to vector<1x32xf32>
    %377 = arith.divf %375, %376 : vector<1x32xf32>
    %c0_186 = arith.constant 0 : index
    %c0_187 = arith.constant 0 : index
    %378 = vector.load %arg28[%c0_186, %c0_187] : memref<32x2xf32, #tpu.memory_space<vmem>>, vector<32x2xf32>
    %cst_188 = arith.constant dense<0.000000e+00> : vector<1x2xf32>
    %379 = tpu.matmul %377, %378, %cst_188 {dimension_numbers = #tpu.dot_dimension_numbers<[1], [0], [0], [1], [0, 0, 1, 1], [], []>} : vector<1x32xf32>, vector<32x2xf32>, vector<1x2xf32> -> vector<1x2xf32>
    %cst_189 = arith.constant 0.000000e+00 : f32
    %380 = vector.broadcast %cst_189 : f32 to vector<1x2xf32>
    %381 = arith.maximumf %379, %380 : vector<1x2xf32>
    %c0_190 = arith.constant 0 : index
    %c0_191 = arith.constant 0 : index
    %382 = vector.load %arg29[%c0_190, %c0_191] : memref<2x32xf32, #tpu.memory_space<vmem>>, vector<2x32xf32>
    %cst_192 = arith.constant dense<0.000000e+00> : vector<1x32xf32>
    %383 = tpu.matmul %381, %382, %cst_192 {dimension_numbers = #tpu.dot_dimension_numbers<[1], [0], [0], [1], [0, 0, 1, 1], [], []>} : vector<1x2xf32>, vector<2x32xf32>, vector<1x32xf32> -> vector<1x32xf32>
    %384 = arith.negf %383 : vector<1x32xf32>
    %385 = math.exp %384 : vector<1x32xf32>
    %cst_193 = arith.constant 1.000000e+00 : f32
    %386 = vector.broadcast %cst_193 : f32 to vector<1x32xf32>
    %387 = arith.addf %386, %385 : vector<1x32xf32>
    %388 = arith.divf %386, %387 : vector<1x32xf32>
    %389 = vector.broadcast %388 : vector<1x32xf32> to vector<8x32xf32>
    %390 = arith.mulf %373, %389 : vector<8x32xf32>
    %cst_194 = arith.constant 0.000000e+00 : f32
    %391 = vector.broadcast %cst_194 : f32 to vector<1x32xf32>
    %cst_195 = arith.constant 0.000000e+00 : f32
    %392 = vector.broadcast %cst_195 : f32 to vector<1x32xf32>
    %393 = tpu.concatenate %391, %390, %392 in 0 : vector<1x32xf32>, vector<8x32xf32>, vector<1x32xf32> -> vector<10x32xf32>
    %394 = vector.extract_strided_slice %393 {offsets = [0, 0], sizes = [8, 32], strides = [1, 1]} : vector<10x32xf32> to vector<8x32xf32>
    %395 = vector.extract_strided_slice %393 {offsets = [1, 0], sizes = [8, 32], strides = [1, 1]} : vector<10x32xf32> to vector<8x32xf32>
    %396 = vector.extract_strided_slice %393 {offsets = [2, 0], sizes = [8, 32], strides = [1, 1]} : vector<10x32xf32> to vector<8x32xf32>
    %397 = tpu.concatenate %394, %395, %396 in 1 : vector<8x32xf32>, vector<8x32xf32>, vector<8x32xf32> -> vector<8x96xf32>
    %c0_196 = arith.constant 0 : index
    %c0_197 = arith.constant 0 : index
    %398 = vector.load %arg30[%c0_196, %c0_197] : memref<96x32xf32, #tpu.memory_space<vmem>>, vector<96x32xf32>
    %cst_198 = arith.constant dense<0.000000e+00> : vector<8x32xf32>
    %399 = tpu.matmul %397, %398, %cst_198 {dimension_numbers = #tpu.dot_dimension_numbers<[1], [0], [0], [1], [0, 0, 1, 1], [], []>} : vector<8x96xf32>, vector<96x32xf32>, vector<8x32xf32> -> vector<8x32xf32>
    %c0_199 = arith.constant 0 : index
    %c0_200 = arith.constant 0 : index
    %400 = vector.load %arg31[%c0_199, %c0_200] : memref<1x32xf32, #tpu.memory_space<vmem>>, vector<1x32xf32>
    %401 = vector.broadcast %400 : vector<1x32xf32> to vector<8x32xf32>
    %402 = arith.addf %399, %401 : vector<8x32xf32>
    %cst_201 = arith.constant 0.000000e+00 : f32
    %403 = vector.broadcast %cst_201 : f32 to vector<8x32xf32>
    %404 = arith.maximumf %402, %403 : vector<8x32xf32>
    %cst_202 = arith.constant dense<0.000000e+00> : vector<32xf32>
    %405 = vector.multi_reduction <add>, %404, %cst_202 [0] : vector<8x32xf32> to vector<32xf32>
    %406 = vector.shape_cast %405 : vector<32xf32> to vector<1x32xf32>
    %cst_203 = arith.constant 8.000000e+00 : f32
    %407 = vector.broadcast %cst_203 : f32 to vector<1x32xf32>
    %408 = arith.divf %406, %407 : vector<1x32xf32>
    %409 = vector.extract_strided_slice %289 {offsets = [8, 0], sizes = [8, 16], strides = [1, 1]} : vector<16x16xf32> to vector<8x16xf32>
    %410 = vector.extract_strided_slice %409 {offsets = [7, 0], sizes = [1, 16], strides = [1, 1]} : vector<8x16xf32> to vector<1x16xf32>
    %c0_204 = arith.constant 0 : index
    %c0_205 = arith.constant 0 : index
    %411 = vector.load %arg16[%c0_204, %c0_205] : memref<16x16xf32, #tpu.memory_space<vmem>>, vector<16x16xf32>
    %cst_206 = arith.constant dense<0.000000e+00> : vector<1x16xf32>
    %412 = tpu.matmul %410, %411, %cst_206 {dimension_numbers = #tpu.dot_dimension_numbers<[1], [0], [0], [1], [0, 0, 1, 1], [], []>} : vector<1x16xf32>, vector<16x16xf32>, vector<1x16xf32> -> vector<1x16xf32>
    %c0_207 = arith.constant 0 : index
    %c0_208 = arith.constant 0 : index
    %413 = vector.load %arg17[%c0_207, %c0_208] : memref<1x16xf32, #tpu.memory_space<vmem>>, vector<1x16xf32>
    %414 = arith.addf %412, %413 : vector<1x16xf32>
    %c0_209 = arith.constant 0 : index
    %c0_210 = arith.constant 0 : index
    %415 = vector.load %arg18[%c0_209, %c0_210] : memref<16x16xf32, #tpu.memory_space<vmem>>, vector<16x16xf32>
    %cst_211 = arith.constant dense<0.000000e+00> : vector<8x16xf32>
    %416 = tpu.matmul %409, %415, %cst_211 {dimension_numbers = #tpu.dot_dimension_numbers<[1], [0], [0], [1], [0, 0, 1, 1], [], []>} : vector<8x16xf32>, vector<16x16xf32>, vector<8x16xf32> -> vector<8x16xf32>
    %c0_212 = arith.constant 0 : index
    %c0_213 = arith.constant 0 : index
    %417 = vector.load %arg19[%c0_212, %c0_213] : memref<1x16xf32, #tpu.memory_space<vmem>>, vector<1x16xf32>
    %418 = vector.broadcast %417 : vector<1x16xf32> to vector<8x16xf32>
    %419 = arith.addf %416, %418 : vector<8x16xf32>
    %c0_214 = arith.constant 0 : index
    %c0_215 = arith.constant 0 : index
    %420 = vector.load %arg20[%c0_214, %c0_215] : memref<16x16xf32, #tpu.memory_space<vmem>>, vector<16x16xf32>
    %cst_216 = arith.constant dense<0.000000e+00> : vector<8x16xf32>
    %421 = tpu.matmul %409, %420, %cst_216 {dimension_numbers = #tpu.dot_dimension_numbers<[1], [0], [0], [1], [0, 0, 1, 1], [], []>} : vector<8x16xf32>, vector<16x16xf32>, vector<8x16xf32> -> vector<8x16xf32>
    %c0_217 = arith.constant 0 : index
    %c0_218 = arith.constant 0 : index
    %422 = vector.load %arg21[%c0_217, %c0_218] : memref<1x16xf32, #tpu.memory_space<vmem>>, vector<1x16xf32>
    %423 = vector.broadcast %422 : vector<1x16xf32> to vector<8x16xf32>
    %424 = arith.addf %421, %423 : vector<8x16xf32>
    %cst_219 = arith.constant dense<0.000000e+00> : vector<1x8xf32>
    %425 = tpu.matmul %414, %419, %cst_219 {dimension_numbers = #tpu.dot_dimension_numbers<[1], [1], [0], [0], [0, 0, 1, 0], [], []>} : vector<1x16xf32>, vector<8x16xf32>, vector<1x8xf32> -> vector<1x8xf32>
    %cst_220 = arith.constant 2.500000e-01 : f32
    %426 = vector.broadcast %cst_220 : f32 to vector<1x8xf32>
    %427 = arith.mulf %425, %426 : vector<1x8xf32>
    %cst_221 = arith.constant dense<0xFF800000> : vector<1xf32>
    %428 = vector.multi_reduction <maximumf>, %427, %cst_221 [1] : vector<1x8xf32> to vector<1xf32>
    %429 = vector.shape_cast %428 : vector<1xf32> to vector<1x1xf32>
    %430 = vector.broadcast %429 : vector<1x1xf32> to vector<1x8xf32>
    %431 = arith.subf %427, %430 : vector<1x8xf32>
    %432 = math.exp %431 : vector<1x8xf32>
    %cst_222 = arith.constant dense<0.000000e+00> : vector<1xf32>
    %433 = vector.multi_reduction <add>, %432, %cst_222 [1] : vector<1x8xf32> to vector<1xf32>
    %434 = vector.shape_cast %433 : vector<1xf32> to vector<1x1xf32>
    %435 = tpu.reciprocal %434 {approx = true} : vector<1x1xf32> -> vector<1x1xf32>
    %436 = vector.broadcast %435 : vector<1x1xf32> to vector<1x8xf32>
    %437 = arith.mulf %432, %436 : vector<1x8xf32>
    %cst_223 = arith.constant dense<0.000000e+00> : vector<1x16xf32>
    %438 = tpu.matmul %437, %424, %cst_223 {dimension_numbers = #tpu.dot_dimension_numbers<[1], [0], [0], [1], [0, 0, 1, 1], [], []>} : vector<1x8xf32>, vector<8x16xf32>, vector<1x16xf32> -> vector<1x16xf32>
    %c1_224 = arith.constant 1 : index
    %c0_225 = arith.constant 0 : index
    %c0_226 = arith.constant 0 : index
    %439 = vector.load %arg0[%c1_224, %c0_225, %c0_226] : memref<2x8x16xf32, #tpu.memory_space<vmem>>, vector<1x8x16xf32>
    %440 = vector.shape_cast %439 : vector<1x8x16xf32> to vector<8x16xf32>
    %cst_227 = arith.constant 0.000000e+00 : f32
    %441 = vector.broadcast %cst_227 : f32 to vector<3x16xf32>
    %cst_228 = arith.constant 0.000000e+00 : f32
    %442 = vector.broadcast %cst_228 : f32 to vector<4x16xf32>
    %443 = tpu.concatenate %441, %440, %442 in 0 : vector<3x16xf32>, vector<8x16xf32>, vector<4x16xf32> -> vector<15x16xf32>
    %444 = vector.extract_strided_slice %443 {offsets = [0, 0], sizes = [8, 16], strides = [1, 1]} : vector<15x16xf32> to vector<8x16xf32>
    %445 = vector.extract_strided_slice %443 {offsets = [1, 0], sizes = [8, 16], strides = [1, 1]} : vector<15x16xf32> to vector<8x16xf32>
    %446 = vector.extract_strided_slice %443 {offsets = [2, 0], sizes = [8, 16], strides = [1, 1]} : vector<15x16xf32> to vector<8x16xf32>
    %447 = vector.extract_strided_slice %443 {offsets = [3, 0], sizes = [8, 16], strides = [1, 1]} : vector<15x16xf32> to vector<8x16xf32>
    %448 = vector.extract_strided_slice %443 {offsets = [4, 0], sizes = [8, 16], strides = [1, 1]} : vector<15x16xf32> to vector<8x16xf32>
    %449 = vector.extract_strided_slice %443 {offsets = [5, 0], sizes = [8, 16], strides = [1, 1]} : vector<15x16xf32> to vector<8x16xf32>
    %450 = vector.extract_strided_slice %443 {offsets = [6, 0], sizes = [8, 16], strides = [1, 1]} : vector<15x16xf32> to vector<8x16xf32>
    %451 = vector.extract_strided_slice %443 {offsets = [7, 0], sizes = [8, 16], strides = [1, 1]} : vector<15x16xf32> to vector<8x16xf32>
    %452 = tpu.concatenate %444, %445, %446, %447, %448, %449, %450, %451 in 1 : vector<8x16xf32>, vector<8x16xf32>, vector<8x16xf32>, vector<8x16xf32>, vector<8x16xf32>, vector<8x16xf32>, vector<8x16xf32>, vector<8x16xf32> -> vector<8x128xf32>
    %c0_229 = arith.constant 0 : index
    %c0_230 = arith.constant 0 : index
    %453 = vector.load %arg22[%c0_229, %c0_230] : memref<128x32xf32, #tpu.memory_space<vmem>>, vector<128x32xf32>
    %cst_231 = arith.constant dense<0.000000e+00> : vector<8x32xf32>
    %454 = tpu.matmul %452, %453, %cst_231 {dimension_numbers = #tpu.dot_dimension_numbers<[1], [0], [0], [1], [0, 0, 1, 1], [], []>} : vector<8x128xf32>, vector<128x32xf32>, vector<8x32xf32> -> vector<8x32xf32>
    %c0_232 = arith.constant 0 : index
    %c0_233 = arith.constant 0 : index
    %455 = vector.load %arg23[%c0_232, %c0_233] : memref<1x32xf32, #tpu.memory_space<vmem>>, vector<1x32xf32>
    %456 = vector.broadcast %455 : vector<1x32xf32> to vector<8x32xf32>
    %457 = arith.addf %454, %456 : vector<8x32xf32>
    %cst_234 = arith.constant 0.000000e+00 : f32
    %458 = vector.broadcast %cst_234 : f32 to vector<8x32xf32>
    %459 = arith.maximumf %457, %458 : vector<8x32xf32>
    %cst_235 = arith.constant dense<0.000000e+00> : vector<32xf32>
    %460 = vector.multi_reduction <add>, %459, %cst_235 [0] : vector<8x32xf32> to vector<32xf32>
    %461 = vector.shape_cast %460 : vector<32xf32> to vector<1x32xf32>
    %cst_236 = arith.constant 8.000000e+00 : f32
    %462 = vector.broadcast %cst_236 : f32 to vector<1x32xf32>
    %463 = arith.divf %461, %462 : vector<1x32xf32>
    %c0_237 = arith.constant 0 : index
    %c0_238 = arith.constant 0 : index
    %464 = vector.load %arg24[%c0_237, %c0_238] : memref<32x2xf32, #tpu.memory_space<vmem>>, vector<32x2xf32>
    %cst_239 = arith.constant dense<0.000000e+00> : vector<1x2xf32>
    %465 = tpu.matmul %463, %464, %cst_239 {dimension_numbers = #tpu.dot_dimension_numbers<[1], [0], [0], [1], [0, 0, 1, 1], [], []>} : vector<1x32xf32>, vector<32x2xf32>, vector<1x2xf32> -> vector<1x2xf32>
    %cst_240 = arith.constant 0.000000e+00 : f32
    %466 = vector.broadcast %cst_240 : f32 to vector<1x2xf32>
    %467 = arith.maximumf %465, %466 : vector<1x2xf32>
    %c0_241 = arith.constant 0 : index
    %c0_242 = arith.constant 0 : index
    %468 = vector.load %arg25[%c0_241, %c0_242] : memref<2x32xf32, #tpu.memory_space<vmem>>, vector<2x32xf32>
    %cst_243 = arith.constant dense<0.000000e+00> : vector<1x32xf32>
    %469 = tpu.matmul %467, %468, %cst_243 {dimension_numbers = #tpu.dot_dimension_numbers<[1], [0], [0], [1], [0, 0, 1, 1], [], []>} : vector<1x2xf32>, vector<2x32xf32>, vector<1x32xf32> -> vector<1x32xf32>
    %470 = arith.negf %469 : vector<1x32xf32>
    %471 = math.exp %470 : vector<1x32xf32>
    %cst_244 = arith.constant 1.000000e+00 : f32
    %472 = vector.broadcast %cst_244 : f32 to vector<1x32xf32>
    %473 = arith.addf %472, %471 : vector<1x32xf32>
    %474 = arith.divf %472, %473 : vector<1x32xf32>
    %475 = vector.broadcast %474 : vector<1x32xf32> to vector<8x32xf32>
    %476 = arith.mulf %459, %475 : vector<8x32xf32>
    %cst_245 = arith.constant 0.000000e+00 : f32
    %477 = vector.broadcast %cst_245 : f32 to vector<2x32xf32>
    %cst_246 = arith.constant 0.000000e+00 : f32
    %478 = vector.broadcast %cst_246 : f32 to vector<2x32xf32>
    %479 = tpu.concatenate %477, %476, %478 in 0 : vector<2x32xf32>, vector<8x32xf32>, vector<2x32xf32> -> vector<12x32xf32>
    %480 = vector.extract_strided_slice %479 {offsets = [0, 0], sizes = [8, 32], strides = [1, 1]} : vector<12x32xf32> to vector<8x32xf32>
    %481 = vector.extract_strided_slice %479 {offsets = [1, 0], sizes = [8, 32], strides = [1, 1]} : vector<12x32xf32> to vector<8x32xf32>
    %482 = vector.extract_strided_slice %479 {offsets = [2, 0], sizes = [8, 32], strides = [1, 1]} : vector<12x32xf32> to vector<8x32xf32>
    %483 = vector.extract_strided_slice %479 {offsets = [3, 0], sizes = [8, 32], strides = [1, 1]} : vector<12x32xf32> to vector<8x32xf32>
    %484 = vector.extract_strided_slice %479 {offsets = [4, 0], sizes = [8, 32], strides = [1, 1]} : vector<12x32xf32> to vector<8x32xf32>
    %485 = tpu.concatenate %480, %481, %482, %483, %484 in 1 : vector<8x32xf32>, vector<8x32xf32>, vector<8x32xf32>, vector<8x32xf32>, vector<8x32xf32> -> vector<8x160xf32>
    %c0_247 = arith.constant 0 : index
    %c0_248 = arith.constant 0 : index
    %486 = vector.load %arg26[%c0_247, %c0_248] : memref<160x32xf32, #tpu.memory_space<vmem>>, vector<160x32xf32>
    %cst_249 = arith.constant dense<0.000000e+00> : vector<8x32xf32>
    %487 = tpu.matmul %485, %486, %cst_249 {dimension_numbers = #tpu.dot_dimension_numbers<[1], [0], [0], [1], [0, 0, 1, 1], [], []>} : vector<8x160xf32>, vector<160x32xf32>, vector<8x32xf32> -> vector<8x32xf32>
    %c0_250 = arith.constant 0 : index
    %c0_251 = arith.constant 0 : index
    %488 = vector.load %arg27[%c0_250, %c0_251] : memref<1x32xf32, #tpu.memory_space<vmem>>, vector<1x32xf32>
    %489 = vector.broadcast %488 : vector<1x32xf32> to vector<8x32xf32>
    %490 = arith.addf %487, %489 : vector<8x32xf32>
    %cst_252 = arith.constant 0.000000e+00 : f32
    %491 = vector.broadcast %cst_252 : f32 to vector<8x32xf32>
    %492 = arith.maximumf %490, %491 : vector<8x32xf32>
    %cst_253 = arith.constant dense<0.000000e+00> : vector<32xf32>
    %493 = vector.multi_reduction <add>, %492, %cst_253 [0] : vector<8x32xf32> to vector<32xf32>
    %494 = vector.shape_cast %493 : vector<32xf32> to vector<1x32xf32>
    %cst_254 = arith.constant 8.000000e+00 : f32
    %495 = vector.broadcast %cst_254 : f32 to vector<1x32xf32>
    %496 = arith.divf %494, %495 : vector<1x32xf32>
    %c0_255 = arith.constant 0 : index
    %c0_256 = arith.constant 0 : index
    %497 = vector.load %arg28[%c0_255, %c0_256] : memref<32x2xf32, #tpu.memory_space<vmem>>, vector<32x2xf32>
    %cst_257 = arith.constant dense<0.000000e+00> : vector<1x2xf32>
    %498 = tpu.matmul %496, %497, %cst_257 {dimension_numbers = #tpu.dot_dimension_numbers<[1], [0], [0], [1], [0, 0, 1, 1], [], []>} : vector<1x32xf32>, vector<32x2xf32>, vector<1x2xf32> -> vector<1x2xf32>
    %cst_258 = arith.constant 0.000000e+00 : f32
    %499 = vector.broadcast %cst_258 : f32 to vector<1x2xf32>
    %500 = arith.maximumf %498, %499 : vector<1x2xf32>
    %c0_259 = arith.constant 0 : index
    %c0_260 = arith.constant 0 : index
    %501 = vector.load %arg29[%c0_259, %c0_260] : memref<2x32xf32, #tpu.memory_space<vmem>>, vector<2x32xf32>
    %cst_261 = arith.constant dense<0.000000e+00> : vector<1x32xf32>
    %502 = tpu.matmul %500, %501, %cst_261 {dimension_numbers = #tpu.dot_dimension_numbers<[1], [0], [0], [1], [0, 0, 1, 1], [], []>} : vector<1x2xf32>, vector<2x32xf32>, vector<1x32xf32> -> vector<1x32xf32>
    %503 = arith.negf %502 : vector<1x32xf32>
    %504 = math.exp %503 : vector<1x32xf32>
    %cst_262 = arith.constant 1.000000e+00 : f32
    %505 = vector.broadcast %cst_262 : f32 to vector<1x32xf32>
    %506 = arith.addf %505, %504 : vector<1x32xf32>
    %507 = arith.divf %505, %506 : vector<1x32xf32>
    %508 = vector.broadcast %507 : vector<1x32xf32> to vector<8x32xf32>
    %509 = arith.mulf %492, %508 : vector<8x32xf32>
    %cst_263 = arith.constant 0.000000e+00 : f32
    %510 = vector.broadcast %cst_263 : f32 to vector<1x32xf32>
    %cst_264 = arith.constant 0.000000e+00 : f32
    %511 = vector.broadcast %cst_264 : f32 to vector<1x32xf32>
    %512 = tpu.concatenate %510, %509, %511 in 0 : vector<1x32xf32>, vector<8x32xf32>, vector<1x32xf32> -> vector<10x32xf32>
    %513 = vector.extract_strided_slice %512 {offsets = [0, 0], sizes = [8, 32], strides = [1, 1]} : vector<10x32xf32> to vector<8x32xf32>
    %514 = vector.extract_strided_slice %512 {offsets = [1, 0], sizes = [8, 32], strides = [1, 1]} : vector<10x32xf32> to vector<8x32xf32>
    %515 = vector.extract_strided_slice %512 {offsets = [2, 0], sizes = [8, 32], strides = [1, 1]} : vector<10x32xf32> to vector<8x32xf32>
    %516 = tpu.concatenate %513, %514, %515 in 1 : vector<8x32xf32>, vector<8x32xf32>, vector<8x32xf32> -> vector<8x96xf32>
    %c0_265 = arith.constant 0 : index
    %c0_266 = arith.constant 0 : index
    %517 = vector.load %arg30[%c0_265, %c0_266] : memref<96x32xf32, #tpu.memory_space<vmem>>, vector<96x32xf32>
    %cst_267 = arith.constant dense<0.000000e+00> : vector<8x32xf32>
    %518 = tpu.matmul %516, %517, %cst_267 {dimension_numbers = #tpu.dot_dimension_numbers<[1], [0], [0], [1], [0, 0, 1, 1], [], []>} : vector<8x96xf32>, vector<96x32xf32>, vector<8x32xf32> -> vector<8x32xf32>
    %c0_268 = arith.constant 0 : index
    %c0_269 = arith.constant 0 : index
    %519 = vector.load %arg31[%c0_268, %c0_269] : memref<1x32xf32, #tpu.memory_space<vmem>>, vector<1x32xf32>
    %520 = vector.broadcast %519 : vector<1x32xf32> to vector<8x32xf32>
    %521 = arith.addf %518, %520 : vector<8x32xf32>
    %cst_270 = arith.constant 0.000000e+00 : f32
    %522 = vector.broadcast %cst_270 : f32 to vector<8x32xf32>
    %523 = arith.maximumf %521, %522 : vector<8x32xf32>
    %cst_271 = arith.constant dense<0.000000e+00> : vector<32xf32>
    %524 = vector.multi_reduction <add>, %523, %cst_271 [0] : vector<8x32xf32> to vector<32xf32>
    %525 = vector.shape_cast %524 : vector<32xf32> to vector<1x32xf32>
    %cst_272 = arith.constant 8.000000e+00 : f32
    %526 = vector.broadcast %cst_272 : f32 to vector<1x32xf32>
    %527 = arith.divf %525, %526 : vector<1x32xf32>
    %528 = tpu.concatenate %319, %438 in 0 : vector<1x16xf32>, vector<1x16xf32> -> vector<2x16xf32>
    %529 = tpu.concatenate %408, %527 in 0 : vector<1x32xf32>, vector<1x32xf32> -> vector<2x32xf32>
    %c0_273 = arith.constant 0 : index
    %c0_274 = arith.constant 0 : index
    %530 = vector.load %arg32[%c0_273, %c0_274] : memref<16x5xf32, #tpu.memory_space<vmem>>, vector<16x5xf32>
    %cst_275 = arith.constant dense<0.000000e+00> : vector<2x5xf32>
    %531 = tpu.matmul %528, %530, %cst_275 {dimension_numbers = #tpu.dot_dimension_numbers<[1], [0], [0], [1], [0, 0, 1, 1], [], []>} : vector<2x16xf32>, vector<16x5xf32>, vector<2x5xf32> -> vector<2x5xf32>
    %c0_276 = arith.constant 0 : index
    %c0_277 = arith.constant 0 : index
    %532 = vector.load %arg33[%c0_276, %c0_277] : memref<32x5xf32, #tpu.memory_space<vmem>>, vector<32x5xf32>
    %cst_278 = arith.constant dense<0.000000e+00> : vector<2x5xf32>
    %533 = tpu.matmul %529, %532, %cst_278 {dimension_numbers = #tpu.dot_dimension_numbers<[1], [0], [0], [1], [0, 0, 1, 1], [], []>} : vector<2x32xf32>, vector<32x5xf32>, vector<2x5xf32> -> vector<2x5xf32>
    %534 = arith.addf %531, %533 : vector<2x5xf32>
    %c0_279 = arith.constant 0 : index
    %c0_280 = arith.constant 0 : index
    %535 = vector.load %arg34[%c0_279, %c0_280] : memref<1x5xf32, #tpu.memory_space<vmem>>, vector<1x5xf32>
    %536 = vector.broadcast %535 : vector<1x5xf32> to vector<2x5xf32>
    %537 = arith.addf %534, %536 : vector<2x5xf32>
    %cst_281 = arith.constant dense<0xFF800000> : vector<2xf32>
    %538 = vector.multi_reduction <maximumf>, %537, %cst_281 [1] : vector<2x5xf32> to vector<2xf32>
    %539 = vector.shape_cast %538 : vector<2xf32> to vector<2x1xf32>
    %540 = vector.broadcast %539 : vector<2x1xf32> to vector<2x5xf32>
    %541 = arith.subf %537, %540 : vector<2x5xf32>
    %542 = math.exp %541 : vector<2x5xf32>
    %c0_282 = arith.constant 0 : index
    %c0_283 = arith.constant 0 : index
    %543 = vector.load %arg35[%c0_282, %c0_283] : memref<2x5xf32, #tpu.memory_space<vmem>>, vector<2x5xf32>
    tpu.vector_store %arg35[%c0_282, %c0_283], %537 {strides = array<i32>} : memref<2x5xf32, #tpu.memory_space<vmem>>, vector<2x5xf32>,
    %cst_284 = arith.constant dense<0.000000e+00> : vector<2xf32>
    %544 = vector.multi_reduction <add>, %542, %cst_284 [1] : vector<2x5xf32> to vector<2xf32>
    %545 = vector.shape_cast %544 : vector<2xf32> to vector<2x1xf32>
    %546 = vector.broadcast %545 : vector<2x1xf32> to vector<2x5xf32>
    %547 = arith.divf %542, %546 : vector<2x5xf32>
    %c0_285 = arith.constant 0 : index
    %c0_286 = arith.constant 0 : index
    %548 = vector.load %arg36[%c0_285, %c0_286] : memref<2x5xf32, #tpu.memory_space<vmem>>, vector<2x5xf32>
    tpu.vector_store %arg36[%c0_285, %c0_286], %547 {strides = array<i32>} : memref<2x5xf32, #tpu.memory_space<vmem>>, vector<2x5xf32>,
    return
  }
}

</mosaic_0001>

<llo_original>
// kernel: dfenet_forward.1
$region0: #{dfenet_forward.1}
  #allocation0 [shape = 'u32[]', space=smem, size = 0x4, offset = 0x4, fixed_abs, tag = 'smem constant byte address 0x4 - core index']
  #allocation1 [shape = 'u32[72,128]{1,0:T(1,128)}', space=vmem, size = 0x9000, scoped, tag = 'internal scratch']
  %s0 = inlined_call_operand.smem [shape: u32[37], index: -1, kind: input, shape index: {}]
  %s1 = sld [smem:[%s0]]
  %s2 = scalar_lea.smem %s0, 1
  %s3 = sld [smem:[%s2]]
  %s4 = scalar_lea.smem %s0, 2
  %s5 = sld [smem:[%s4]]
  %s6 = scalar_lea.smem %s0, 3
  %s7 = sld [smem:[%s6]]
  %s8 = scalar_lea.smem %s0, 4
  %s9 = sld [smem:[%s8]]
  %s10 = scalar_lea.smem %s0, 5
  %s11 = sld [smem:[%s10]]
  %s12 = scalar_lea.smem %s0, 6
  %s13 = sld [smem:[%s12]]
  %s14 = scalar_lea.smem %s0, 7
  %s15 = sld [smem:[%s14]]
  %s16 = scalar_lea.smem %s0, 8
  %s17 = sld [smem:[%s16]]
  %s18 = scalar_lea.smem %s0, 9
  %s19 = sld [smem:[%s18]]
  %s20 = scalar_lea.smem %s0, 10
  %s21 = sld [smem:[%s20]]
  %s22 = scalar_lea.smem %s0, 11
  %s23 = sld [smem:[%s22]]
  %s24 = scalar_lea.smem %s0, 12
  %s25 = sld [smem:[%s24]]
  %s26 = scalar_lea.smem %s0, 13
  %s27 = sld [smem:[%s26]]
  %s28 = scalar_lea.smem %s0, 14
  %s29 = sld [smem:[%s28]]
  %s30 = scalar_lea.smem %s0, 15
  %s31 = sld [smem:[%s30]]
  %s32 = scalar_lea.smem %s0, 16
  %s33 = sld [smem:[%s32]]
  %s34 = scalar_lea.smem %s0, 17
  %s35 = sld [smem:[%s34]]
  %s36 = scalar_lea.smem %s0, 18
  %s37 = sld [smem:[%s36]]
  %s38 = scalar_lea.smem %s0, 19
  %s39 = sld [smem:[%s38]]
  %s40 = scalar_lea.smem %s0, 20
  %s41 = sld [smem:[%s40]]
  %s42 = scalar_lea.smem %s0, 21
  %s43 = sld [smem:[%s42]]
  %s44 = scalar_lea.smem %s0, 22
  %s45 = sld [smem:[%s44]]
  %s46 = scalar_lea.smem %s0, 23
  %s47 = sld [smem:[%s46]]
  %s48 = scalar_lea.smem %s0, 24
  %s49 = sld [smem:[%s48]]
  %s50 = scalar_lea.smem %s0, 25
  %s51 = sld [smem:[%s50]]
  %s52 = scalar_lea.smem %s0, 26
  %s53 = sld [smem:[%s52]]
  %s54 = scalar_lea.smem %s0, 27
  %s55 = sld [smem:[%s54]]
  %s56 = scalar_lea.smem %s0, 28
  %s57 = sld [smem:[%s56]]
  %s58 = scalar_lea.smem %s0, 29
  %s59 = sld [smem:[%s58]]
  %s60 = scalar_lea.smem %s0, 30
  %s61 = sld [smem:[%s60]]
  %s62 = scalar_lea.smem %s0, 31
  %s63 = sld [smem:[%s62]]
  %s64 = scalar_lea.smem %s0, 32
  %s65 = sld [smem:[%s64]]
  %s66 = scalar_lea.smem %s0, 33
  %s67 = sld [smem:[%s66]]
  %s68 = scalar_lea.smem %s0, 34
  %s69 = sld [smem:[%s68]]
  %s70 = scalar_lea.smem %s0, 35
  %s71 = sld [smem:[%s70]]
  %s72 = scalar_lea.smem %s0, 36
  %s73 = sld [smem:[%s72]]
  %74 = xla_tuple %s71, %s73
  %s75 = sld [smem:[#allocation0]]
  $region158: #{dfenet_forward.1} parent=0
    _
  %s77 = ssub.s32 1, %s75
  %s78 = scalar_select 0, %s77, %s75
  $region1: #{dfenet_forward.1} parent=0
    #allocation2 [shape = 'u8[1024]{0}', space=vmem, size = 0x400, scoped, tag = 'output window, operand 0, single buffered']
    #allocation3 [shape = 's32[1]{0}', space=sflag, size = 0x4, scoped, tag = 'scoped memory for dfenet_forward.1']
    #allocation4 [shape = 'u8[1024]{0}', space=vmem, size = 0x400, scoped, tag = 'output window, operand 1, single buffered']
    #allocation5 [shape = 's32[1]{0}', space=sflag, size = 0x4, scoped, tag = 'scoped memory for dfenet_forward.1']
    %79 = vsyncpa [#allocation3], 0
    %80 = vsyncpa [#allocation5], 0
    // Predicated region
    $region2: #{dfenet_forward.1} parent=1 // pred_check
      _
    $region3: #{dfenet_forward.1} parent=1 // pred_check_branch
      %82 = sbr.rel (0) target = $region5
    $region4: #{dfenet_forward.1} parent=1 // pred_region
      _
    $region5: #{dfenet_forward.1} parent=1 // pred_fallthru
      _
    // Predicated region
    $region6: #{dfenet_forward.1} parent=1 // pred_check
      _
    $region7: #{dfenet_forward.1} parent=1 // pred_check_branch
      %84 = sbr.rel (0) target = $region9
    $region8: #{dfenet_forward.1} parent=1 // pred_region
      _
    $region9: #{dfenet_forward.1} parent=1 // pred_fallthru
      _
    // Predicated region
    $region10: #{dfenet_forward.1} parent=1 // pred_check
      _
    $region11: #{dfenet_forward.1} parent=1 // pred_check_branch
      %86 = sbr.rel (0) target = $region13
    $region12: #{dfenet_forward.1} parent=1 // pred_region
      _
    $region13: #{dfenet_forward.1} parent=1 // pred_fallthru
      _
    // Predicated region
    $region14: #{dfenet_forward.1} parent=1 // pred_check
      _
    $region15: #{dfenet_forward.1} parent=1 // pred_check_branch
      %88 = sbr.rel (0) target = $region17
    $region16: #{dfenet_forward.1} parent=1 // pred_region
      _
    $region17: #{dfenet_forward.1} parent=1 // pred_fallthru
      _
    // Predicated region
    $region18: #{dfenet_forward.1} parent=1 // pred_check
      _
    $region19: #{dfenet_forward.1} parent=1 // pred_check_branch
      %90 = sbr.rel (0) target = $region21
    $region20: #{dfenet_forward.1} parent=1 // pred_region
      _
    $region21: #{dfenet_forward.1} parent=1 // pred_fallthru
      _
    // Predicated region
    $region22: #{dfenet_forward.1} parent=1 // pred_check
      _
    $region23: #{dfenet_forward.1} parent=1 // pred_check_branch
      %92 = sbr.rel (0) target = $region25
    $region24: #{dfenet_forward.1} parent=1 // pred_region
      _
    $region25: #{dfenet_forward.1} parent=1 // pred_fallthru
      _
    // Predicated region
    $region26: #{dfenet_forward.1} parent=1 // pred_check
      _
    $region27: #{dfenet_forward.1} parent=1 // pred_check_branch
      %94 = sbr.rel (0) target = $region29
    $region28: #{dfenet_forward.1} parent=1 // pred_region
      _
    $region29: #{dfenet_forward.1} parent=1 // pred_fallthru
      _
    // Predicated region
    $region30: #{dfenet_forward.1} parent=1 // pred_check
      _
    $region31: #{dfenet_forward.1} parent=1 // pred_check_branch
      %96 = sbr.rel (0) target = $region33
    $region32: #{dfenet_forward.1} parent=1 // pred_region
      _
    $region33: #{dfenet_forward.1} parent=1 // pred_fallthru
      _
    // Predicated region
    $region34: #{dfenet_forward.1} parent=1 // pred_check
      _
    $region35: #{dfenet_forward.1} parent=1 // pred_check_branch
      %98 = sbr.rel (0) target = $region37
    $region36: #{dfenet_forward.1} parent=1 // pred_region
      _
    $region37: #{dfenet_forward.1} parent=1 // pred_fallthru
      _
    // Predicated region
    $region38: #{dfenet_forward.1} parent=1 // pred_check
      _
    $region39: #{dfenet_forward.1} parent=1 // pred_check_branch
      %100 = sbr.rel (0) target = $region41
    $region40: #{dfenet_forward.1} parent=1 // pred_region
      _
    $region41: #{dfenet_forward.1} parent=1 // pred_fallthru
      _
    // Predicated region
    $region42: #{dfenet_forward.1} parent=1 // pred_check
      _
    $region43: #{dfenet_forward.1} parent=1 // pred_check_branch
      %102 = sbr.rel (0) target = $region45
    $region44: #{dfenet_forward.1} parent=1 // pred_region
      _
    $region45: #{dfenet_forward.1} parent=1 // pred_fallthru
      _
    // Predicated region
    $region46: #{dfenet_forward.1} parent=1 // pred_check
      _
    $region47: #{dfenet_forward.1} parent=1 // pred_check_branch
      %104 = sbr.rel (0) target = $region49
    $region48: #{dfenet_forward.1} parent=1 // pred_region
      _
    $region49: #{dfenet_forward.1} parent=1 // pred_fallthru
      _
    // Predicated region
    $region50: #{dfenet_forward.1} parent=1 // pred_check
      _
    $region51: #{dfenet_forward.1} parent=1 // pred_check_branch
      %106 = sbr.rel (0) target = $region53
    $region52: #{dfenet_forward.1} parent=1 // pred_region
      _
    $region53: #{dfenet_forward.1} parent=1 // pred_fallthru
      _
    // Predicated region
    $region54: #{dfenet_forward.1} parent=1 // pred_check
      _
    $region55: #{dfenet_forward.1} parent=1 // pred_check_branch
      %108 = sbr.rel (0) target = $region57
    $region56: #{dfenet_forward.1} parent=1 // pred_region
      _
    $region57: #{dfenet_forward.1} parent=1 // pred_fallthru
      _
    // Predicated region
    $region58: #{dfenet_forward.1} parent=1 // pred_check
      _
    $region59: #{dfenet_forward.1} parent=1 // pred_check_branch
      %110 = sbr.rel (0) target = $region61
    $region60: #{dfenet_forward.1} parent=1 // pred_region
      _
    $region61: #{dfenet_forward.1} parent=1 // pred_fallthru
      _
    // Predicated region
    $region62: #{dfenet_forward.1} parent=1 // pred_check
      _
    $region63: #{dfenet_forward.1} parent=1 // pred_check_branch
      %112 = sbr.rel (0) target = $region65
    $region64: #{dfenet_forward.1} parent=1 // pred_region
      _
    $region65: #{dfenet_forward.1} parent=1 // pred_fallthru
      _
    // Predicated region
    $region66: #{dfenet_forward.1} parent=1 // pred_check
      _
    $region67: #{dfenet_forward.1} parent=1 // pred_check_branch
      %114 = sbr.rel (0) target = $region69
    $region68: #{dfenet_forward.1} parent=1 // pred_region
      _
    $region69: #{dfenet_forward.1} parent=1 // pred_fallthru
      _
    // Predicated region
    $region70: #{dfenet_forward.1} parent=1 // pred_check
      _
    $region71: #{dfenet_forward.1} parent=1 // pred_check_branch
      %116 = sbr.rel (0) target = $region73
    $region72: #{dfenet_forward.1} parent=1 // pred_region
      _
    $region73: #{dfenet_forward.1} parent=1 // pred_fallthru
      _
    // Predicated region
    $region74: #{dfenet_forward.1} parent=1 // pred_check
      _
    $region75: #{dfenet_forward.1} parent=1 // pred_check_branch
      %118 = sbr.rel (0) target = $region77
    $region76: #{dfenet_forward.1} parent=1 // pred_region
      _
    $region77: #{dfenet_forward.1} parent=1 // pred_fallthru
      _
    // Predicated region
    $region78: #{dfenet_forward.1} parent=1 // pred_check
      _
    $region79: #{dfenet_forward.1} parent=1 // pred_check_branch
      %120 = sbr.rel (0) target = $region81
    $region80: #{dfenet_forward.1} parent=1 // pred_region
      _
    $region81: #{dfenet_forward.1} parent=1 // pred_fallthru
      _
    // Predicated region
    $region82: #{dfenet_forward.1} parent=1 // pred_check
      _
    $region83: #{dfenet_forward.1} parent=1 // pred_check_branch
      %122 = sbr.rel (0) target = $region85
    $region84: #{dfenet_forward.1} parent=1 // pred_region
      _
    $region85: #{dfenet_forward.1} parent=1 // pred_fallthru
      _
    // Predicated region
    $region86: #{dfenet_forward.1} parent=1 // pred_check
      _
    $region87: #{dfenet_forward.1} parent=1 // pred_check_branch
      %124 = sbr.rel (0) target = $region89
    $region88: #{dfenet_forward.1} parent=1 // pred_region
      _
    $region89: #{dfenet_forward.1} parent=1 // pred_fallthru
      _
    // Predicated region
    $region90: #{dfenet_forward.1} parent=1 // pred_check
      _
    $region91: #{dfenet_forward.1} parent=1 // pred_check_branch
      %126 = sbr.rel (0) target = $region93
    $region92: #{dfenet_forward.1} parent=1 // pred_region
      _
    $region93: #{dfenet_forward.1} parent=1 // pred_fallthru
      _
    // Predicated region
    $region94: #{dfenet_forward.1} parent=1 // pred_check
      _
    $region95: #{dfenet_forward.1} parent=1 // pred_check_branch
      %128 = sbr.rel (0) target = $region97
    $region96: #{dfenet_forward.1} parent=1 // pred_region
      _
    $region97: #{dfenet_forward.1} parent=1 // pred_fallthru
      _
    // Predicated region
    $region98: #{dfenet_forward.1} parent=1 // pred_check
      _
    $region99: #{dfenet_forward.1} parent=1 // pred_check_branch
      %130 = sbr.rel (0) target = $region101
    $region100: #{dfenet_forward.1} parent=1 // pred_region
      _
    $region101: #{dfenet_forward.1} parent=1 // pred_fallthru
      _
    // Predicated region
    $region102: #{dfenet_forward.1} parent=1 // pred_check
      _
    $region103: #{dfenet_forward.1} parent=1 // pred_check_branch
      %132 = sbr.rel (0) target = $region105
    $region104: #{dfenet_forward.1} parent=1 // pred_region
      _
    $region105: #{dfenet_forward.1} parent=1 // pred_fallthru
      _
    // Predicated region
    $region106: #{dfenet_forward.1} parent=1 // pred_check
      _
    $region107: #{dfenet_forward.1} parent=1 // pred_check_branch
      %134 = sbr.rel (0) target = $region109
    $region108: #{dfenet_forward.1} parent=1 // pred_region
      _
    $region109: #{dfenet_forward.1} parent=1 // pred_fallthru
      _
    // Predicated region
    $region110: #{dfenet_forward.1} parent=1 // pred_check
      _
    $region111: #{dfenet_forward.1} parent=1 // pred_check_branch
      %136 = sbr.rel (0) target = $region113
    $region112: #{dfenet_forward.1} parent=1 // pred_region
      _
    $region113: #{dfenet_forward.1} parent=1 // pred_fallthru
      _
    // Predicated region
    $region114: #{dfenet_forward.1} parent=1 // pred_check
      _
    $region115: #{dfenet_forward.1} parent=1 // pred_check_branch
      %138 = sbr.rel (0) target = $region117
    $region116: #{dfenet_forward.1} parent=1 // pred_region
      _
    $region117: #{dfenet_forward.1} parent=1 // pred_fallthru
      _
    // Predicated region
    $region118: #{dfenet_forward.1} parent=1 // pred_check
      _
    $region119: #{dfenet_forward.1} parent=1 // pred_check_branch
      %140 = sbr.rel (0) target = $region121
    $region120: #{dfenet_forward.1} parent=1 // pred_region
      _
    $region121: #{dfenet_forward.1} parent=1 // pred_fallthru
      _
    // Predicated region
    $region122: #{dfenet_forward.1} parent=1 // pred_check
      _
    $region123: #{dfenet_forward.1} parent=1 // pred_check_branch
      %142 = sbr.rel (0) target = $region125
    $region124: #{dfenet_forward.1} parent=1 // pred_region
      _
    $region125: #{dfenet_forward.1} parent=1 // pred_fallthru
      _
    // Predicated region
    $region126: #{dfenet_forward.1} parent=1 // pred_check
      _
    $region127: #{dfenet_forward.1} parent=1 // pred_check_branch
      %144 = sbr.rel (0) target = $region129
    $region128: #{dfenet_forward.1} parent=1 // pred_region
      _
    $region129: #{dfenet_forward.1} parent=1 // pred_fallthru
      _
    // Predicated region
    $region130: #{dfenet_forward.1} parent=1 // pred_check
      _
    $region131: #{dfenet_forward.1} parent=1 // pred_check_branch
      %146 = sbr.rel (0) target = $region133
    $region132: #{dfenet_forward.1} parent=1 // pred_region
      _
    $region133: #{dfenet_forward.1} parent=1 // pred_fallthru
      _
    // Predicated region
    $region134: #{dfenet_forward.1} parent=1 // pred_check
      _
    $region135: #{dfenet_forward.1} parent=1 // pred_check_branch
      %148 = sbr.rel (0) target = $region137
    $region136: #{dfenet_forward.1} parent=1 // pred_region
      _
    $region137: #{dfenet_forward.1} parent=1 // pred_fallthru
      _
    // Predicated region
    $region138: #{dfenet_forward.1} parent=1 // pred_check
      _
    $region139: #{dfenet_forward.1} parent=1 // pred_check_branch
      %150 = sbr.rel (0) target = $region141
    $region140: #{dfenet_forward.1} parent=1 // pred_region
      _
    $region141: #{dfenet_forward.1} parent=1 // pred_fallthru
      _
    %v151 = vld [vmem:[%s3] sm:$0xff]
    %v152 = vld [vmem:[%s1] sm:$0xff]
    %vm153 = vcmask 64512
    %v155 = vsel %vm153, %v151, 0
    %157 = vmatpush.msra.mxu0 0.0
    %158 = vmatpush.msra.mxu0 0.0
    %159 = vmatpush.msra.mxu0 0.0
    %160 = vmatpush.msra.mxu0 0.0
    %161 = vmatpush.msra.mxu0 0.0
    %162 = vmatpush.msra.mxu0 0.0
    %163 = vmatpush.msra.mxu0 0.0
    %164 = vmatpush.msra.mxu0 0.0
    %165 = vmatpush.msra.mxu0 0.0
    %166 = vmatpush.msra.mxu0 0.0
    %167 = vmatpush.msra.mxu0 0.0
    %168 = vmatpush.msra.mxu0 0.0
    %169 = vmatpush.msra.mxu0 0.0
    %170 = vmatpush.msra.mxu0 0.0
    %171 = vmatpush.msra.mxu0 0.0
    %172 = vmatpush.msra.mxu0 %v152
    %173 = vmatmul.f32.gmra.mxu0 %v155
    %v174 = vpop.f32.mrf.mxu0
    %v175 = vadd.f32 0.0, %v174
    %176 = vdwg.mxu0
    %s177 = scalar_lea.vmem %s1, 8
    %v178 = vld [vmem:[%s177] sm:$0xff]
    %179 = vmatpush.msra.mxu0 0.0
    %180 = vmatpush.msra.mxu0 0.0
    %181 = vmatpush.msra.mxu0 0.0
    %182 = vmatpush.msra.mxu0 0.0
    %183 = vmatpush.msra.mxu0 0.0
    %184 = vmatpush.msra.mxu0 0.0
    %185 = vmatpush.msra.mxu0 0.0
    %186 = vmatpush.msra.mxu0 0.0
    %187 = vmatpush.msra.mxu0 0.0
    %188 = vmatpush.msra.mxu0 0.0
    %189 = vmatpush.msra.mxu0 0.0
    %190 = vmatpush.msra.mxu0 0.0
    %191 = vmatpush.msra.mxu0 0.0
    %192 = vmatpush.msra.mxu0 0.0
    %193 = vmatpush.msra.mxu0 0.0
    %194 = vmatpush.msra.mxu0 %v178
    %195 = vmatmul.f32.gmra.mxu0 %v155
    %v196 = vpop.f32.mrf.mxu0
    %v197 = vadd.f32 0.0, %v196
    %198 = vdwg.mxu0
    %v199 = vld [vmem:[%s29] sm:$0xff]
    %v200 = vld [vmem:[%s29 + $0x8] sm:$0xff]
    %v201 = vld [vmem:[%s31] sm:$0x3]
    %v202 = vld [vmem:[%s5] sm:$0xff]
    %v203 = vld [vmem:[%s5 + $0x8] sm:$0xff]
    %v204 = vld [vmem:[%s7] sm:$0x1]
    %v206 = vperm.slane %v204, 0
    %vm208 = vcmask 130048
    %v210 = vsel %vm208, %v175, 0
    %v213 = vsel %vm208, %v197, 0
    %215 = vmatpush.msra.mxu0 0.0
    %216 = vmatpush.msra.mxu0 0.0
    %217 = vmatpush.msra.mxu0 0.0
    %218 = vmatpush.msra.mxu0 0.0
    %219 = vmatpush.msra.mxu0 0.0
    %220 = vmatpush.msra.mxu0 0.0
    %221 = vmatpush.msra.mxu0 0.0
    %222 = vmatpush.msra.mxu0 0.0
    %223 = vmatpush.msra.mxu0 0.0
    %224 = vmatpush.msra.mxu0 0.0
    %225 = vmatpush.msra.mxu0 0.0
    %226 = vmatpush.msra.mxu0 0.0
    %227 = vmatpush.msra.mxu0 0.0
    %228 = vmatpush.msra.mxu0 0.0
    %229 = vmatpush.msra.mxu0 %v203
    %230 = vmatpush.msra.mxu0 %v202
    %231 = vmatmul.f32.gmra.mxu0 %v210
    %v232 = vpop.f32.mrf.mxu0
    %v233 = vadd.f32 %v206, %v232
    %234 = vmatmul.f32.gmra.mxu0 %v213
    %v235 = vpop.f32.mrf.mxu0
    %v236 = vadd.f32 %v206, %v235
    %237 = vdwg.mxu0
    %v238 = vmul.f32 %v233, 0.35355338
    %v239 = vmul.f32 %v236, 0.35355338
    %241 = vrot.lane.b32.xlu0 %v233, 112
    %v242 = vpop.permute.xlu0 %241
    %v244 = vmul.f32 %v238, %v242
    %v246 = vsel %vm208, %v244, 0
    %248 = vmatpush.msra.mxu0 0.0
    %249 = vmatpush.msra.mxu0 0.0
    %250 = vmatpush.msra.mxu0 0.0
    %251 = vmatpush.msra.mxu0 0.0
    %252 = vmatpush.msra.mxu0 0.0
    %253 = vmatpush.msra.mxu0 0.0
    %254 = vmatpush.msra.mxu0 0.0
    %255 = vmatpush.msra.mxu0 0.0
    %256 = vmatpush.msra.mxu0 0.0
    %257 = vmatpush.msra.mxu0 0.0
    %258 = vmatpush.msra.mxu0 0.0
    %259 = vmatpush.msra.mxu0 0.0
    %260 = vmatpush.msra.mxu0 0.0
    %261 = vmatpush.msra.mxu0 0.0
    %262 = vmatpush.msra.mxu0 %v200
    %263 = vmatpush.msra.mxu0 %v199
    %264 = vmatmul.f32.gmra.mxu0 %v246
    %v265 = vpop.f32.mrf.mxu0
    %v266 = vadd.f32 0.0, %v265
    %267 = vdwg.mxu0
    %269 = vrot.lane.b32.xlu0 %v236, 112
    %v270 = vpop.permute.xlu0 %269
    %v272 = vmul.f32 %v238, %v270
    %v274 = vsel %vm208, %v272, 0
    %276 = vmatpush.msra.mxu0 0.0
    %277 = vmatpush.msra.mxu0 0.0
    %278 = vmatpush.msra.mxu0 0.0
    %279 = vmatpush.msra.mxu0 0.0
    %280 = vmatpush.msra.mxu0 0.0
    %281 = vmatpush.msra.mxu0 0.0
    %282 = vmatpush.msra.mxu0 0.0
    %283 = vmatpush.msra.mxu0 0.0
    %284 = vmatpush.msra.mxu0 0.0
    %285 = vmatpush.msra.mxu0 0.0
    %286 = vmatpush.msra.mxu0 0.0
    %287 = vmatpush.msra.mxu0 0.0
    %288 = vmatpush.msra.mxu0 0.0
    %289 = vmatpush.msra.mxu0 0.0
    %290 = vmatpush.msra.mxu0 %v200
    %291 = vmatpush.msra.mxu0 %v199
    %292 = vmatmul.f32.gmra.mxu0 %v274
    %v293 = vpop.f32.mrf.mxu0
    %v294 = vadd.f32 0.0, %v293
    %295 = vdwg.mxu0
    %v296 = vmax.f32 %v266, %v294
    %v297 = vsub.f32 %v266, %v296
    %v298 = vmul.f32 %v297, 1.442695
    %v299 = vpow.pop %v298
    %v300 = vsub.f32 %v294, %v296
    %v301 = vmul.f32 %v300, 1.442695
    %v302 = vpow.pop %v301
    %v303 = vadd.f32 %v299, %v302
    %v304 = vrcp.pop %v303
    %v305 = vmul.f32 %v299, %v304
    %vm306 = vcmask 15360
    %v308 = vsel %vm306, %v305, 0
    %vm310 = vcmask 1041408
    %v312 = vsel %vm310, %v201, 0
    %314 = vmatpush.msra.mxu0 0.0
    %315 = vmatpush.msra.mxu0 0.0
    %316 = vmatpush.msra.mxu0 0.0
    %317 = vmatpush.msra.mxu0 0.0
    %318 = vmatpush.msra.mxu0 0.0
    %319 = vmatpush.msra.mxu0 0.0
    %320 = vmatpush.msra.mxu0 0.0
    %321 = vmatpush.msra.mxu0 0.0
    %322 = vmatpush.msra.mxu0 0.0
    %323 = vmatpush.msra.mxu0 0.0
    %324 = vmatpush.msra.mxu0 0.0
    %325 = vmatpush.msra.mxu0 0.0
    %326 = vmatpush.msra.mxu0 0.0
    %327 = vmatpush.msra.mxu0 0.0
    %328 = vmatpush.msra.mxu0 0.0
    %329 = vmatpush.msra.mxu0 %v312
    %330 = vmatmul.f32.gmra.mxu0 %v308
    %v331 = vpop.f32.mrf.mxu0
    %v332 = vadd.f32 0.0, %v331
    %333 = vdwg.mxu0
    %334 = vrot.lane.b32.xlu0 %v233, 96
    %v335 = vpop.permute.xlu0 %334
    %v337 = vmul.f32 %v332, %v335
    %v338 = vadd.f32 %v337, 0.0
    %v339 = vmul.f32 %v302, %v304
    %v341 = vsel %vm306, %v339, 0
    %343 = vmatpush.msra.mxu0 0.0
    %344 = vmatpush.msra.mxu0 0.0
    %345 = vmatpush.msra.mxu0 0.0
    %346 = vmatpush.msra.mxu0 0.0
    %347 = vmatpush.msra.mxu0 0.0
    %348 = vmatpush.msra.mxu0 0.0
    %349 = vmatpush.msra.mxu0 0.0
    %350 = vmatpush.msra.mxu0 0.0
    %351 = vmatpush.msra.mxu0 0.0
    %352 = vmatpush.msra.mxu0 0.0
    %353 = vmatpush.msra.mxu0 0.0
    %354 = vmatpush.msra.mxu0 0.0
    %355 = vmatpush.msra.mxu0 0.0
    %356 = vmatpush.msra.mxu0 0.0
    %357 = vmatpush.msra.mxu0 0.0
    %358 = vmatpush.msra.mxu0 %v312
    %359 = vmatmul.f32.gmra.mxu0 %v341
    %v360 = vpop.f32.mrf.mxu0
    %v361 = vadd.f32 0.0, %v360
    %362 = vdwg.mxu0
    %363 = vrot.lane.b32.xlu0 %v236, 96
    %v364 = vpop.permute.xlu0 %363
    %v366 = vmul.f32 %v361, %v364
    %v367 = vadd.f32 %v338, %v366
    %v368 = vmul.f32 %v239, %v242
    %v370 = vsel %vm208, %v368, 0
    %372 = vmatpush.msra.mxu0 0.0
    %373 = vmatpush.msra.mxu0 0.0
    %374 = vmatpush.msra.mxu0 0.0
    %375 = vmatpush.msra.mxu0 0.0
    %376 = vmatpush.msra.mxu0 0.0
    %377 = vmatpush.msra.mxu0 0.0
    %378 = vmatpush.msra.mxu0 0.0
    %379 = vmatpush.msra.mxu0 0.0
    %380 = vmatpush.msra.mxu0 0.0
    %381 = vmatpush.msra.mxu0 0.0
    %382 = vmatpush.msra.mxu0 0.0
    %383 = vmatpush.msra.mxu0 0.0
    %384 = vmatpush.msra.mxu0 0.0
    %385 = vmatpush.msra.mxu0 0.0
    %386 = vmatpush.msra.mxu0 %v200
    %387 = vmatpush.msra.mxu0 %v199
    %388 = vmatmul.f32.gmra.mxu0 %v370
    %v389 = vpop.f32.mrf.mxu0
    %v390 = vadd.f32 0.0, %v389
    %391 = vdwg.mxu0
    %v392 = vmul.f32 %v239, %v270
    %v394 = vsel %vm208, %v392, 0
    %396 = vmatpush.msra.mxu0 0.0
    %397 = vmatpush.msra.mxu0 0.0
    %398 = vmatpush.msra.mxu0 0.0
    %399 = vmatpush.msra.mxu0 0.0
    %400 = vmatpush.msra.mxu0 0.0
    %401 = vmatpush.msra.mxu0 0.0
    %402 = vmatpush.msra.mxu0 0.0
    %403 = vmatpush.msra.mxu0 0.0
    %404 = vmatpush.msra.mxu0 0.0
    %405 = vmatpush.msra.mxu0 0.0
    %406 = vmatpush.msra.mxu0 0.0
    %407 = vmatpush.msra.mxu0 0.0
    %408 = vmatpush.msra.mxu0 0.0
    %409 = vmatpush.msra.mxu0 0.0
    %410 = vmatpush.msra.mxu0 %v200
    %411 = vmatpush.msra.mxu0 %v199
    %412 = vmatmul.f32.gmra.mxu0 %v394
    %v413 = vpop.f32.mrf.mxu0
    %v414 = vadd.f32 0.0, %v413
    %415 = vdwg.mxu0
    %v416 = vmax.f32 %v390, %v414
    %v417 = vsub.f32 %v390, %v416
    %v418 = vmul.f32 %v417, 1.442695
    %v419 = vpow.pop %v418
    %v420 = vsub.f32 %v414, %v416
    %v421 = vmul.f32 %v420, 1.442695
    %v422 = vpow.pop %v421
    %v423 = vadd.f32 %v419, %v422
    %v424 = vrcp.pop %v423
    %v425 = vmul.f32 %v419, %v424
    %v427 = vsel %vm306, %v425, 0
    %429 = vmatpush.msra.mxu0 0.0
    %430 = vmatpush.msra.mxu0 0.0
    %431 = vmatpush.msra.mxu0 0.0
    %432 = vmatpush.msra.mxu0 0.0
    %433 = vmatpush.msra.mxu0 0.0
    %434 = vmatpush.msra.mxu0 0.0
    %435 = vmatpush.msra.mxu0 0.0
    %436 = vmatpush.msra.mxu0 0.0
    %437 = vmatpush.msra.mxu0 0.0
    %438 = vmatpush.msra.mxu0 0.0
    %439 = vmatpush.msra.mxu0 0.0
    %440 = vmatpush.msra.mxu0 0.0
    %441 = vmatpush.msra.mxu0 0.0
    %442 = vmatpush.msra.mxu0 0.0
    %443 = vmatpush.msra.mxu0 0.0
    %444 = vmatpush.msra.mxu0 %v312
    %445 = vmatmul.f32.gmra.mxu0 %v427
    %v446 = vpop.f32.mrf.mxu0
    %v447 = vadd.f32 0.0, %v446
    %448 = vdwg.mxu0
    %v449 = vmul.f32 %v447, %v335
    %v450 = vadd.f32 %v449, 0.0
    %v451 = vmul.f32 %v422, %v424
    %v453 = vsel %vm306, %v451, 0
    %455 = vmatpush.msra.mxu0 0.0
    %456 = vmatpush.msra.mxu0 0.0
    %457 = vmatpush.msra.mxu0 0.0
    %458 = vmatpush.msra.mxu0 0.0
    %459 = vmatpush.msra.mxu0 0.0
    %460 = vmatpush.msra.mxu0 0.0
    %461 = vmatpush.msra.mxu0 0.0
    %462 = vmatpush.msra.mxu0 0.0
    %463 = vmatpush.msra.mxu0 0.0
    %464 = vmatpush.msra.mxu0 0.0
    %465 = vmatpush.msra.mxu0 0.0
    %466 = vmatpush.msra.mxu0 0.0
    %467 = vmatpush.msra.mxu0 0.0
    %468 = vmatpush.msra.mxu0 0.0
    %469 = vmatpush.msra.mxu0 0.0
    %470 = vmatpush.msra.mxu0 %v312
    %471 = vmatmul.f32.gmra.mxu0 %v453
    %v472 = vpop.f32.mrf.mxu0
    %v473 = vadd.f32 0.0, %v472
    %474 = vdwg.mxu0
    %v475 = vmul.f32 %v473, %v364
    %v476 = vadd.f32 %v450, %v475
    %v477 = vld [vmem:[%s9] sm:$0xff]
    %v478 = vld [vmem:[%s9 + $0x8] sm:$0xff]
    %v479 = vld [vmem:[%s11] sm:$0x1]
    %v481 = vperm.slane %v479, 0
    %v484 = vsel %vm208, %v367, 0
    %v487 = vsel %vm208, %v476, 0
    %489 = vmatpush.msra.mxu0 0.0
    %490 = vmatpush.msra.mxu0 0.0
    %491 = vmatpush.msra.mxu0 0.0
    %492 = vmatpush.msra.mxu0 0.0
    %493 = vmatpush.msra.mxu0 0.0
    %494 = vmatpush.msra.mxu0 0.0
    %495 = vmatpush.msra.mxu0 0.0
    %496 = vmatpush.msra.mxu0 0.0
    %497 = vmatpush.msra.mxu0 0.0
    %498 = vmatpush.msra.mxu0 0.0
    %499 = vmatpush.msra.mxu0 0.0
    %500 = vmatpush.msra.mxu0 0.0
    %501 = vmatpush.msra.mxu0 0.0
    %502 = vmatpush.msra.mxu0 0.0
    %503 = vmatpush.msra.mxu0 %v478
    %504 = vmatpush.msra.mxu0 %v477
    %505 = vmatmul.f32.gmra.mxu0 %v484
    %v506 = vpop.f32.mrf.mxu0
    %v507 = vadd.f32 %v481, %v506
    %508 = vmatmul.f32.gmra.mxu0 %v487
    %v509 = vpop.f32.mrf.mxu0
    %v510 = vadd.f32 %v481, %v509
    %511 = vdwg.mxu0
    %v512 = vadd.f32 %v175, %v507
    %v513 = vadd.f32 %v197, %v510
    %v514 = vsel %vm208, %v512, 0.0
    %515 = vadd.xlane.f32.xlu0 %v514
    %v516 = vpop.xlane.xlu0 %515
    %v517 = vsel %vm208, %v513, 0.0
    %518 = vadd.xlane.f32.xlu0 %v517
    %v519 = vpop.xlane.xlu0 %518
    %v520 = vrcp.pop 16.0
    %v521 = vmul.f32 16.0, %v520
    %v522 = vsub.f32 1.0, %v521
    %v523 = vmul.f32 %v520, %v522
    %v524 = vadd.f32 %v520, %v523
    %vm525 = vweird.f32 %v520
    %v526 = vsel %vm525, %v520, %v524
    %v527 = vmul.f32 %v516, %v526
    %v528 = vmul.f32 %v519, %v526
    %v529 = vsub.f32 %v512, %v527
    %v530 = vsub.f32 %v513, %v528
    %v531 = vmul.f32 %v529, %v529
    %v532 = vmul.f32 %v530, %v530
    %v533 = vsel %vm208, %v531, 0.0
    %534 = vadd.xlane.f32.xlu0 %v533
    %v535 = vpop.xlane.xlu0 %534
    %v536 = vsel %vm208, %v532, 0.0
    %537 = vadd.xlane.f32.xlu0 %v536
    %v538 = vpop.xlane.xlu0 %537
    %v539 = vmul.f32 %v535, %v526
    %v540 = vmul.f32 %v538, %v526
    %v541 = vadd.f32 %v539, 1e-05
    %v542 = vadd.f32 %v540, 1e-05
    %v543 = vrsqrt.pop %v541
    %v544 = vmul.f32 %v543, %v541
    %v545 = vmul.f32 %v544, %v543
    %v546 = vmul.f32 0.5, %v545
    %v547 = vsub.f32 1.5, %v546
    %v548 = vmul.f32 %v543, %v547
    %vm549 = vweird.f32 %v541
    %vm550 = vweird.f32 %v543
    %vm551 = vmor %vm549, %vm550
    %v552 = vsel %vm551, %v543, %v548
    %v553 = vrsqrt.pop %v542
    %v554 = vmul.f32 %v553, %v542
    %v555 = vmul.f32 %v554, %v553
    %v556 = vmul.f32 0.5, %v555
    %v557 = vsub.f32 1.5, %v556
    %v558 = vmul.f32 %v553, %v557
    %vm559 = vweird.f32 %v542
    %vm560 = vweird.f32 %v553
    %vm561 = vmor %vm559, %vm560
    %v562 = vsel %vm561, %v553, %v558
    %v563 = vmul.f32 %v529, %v552
    %v564 = vmul.f32 %v530, %v562
    %v565 = vld [vmem:[%s21] sm:$0x1]
    %v567 = vperm.slane %v565, 0
    %v569 = vmul.f32 %v563, %v567
    %v570 = vmul.f32 %v564, %v567
    %v571 = vld [vmem:[%s23] sm:$0x1]
    %v573 = vperm.slane %v571, 0
    %v575 = vadd.f32 %v569, %v573
    %v576 = vadd.f32 %v570, %v573
    %v577 = vld [vmem:[%s13] sm:$0xff]
    %v578 = vld [vmem:[%s13 + $0x8] sm:$0xff]
    %v579 = vld [vmem:[%s13 + $0x10] sm:$0xff]
    %v580 = vld [vmem:[%s13 + $0x18] sm:$0xff]
    %v581 = vld [vmem:[%s13 + $0x20] sm:$0xff]
    %v582 = vld [vmem:[%s13 + $0x28] sm:$0xff]
    %v583 = vld [vmem:[%s13 + $0x30] sm:$0xff]
    %v584 = vld [vmem:[%s13 + $0x38] sm:$0xff]
    %v585 = vld [vmem:[%s13 + $0x40] sm:$0xff]
    %v586 = vld [vmem:[%s13 + $0x48] sm:$0xff]
    %v587 = vld [vmem:[%s13 + $0x50] sm:$0xff]
    %v588 = vld [vmem:[%s13 + $0x58] sm:$0xff]
    %v589 = vld [vmem:[%s13 + $0x60] sm:$0xff]
    %v590 = vld [vmem:[%s13 + $0x68] sm:$0xff]
    %v591 = vld [vmem:[%s13 + $0x70] sm:$0xff]
    %v592 = vld [vmem:[%s13 + $0x78] sm:$0xff]
    %v593 = vld [vmem:[%s13 + $0x80] sm:$0xff]
    %v594 = vld [vmem:[%s13 + $0x88] sm:$0xff]
    %v595 = vld [vmem:[%s13 + $0x90] sm:$0xff]
    %v596 = vld [vmem:[%s13 + $0x98] sm:$0xff]
    %v597 = vld [vmem:[%s13 + $0xa0] sm:$0xff]
    %v598 = vld [vmem:[%s13 + $0xa8] sm:$0xff]
    %v599 = vld [vmem:[%s13 + $0xb0] sm:$0xff]
    %v600 = vld [vmem:[%s13 + $0xb8] sm:$0xff]
    %v601 = vld [vmem:[%s13 + $0xc0] sm:$0xff]
    %v602 = vld [vmem:[%s13 + $0xc8] sm:$0xff]
    %v603 = vld [vmem:[%s13 + $0xd0] sm:$0xff]
    %v604 = vld [vmem:[%s13 + $0xd8] sm:$0xff]
    %v605 = vld [vmem:[%s13 + $0xe0] sm:$0xff]
    %v606 = vld [vmem:[%s13 + $0xe8] sm:$0xff]
    %v607 = vld [vmem:[%s13 + $0xf0] sm:$0xff]
    %v608 = vld [vmem:[%s13 + $0xf8] sm:$0xff]
    %v609 = vld [vmem:[%s15] sm:$0xff]
    %v610 = vld [vmem:[%s15 + $0x8] sm:$0xff]
    %v613 = vperm.slane %v609, 0
    %v614 = vperm.slane %v609, 1
    %v615 = vperm.slane %v609, 2
    %v616 = vperm.slane %v609, 3
    %v617 = vperm.slane %v609, 4
    %v618 = vperm.slane %v609, 5
    %v619 = vperm.slane %v609, 6
    %v620 = vperm.slane %v609, 7
    %v621 = vperm.slane %v610, 0
    %v622 = vperm.slane %v610, 1
    %v623 = vperm.slane %v610, 2
    %v624 = vperm.slane %v610, 3
    %v625 = vperm.slane %v610, 4
    %v626 = vperm.slane %v610, 5
    %v627 = vperm.slane %v610, 6
    %v628 = vperm.slane %v610, 7
    %v646 = vsel %vm208, %v575, 0
    %v649 = vsel %vm208, %v576, 0
    %651 = vmatpush.msra.mxu0 0.0
    %652 = vmatpush.msra.mxu0 0.0
    %653 = vmatpush.msra.mxu0 0.0
    %654 = vmatpush.msra.mxu0 0.0
    %655 = vmatpush.msra.mxu0 0.0
    %656 = vmatpush.msra.mxu0 0.0
    %657 = vmatpush.msra.mxu0 0.0
    %658 = vmatpush.msra.mxu0 0.0
    %659 = vmatpush.msra.mxu0 0.0
    %660 = vmatpush.msra.mxu0 0.0
    %661 = vmatpush.msra.mxu0 0.0
    %662 = vmatpush.msra.mxu0 0.0
    %663 = vmatpush.msra.mxu0 0.0
    %664 = vmatpush.msra.mxu0 0.0
    %665 = vmatpush.msra.mxu0 %v593
    %666 = vmatpush.msra.mxu0 %v577
    %667 = vmatmul.f32.gmra.mxu0 %v646
    %v668 = vpop.f32.mrf.mxu0
    %v669 = vadd.f32 %v613, %v668
    %670 = vmatmul.f32.gmra.mxu0 %v649
    %v671 = vpop.f32.mrf.mxu0
    %v672 = vadd.f32 %v613, %v671
    %673 = vdwg.mxu0
    %674 = vmatpush.msra.mxu0 0.0
    %675 = vmatpush.msra.mxu0 0.0
    %676 = vmatpush.msra.mxu0 0.0
    %677 = vmatpush.msra.mxu0 0.0
    %678 = vmatpush.msra.mxu0 0.0
    %679 = vmatpush.msra.mxu0 0.0
    %680 = vmatpush.msra.mxu0 0.0
    %681 = vmatpush.msra.mxu0 0.0
    %682 = vmatpush.msra.mxu0 0.0
    %683 = vmatpush.msra.mxu0 0.0
    %684 = vmatpush.msra.mxu0 0.0
    %685 = vmatpush.msra.mxu0 0.0
    %686 = vmatpush.msra.mxu0 0.0
    %687 = vmatpush.msra.mxu0 0.0
    %688 = vmatpush.msra.mxu0 %v594
    %689 = vmatpush.msra.mxu0 %v578
    %690 = vmatmul.f32.gmra.mxu0 %v646
    %v691 = vpop.f32.mrf.mxu0
    %v692 = vadd.f32 %v614, %v691
    %693 = vmatmul.f32.gmra.mxu0 %v649
    %v694 = vpop.f32.mrf.mxu0
    %v695 = vadd.f32 %v614, %v694
    %696 = vdwg.mxu0
    %697 = vmatpush.msra.mxu0 0.0
    %698 = vmatpush.msra.mxu0 0.0
    %699 = vmatpush.msra.mxu0 0.0
    %700 = vmatpush.msra.mxu0 0.0
    %701 = vmatpush.msra.mxu0 0.0
    %702 = vmatpush.msra.mxu0 0.0
    %703 = vmatpush.msra.mxu0 0.0
    %704 = vmatpush.msra.mxu0 0.0
    %705 = vmatpush.msra.mxu0 0.0
    %706 = vmatpush.msra.mxu0 0.0
    %707 = vmatpush.msra.mxu0 0.0
    %708 = vmatpush.msra.mxu0 0.0
    %709 = vmatpush.msra.mxu0 0.0
    %710 = vmatpush.msra.mxu0 0.0
    %711 = vmatpush.msra.mxu0 %v595
    %712 = vmatpush.msra.mxu0 %v579
    %713 = vmatmul.f32.gmra.mxu0 %v646
    %v714 = vpop.f32.mrf.mxu0
    %v715 = vadd.f32 %v615, %v714
    %716 = vmatmul.f32.gmra.mxu0 %v649
    %v717 = vpop.f32.mrf.mxu0
    %v718 = vadd.f32 %v615, %v717
    %719 = vdwg.mxu0
    %720 = vmatpush.msra.mxu0 0.0
    %721 = vmatpush.msra.mxu0 0.0
    %722 = vmatpush.msra.mxu0 0.0
    %723 = vmatpush.msra.mxu0 0.0
    %724 = vmatpush.msra.mxu0 0.0
    %725 = vmatpush.msra.mxu0 0.0
    %726 = vmatpush.msra.mxu0 0.0
    %727 = vmatpush.msra.mxu0 0.0
    %728 = vmatpush.msra.mxu0 0.0
    %729 = vmatpush.msra.mxu0 0.0
    %730 = vmatpush.msra.mxu0 0.0
    %731 = vmatpush.msra.mxu0 0.0
    %732 = vmatpush.msra.mxu0 0.0
    %733 = vmatpush.msra.mxu0 0.0
    %734 = vmatpush.msra.mxu0 %v596
    %735 = vmatpush.msra.mxu0 %v580
    %736 = vmatmul.f32.gmra.mxu0 %v646
    %v737 = vpop.f32.mrf.mxu0
    %v738 = vadd.f32 %v616, %v737
    %739 = vmatmul.f32.gmra.mxu0 %v649
    %v740 = vpop.f32.mrf.mxu0
    %v741 = vadd.f32 %v616, %v740
    %742 = vdwg.mxu0
    %743 = vmatpush.msra.mxu0 0.0
    %744 = vmatpush.msra.mxu0 0.0
    %745 = vmatpush.msra.mxu0 0.0
    %746 = vmatpush.msra.mxu0 0.0
    %747 = vmatpush.msra.mxu0 0.0
    %748 = vmatpush.msra.mxu0 0.0
    %749 = vmatpush.msra.mxu0 0.0
    %750 = vmatpush.msra.mxu0 0.0
    %751 = vmatpush.msra.mxu0 0.0
    %752 = vmatpush.msra.mxu0 0.0
    %753 = vmatpush.msra.mxu0 0.0
    %754 = vmatpush.msra.mxu0 0.0
    %755 = vmatpush.msra.mxu0 0.0
    %756 = vmatpush.msra.mxu0 0.0
    %757 = vmatpush.msra.mxu0 %v597
    %758 = vmatpush.msra.mxu0 %v581
    %759 = vmatmul.f32.gmra.mxu0 %v646
    %v760 = vpop.f32.mrf.mxu0
    %v761 = vadd.f32 %v617, %v760
    %762 = vmatmul.f32.gmra.mxu0 %v649
    %v763 = vpop.f32.mrf.mxu0
    %v764 = vadd.f32 %v617, %v763
    %765 = vdwg.mxu0
    %766 = vmatpush.msra.mxu0 0.0
    %767 = vmatpush.msra.mxu0 0.0
    %768 = vmatpush.msra.mxu0 0.0
    %769 = vmatpush.msra.mxu0 0.0
    %770 = vmatpush.msra.mxu0 0.0
    %771 = vmatpush.msra.mxu0 0.0
    %772 = vmatpush.msra.mxu0 0.0
    %773 = vmatpush.msra.mxu0 0.0
    %774 = vmatpush.msra.mxu0 0.0
    %775 = vmatpush.msra.mxu0 0.0
    %776 = vmatpush.msra.mxu0 0.0
    %777 = vmatpush.msra.mxu0 0.0
    %778 = vmatpush.msra.mxu0 0.0
    %779 = vmatpush.msra.mxu0 0.0
    %780 = vmatpush.msra.mxu0 %v598
    %781 = vmatpush.msra.mxu0 %v582
    %782 = vmatmul.f32.gmra.mxu0 %v646
    %v783 = vpop.f32.mrf.mxu0
    %v784 = vadd.f32 %v618, %v783
    %785 = vmatmul.f32.gmra.mxu0 %v649
    %v786 = vpop.f32.mrf.mxu0
    %v787 = vadd.f32 %v618, %v786
    %788 = vdwg.mxu0
    %789 = vmatpush.msra.mxu0 0.0
    %790 = vmatpush.msra.mxu0 0.0
    %791 = vmatpush.msra.mxu0 0.0
    %792 = vmatpush.msra.mxu0 0.0
    %793 = vmatpush.msra.mxu0 0.0
    %794 = vmatpush.msra.mxu0 0.0
    %795 = vmatpush.msra.mxu0 0.0
    %796 = vmatpush.msra.mxu0 0.0
    %797 = vmatpush.msra.mxu0 0.0
    %798 = vmatpush.msra.mxu0 0.0
    %799 = vmatpush.msra.mxu0 0.0
    %800 = vmatpush.msra.mxu0 0.0
    %801 = vmatpush.msra.mxu0 0.0
    %802 = vmatpush.msra.mxu0 0.0
    %803 = vmatpush.msra.mxu0 %v599
    %804 = vmatpush.msra.mxu0 %v583
    %805 = vmatmul.f32.gmra.mxu0 %v646
    %v806 = vpop.f32.mrf.mxu0
    %v807 = vadd.f32 %v619, %v806
    %808 = vmatmul.f32.gmra.mxu0 %v649
    %v809 = vpop.f32.mrf.mxu0
    %v810 = vadd.f32 %v619, %v809
    %811 = vdwg.mxu0
    %812 = vmatpush.msra.mxu0 0.0
    %813 = vmatpush.msra.mxu0 0.0
    %814 = vmatpush.msra.mxu0 0.0
    %815 = vmatpush.msra.mxu0 0.0
    %816 = vmatpush.msra.mxu0 0.0
    %817 = vmatpush.msra.mxu0 0.0
    %818 = vmatpush.msra.mxu0 0.0
    %819 = vmatpush.msra.mxu0 0.0
    %820 = vmatpush.msra.mxu0 0.0
    %821 = vmatpush.msra.mxu0 0.0
    %822 = vmatpush.msra.mxu0 0.0
    %823 = vmatpush.msra.mxu0 0.0
    %824 = vmatpush.msra.mxu0 0.0
    %825 = vmatpush.msra.mxu0 0.0
    %826 = vmatpush.msra.mxu0 %v600
    %827 = vmatpush.msra.mxu0 %v584
    %828 = vmatmul.f32.gmra.mxu0 %v646
    %v829 = vpop.f32.mrf.mxu0
    %v830 = vadd.f32 %v620, %v829
    %831 = vmatmul.f32.gmra.mxu0 %v649
    %v832 = vpop.f32.mrf.mxu0
    %v833 = vadd.f32 %v620, %v832
    %834 = vdwg.mxu0
    %835 = vmatpush.msra.mxu0 0.0
    %836 = vmatpush.msra.mxu0 0.0
    %837 = vmatpush.msra.mxu0 0.0
    %838 = vmatpush.msra.mxu0 0.0
    %839 = vmatpush.msra.mxu0 0.0
    %840 = vmatpush.msra.mxu0 0.0
    %841 = vmatpush.msra.mxu0 0.0
    %842 = vmatpush.msra.mxu0 0.0
    %843 = vmatpush.msra.mxu0 0.0
    %844 = vmatpush.msra.mxu0 0.0
    %845 = vmatpush.msra.mxu0 0.0
    %846 = vmatpush.msra.mxu0 0.0
    %847 = vmatpush.msra.mxu0 0.0
    %848 = vmatpush.msra.mxu0 0.0
    %849 = vmatpush.msra.mxu0 %v601
    %850 = vmatpush.msra.mxu0 %v585
    %851 = vmatmul.f32.gmra.mxu0 %v646
    %v852 = vpop.f32.mrf.mxu0
    %v853 = vadd.f32 %v621, %v852
    %854 = vmatmul.f32.gmra.mxu0 %v649
    %v855 = vpop.f32.mrf.mxu0
    %v856 = vadd.f32 %v621, %v855
    %857 = vdwg.mxu0
    %858 = vmatpush.msra.mxu0 0.0
    %859 = vmatpush.msra.mxu0 0.0
    %860 = vmatpush.msra.mxu0 0.0
    %861 = vmatpush.msra.mxu0 0.0
    %862 = vmatpush.msra.mxu0 0.0
    %863 = vmatpush.msra.mxu0 0.0
    %864 = vmatpush.msra.mxu0 0.0
    %865 = vmatpush.msra.mxu0 0.0
    %866 = vmatpush.msra.mxu0 0.0
    %867 = vmatpush.msra.mxu0 0.0
    %868 = vmatpush.msra.mxu0 0.0
    %869 = vmatpush.msra.mxu0 0.0
    %870 = vmatpush.msra.mxu0 0.0
    %871 = vmatpush.msra.mxu0 0.0
    %872 = vmatpush.msra.mxu0 %v602
    %873 = vmatpush.msra.mxu0 %v586
    %874 = vmatmul.f32.gmra.mxu0 %v646
    %v875 = vpop.f32.mrf.mxu0
    %v876 = vadd.f32 %v622, %v875
    %877 = vmatmul.f32.gmra.mxu0 %v649
    %v878 = vpop.f32.mrf.mxu0
    %v879 = vadd.f32 %v622, %v878
    %880 = vdwg.mxu0
    %881 = vmatpush.msra.mxu0 0.0
    %882 = vmatpush.msra.mxu0 0.0
    %883 = vmatpush.msra.mxu0 0.0
    %884 = vmatpush.msra.mxu0 0.0
    %885 = vmatpush.msra.mxu0 0.0
    %886 = vmatpush.msra.mxu0 0.0
    %887 = vmatpush.msra.mxu0 0.0
    %888 = vmatpush.msra.mxu0 0.0
    %889 = vmatpush.msra.mxu0 0.0
    %890 = vmatpush.msra.mxu0 0.0
    %891 = vmatpush.msra.mxu0 0.0
    %892 = vmatpush.msra.mxu0 0.0
    %893 = vmatpush.msra.mxu0 0.0
    %894 = vmatpush.msra.mxu0 0.0
    %895 = vmatpush.msra.mxu0 %v603
    %896 = vmatpush.msra.mxu0 %v587
    %897 = vmatmul.f32.gmra.mxu0 %v646
    %v898 = vpop.f32.mrf.mxu0
    %v899 = vadd.f32 %v623, %v898
    %900 = vmatmul.f32.gmra.mxu0 %v649
    %v901 = vpop.f32.mrf.mxu0
    %v902 = vadd.f32 %v623, %v901
    %903 = vdwg.mxu0
    %904 = vmatpush.msra.mxu0 0.0
    %905 = vmatpush.msra.mxu0 0.0
    %906 = vmatpush.msra.mxu0 0.0
    %907 = vmatpush.msra.mxu0 0.0
    %908 = vmatpush.msra.mxu0 0.0
    %909 = vmatpush.msra.mxu0 0.0
    %910 = vmatpush.msra.mxu0 0.0
    %911 = vmatpush.msra.mxu0 0.0
    %912 = vmatpush.msra.mxu0 0.0
    %913 = vmatpush.msra.mxu0 0.0
    %914 = vmatpush.msra.mxu0 0.0
    %915 = vmatpush.msra.mxu0 0.0
    %916 = vmatpush.msra.mxu0 0.0
    %917 = vmatpush.msra.mxu0 0.0
    %918 = vmatpush.msra.mxu0 %v604
    %919 = vmatpush.msra.mxu0 %v588
    %920 = vmatmul.f32.gmra.mxu0 %v646
    %v921 = vpop.f32.mrf.mxu0
    %v922 = vadd.f32 %v624, %v921
    %923 = vmatmul.f32.gmra.mxu0 %v649
    %v924 = vpop.f32.mrf.mxu0
    %v925 = vadd.f32 %v624, %v924
    %926 = vdwg.mxu0
    %927 = vmatpush.msra.mxu0 0.0
    %928 = vmatpush.msra.mxu0 0.0
    %929 = vmatpush.msra.mxu0 0.0
    %930 = vmatpush.msra.mxu0 0.0
    %931 = vmatpush.msra.mxu0 0.0
    %932 = vmatpush.msra.mxu0 0.0
    %933 = vmatpush.msra.mxu0 0.0
    %934 = vmatpush.msra.mxu0 0.0
    %935 = vmatpush.msra.mxu0 0.0
    %936 = vmatpush.msra.mxu0 0.0
    %937 = vmatpush.msra.mxu0 0.0
    %938 = vmatpush.msra.mxu0 0.0
    %939 = vmatpush.msra.mxu0 0.0
    %940 = vmatpush.msra.mxu0 0.0
    %941 = vmatpush.msra.mxu0 %v605
    %942 = vmatpush.msra.mxu0 %v589
    %943 = vmatmul.f32.gmra.mxu0 %v646
    %v944 = vpop.f32.mrf.mxu0
    %v945 = vadd.f32 %v625, %v944
    %946 = vmatmul.f32.gmra.mxu0 %v649
    %v947 = vpop.f32.mrf.mxu0
    %v948 = vadd.f32 %v625, %v947
    %949 = vdwg.mxu0
    %950 = vmatpush.msra.mxu0 0.0
    %951 = vmatpush.msra.mxu0 0.0
    %952 = vmatpush.msra.mxu0 0.0
    %953 = vmatpush.msra.mxu0 0.0
    %954 = vmatpush.msra.mxu0 0.0
    %955 = vmatpush.msra.mxu0 0.0
    %956 = vmatpush.msra.mxu0 0.0
    %957 = vmatpush.msra.mxu0 0.0
    %958 = vmatpush.msra.mxu0 0.0
    %959 = vmatpush.msra.mxu0 0.0
    %960 = vmatpush.msra.mxu0 0.0
    %961 = vmatpush.msra.mxu0 0.0
    %962 = vmatpush.msra.mxu0 0.0
    %963 = vmatpush.msra.mxu0 0.0
    %964 = vmatpush.msra.mxu0 %v606
    %965 = vmatpush.msra.mxu0 %v590
    %966 = vmatmul.f32.gmra.mxu0 %v646
    %v967 = vpop.f32.mrf.mxu0
    %v968 = vadd.f32 %v626, %v967
    %969 = vmatmul.f32.gmra.mxu0 %v649
    %v970 = vpop.f32.mrf.mxu0
    %v971 = vadd.f32 %v626, %v970
    %972 = vdwg.mxu0
    %973 = vmatpush.msra.mxu0 0.0
    %974 = vmatpush.msra.mxu0 0.0
    %975 = vmatpush.msra.mxu0 0.0
    %976 = vmatpush.msra.mxu0 0.0
    %977 = vmatpush.msra.mxu0 0.0
    %978 = vmatpush.msra.mxu0 0.0
    %979 = vmatpush.msra.mxu0 0.0
    %980 = vmatpush.msra.mxu0 0.0
    %981 = vmatpush.msra.mxu0 0.0
    %982 = vmatpush.msra.mxu0 0.0
    %983 = vmatpush.msra.mxu0 0.0
    %984 = vmatpush.msra.mxu0 0.0
    %985 = vmatpush.msra.mxu0 0.0
    %986 = vmatpush.msra.mxu0 0.0
    %987 = vmatpush.msra.mxu0 %v607
    %988 = vmatpush.msra.mxu0 %v591
    %989 = vmatmul.f32.gmra.mxu0 %v646
    %v990 = vpop.f32.mrf.mxu0
    %v991 = vadd.f32 %v627, %v990
    %992 = vmatmul.f32.gmra.mxu0 %v649
    %v993 = vpop.f32.mrf.mxu0
    %v994 = vadd.f32 %v627, %v993
    %995 = vdwg.mxu0
    %996 = vmatpush.msra.mxu0 0.0
    %997 = vmatpush.msra.mxu0 0.0
    %998 = vmatpush.msra.mxu0 0.0
    %999 = vmatpush.msra.mxu0 0.0
    %1000 = vmatpush.msra.mxu0 0.0
    %1001 = vmatpush.msra.mxu0 0.0
    %1002 = vmatpush.msra.mxu0 0.0
    %1003 = vmatpush.msra.mxu0 0.0
    %1004 = vmatpush.msra.mxu0 0.0
    %1005 = vmatpush.msra.mxu0 0.0
    %1006 = vmatpush.msra.mxu0 0.0
    %1007 = vmatpush.msra.mxu0 0.0
    %1008 = vmatpush.msra.mxu0 0.0
    %1009 = vmatpush.msra.mxu0 0.0
    %1010 = vmatpush.msra.mxu0 %v608
    %1011 = vmatpush.msra.mxu0 %v592
    %1012 = vmatmul.f32.gmra.mxu0 %v646
    %v1013 = vpop.f32.mrf.mxu0
    %v1014 = vadd.f32 %v628, %v1013
    %1015 = vmatmul.f32.gmra.mxu0 %v649
    %v1016 = vpop.f32.mrf.mxu0
    %v1017 = vadd.f32 %v628, %v1016
    %1018 = vdwg.mxu0
    %v1019 = vmax.f32 %v669, 0.0
    %v1020 = vmax.f32 %v692, 0.0
    %v1021 = vmax.f32 %v715, 0.0
    %v1022 = vmax.f32 %v738, 0.0
    %v1023 = vmax.f32 %v761, 0.0
    %v1024 = vmax.f32 %v784, 0.0
    %v1025 = vmax.f32 %v807, 0.0
    %v1026 = vmax.f32 %v830, 0.0
    %v1027 = vmax.f32 %v853, 0.0
    %v1028 = vmax.f32 %v876, 0.0
    %v1029 = vmax.f32 %v899, 0.0
    %v1030 = vmax.f32 %v922, 0.0
    %v1031 = vmax.f32 %v945, 0.0
    %v1032 = vmax.f32 %v968, 0.0
    %v1033 = vmax.f32 %v991, 0.0
    %v1034 = vmax.f32 %v1014, 0.0
    %v1035 = vmax.f32 %v672, 0.0
    %v1036 = vmax.f32 %v695, 0.0
    %v1037 = vmax.f32 %v718, 0.0
    %v1038 = vmax.f32 %v741, 0.0
    %v1039 = vmax.f32 %v764, 0.0
    %v1040 = vmax.f32 %v787, 0.0
    %v1041 = vmax.f32 %v810, 0.0
    %v1042 = vmax.f32 %v833, 0.0
    %v1043 = vmax.f32 %v856, 0.0
    %v1044 = vmax.f32 %v879, 0.0
    %v1045 = vmax.f32 %v902, 0.0
    %v1046 = vmax.f32 %v925, 0.0
    %v1047 = vmax.f32 %v948, 0.0
    %v1048 = vmax.f32 %v971, 0.0
    %v1049 = vmax.f32 %v994, 0.0
    %v1050 = vmax.f32 %v1017, 0.0
    %v1051 = vld [vmem:[%s17] sm:$0xff]
    %v1052 = vld [vmem:[%s17 + $0x8] sm:$0xff]
    %v1053 = vld [vmem:[%s17 + $0x10] sm:$0xff]
    %v1054 = vld [vmem:[%s17 + $0x18] sm:$0xff]
    %v1055 = vld [vmem:[%s17 + $0x20] sm:$0xff]
    %v1056 = vld [vmem:[%s17 + $0x28] sm:$0xff]
    %v1057 = vld [vmem:[%s17 + $0x30] sm:$0xff]
    %v1058 = vld [vmem:[%s17 + $0x38] sm:$0xff]
    %v1059 = vld [vmem:[%s17 + $0x40] sm:$0xff]
    %v1060 = vld [vmem:[%s17 + $0x48] sm:$0xff]
    %v1061 = vld [vmem:[%s17 + $0x50] sm:$0xff]
    %v1062 = vld [vmem:[%s17 + $0x58] sm:$0xff]
    %v1063 = vld [vmem:[%s17 + $0x60] sm:$0xff]
    %v1064 = vld [vmem:[%s17 + $0x68] sm:$0xff]
    %v1065 = vld [vmem:[%s17 + $0x70] sm:$0xff]
    %v1066 = vld [vmem:[%s17 + $0x78] sm:$0xff]
    %v1067 = vld [vmem:[%s17 + $0x80] sm:$0xff]
    %v1068 = vld [vmem:[%s17 + $0x88] sm:$0xff]
    %v1069 = vld [vmem:[%s17 + $0x90] sm:$0xff]
    %v1070 = vld [vmem:[%s17 + $0x98] sm:$0xff]
    %v1071 = vld [vmem:[%s17 + $0xa0] sm:$0xff]
    %v1072 = vld [vmem:[%s17 + $0xa8] sm:$0xff]
    %v1073 = vld [vmem:[%s17 + $0xb0] sm:$0xff]
    %v1074 = vld [vmem:[%s17 + $0xb8] sm:$0xff]
    %v1075 = vld [vmem:[%s17 + $0xc0] sm:$0xff]
    %v1076 = vld [vmem:[%s17 + $0xc8] sm:$0xff]
    %v1077 = vld [vmem:[%s17 + $0xd0] sm:$0xff]
    %v1078 = vld [vmem:[%s17 + $0xd8] sm:$0xff]
    %v1079 = vld [vmem:[%s17 + $0xe0] sm:$0xff]
    %v1080 = vld [vmem:[%s17 + $0xe8] sm:$0xff]
    %v1081 = vld [vmem:[%s17 + $0xf0] sm:$0xff]
    %v1082 = vld [vmem:[%s17 + $0xf8] sm:$0xff]
    %v1083 = vld [vmem:[%s17 + $0x100] sm:$0xff]
    %v1084 = vld [vmem:[%s17 + $0x108] sm:$0xff]
    %v1085 = vld [vmem:[%s17 + $0x110] sm:$0xff]
    %v1086 = vld [vmem:[%s17 + $0x118] sm:$0xff]
    %v1087 = vld [vmem:[%s17 + $0x120] sm:$0xff]
    %v1088 = vld [vmem:[%s17 + $0x128] sm:$0xff]
    %v1089 = vld [vmem:[%s17 + $0x130] sm:$0xff]
    %v1090 = vld [vmem:[%s17 + $0x138] sm:$0xff]
    %v1091 = vld [vmem:[%s17 + $0x140] sm:$0xff]
    %v1092 = vld [vmem:[%s17 + $0x148] sm:$0xff]
    %v1093 = vld [vmem:[%s17 + $0x150] sm:$0xff]
    %v1094 = vld [vmem:[%s17 + $0x158] sm:$0xff]
    %v1095 = vld [vmem:[%s17 + $0x160] sm:$0xff]
    %v1096 = vld [vmem:[%s17 + $0x168] sm:$0xff]
    %v1097 = vld [vmem:[%s17 + $0x170] sm:$0xff]
    %v1098 = vld [vmem:[%s17 + $0x178] sm:$0xff]
    %v1099 = vld [vmem:[%s17 + $0x180] sm:$0xff]
    %v1100 = vld [vmem:[%s17 + $0x188] sm:$0xff]
    %v1101 = vld [vmem:[%s17 + $0x190] sm:$0xff]
    %v1102 = vld [vmem:[%s17 + $0x198] sm:$0xff]
    %v1103 = vld [vmem:[%s17 + $0x1a0] sm:$0xff]
    %v1104 = vld [vmem:[%s17 + $0x1a8] sm:$0xff]
    %v1105 = vld [vmem:[%s17 + $0x1b0] sm:$0xff]
    %v1106 = vld [vmem:[%s17 + $0x1b8] sm:$0xff]
    %v1107 = vld [vmem:[%s17 + $0x1c0] sm:$0xff]
    %v1108 = vld [vmem:[%s17 + $0x1c8] sm:$0xff]
    %v1109 = vld [vmem:[%s17 + $0x1d0] sm:$0xff]
    %v1110 = vld [vmem:[%s17 + $0x1d8] sm:$0xff]
    %v1111 = vld [vmem:[%s17 + $0x1e0] sm:$0xff]
    %v1112 = vld [vmem:[%s17 + $0x1e8] sm:$0xff]
    %v1113 = vld [vmem:[%s17 + $0x1f0] sm:$0xff]
    %v1114 = vld [vmem:[%s17 + $0x1f8] sm:$0xff]
    %v1115 = vld [vmem:[%s17 + $0x200] sm:$0xff]
    %v1116 = vld [vmem:[%s17 + $0x208] sm:$0xff]
    %v1117 = vld [vmem:[%s17 + $0x210] sm:$0xff]
    %v1118 = vld [vmem:[%s17 + $0x218] sm:$0xff]
    %v1119 = vld [vmem:[%s17 + $0x220] sm:$0xff]
    %v1120 = vld [vmem:[%s17 + $0x228] sm:$0xff]
    %v1121 = vld [vmem:[%s17 + $0x230] sm:$0xff]
    %v1122 = vld [vmem:[%s17 + $0x238] sm:$0xff]
    %v1123 = vld [vmem:[%s17 + $0x240] sm:$0xff]
    %v1124 = vld [vmem:[%s17 + $0x248] sm:$0xff]
    %v1125 = vld [vmem:[%s17 + $0x250] sm:$0xff]
    %v1126 = vld [vmem:[%s17 + $0x258] sm:$0xff]
    %v1127 = vld [vmem:[%s17 + $0x260] sm:$0xff]
    %v1128 = vld [vmem:[%s17 + $0x268] sm:$0xff]
    %v1129 = vld [vmem:[%s17 + $0x270] sm:$0xff]
    %v1130 = vld [vmem:[%s17 + $0x278] sm:$0xff]
    %v1131 = vld [vmem:[%s17 + $0x280] sm:$0xff]
    %v1132 = vld [vmem:[%s17 + $0x288] sm:$0xff]
    %v1133 = vld [vmem:[%s17 + $0x290] sm:$0xff]
    %v1134 = vld [vmem:[%s17 + $0x298] sm:$0xff]
    %v1135 = vld [vmem:[%s17 + $0x2a0] sm:$0xff]
    %v1136 = vld [vmem:[%s17 + $0x2a8] sm:$0xff]
    %v1137 = vld [vmem:[%s17 + $0x2b0] sm:$0xff]
    %v1138 = vld [vmem:[%s17 + $0x2b8] sm:$0xff]
    %v1139 = vld [vmem:[%s17 + $0x2c0] sm:$0xff]
    %v1140 = vld [vmem:[%s17 + $0x2c8] sm:$0xff]
    %v1141 = vld [vmem:[%s17 + $0x2d0] sm:$0xff]
    %v1142 = vld [vmem:[%s17 + $0x2d8] sm:$0xff]
    %v1143 = vld [vmem:[%s17 + $0x2e0] sm:$0xff]
    %v1144 = vld [vmem:[%s17 + $0x2e8] sm:$0xff]
    %v1145 = vld [vmem:[%s17 + $0x2f0] sm:$0xff]
    %v1146 = vld [vmem:[%s17 + $0x2f8] sm:$0xff]
    %v1147 = vld [vmem:[%s17 + $0x300] sm:$0xff]
    %v1148 = vld [vmem:[%s17 + $0x308] sm:$0xff]
    %v1149 = vld [vmem:[%s17 + $0x310] sm:$0xff]
    %v1150 = vld [vmem:[%s17 + $0x318] sm:$0xff]
    %v1151 = vld [vmem:[%s17 + $0x320] sm:$0xff]
    %v1152 = vld [vmem:[%s17 + $0x328] sm:$0xff]
    %v1153 = vld [vmem:[%s17 + $0x330] sm:$0xff]
    %v1154 = vld [vmem:[%s17 + $0x338] sm:$0xff]
    %v1155 = vld [vmem:[%s17 + $0x340] sm:$0xff]
    %v1156 = vld [vmem:[%s17 + $0x348] sm:$0xff]
    %v1157 = vld [vmem:[%s17 + $0x350] sm:$0xff]
    %v1158 = vld [vmem:[%s17 + $0x358] sm:$0xff]
    %v1159 = vld [vmem:[%s17 + $0x360] sm:$0xff]
    %v1160 = vld [vmem:[%s17 + $0x368] sm:$0xff]
    %v1161 = vld [vmem:[%s17 + $0x370] sm:$0xff]
    %v1162 = vld [vmem:[%s17 + $0x378] sm:$0xff]
    %v1163 = vld [vmem:[%s17 + $0x380] sm:$0xff]
    %v1164 = vld [vmem:[%s17 + $0x388] sm:$0xff]
    %v1165 = vld [vmem:[%s17 + $0x390] sm:$0xff]
    %v1166 = vld [vmem:[%s17 + $0x398] sm:$0xff]
    %v1167 = vld [vmem:[%s17 + $0x3a0] sm:$0xff]
    %v1168 = vld [vmem:[%s17 + $0x3a8] sm:$0xff]
    %v1169 = vld [vmem:[%s17 + $0x3b0] sm:$0xff]
    %v1170 = vld [vmem:[%s17 + $0x3b8] sm:$0xff]
    %v1171 = vld [vmem:[%s17 + $0x3c0] sm:$0xff]
    %v1172 = vld [vmem:[%s17 + $0x3c8] sm:$0xff]
    %v1173 = vld [vmem:[%s17 + $0x3d0] sm:$0xff]
    %v1174 = vld [vmem:[%s17 + $0x3d8] sm:$0xff]
    %v1175 = vld [vmem:[%s17 + $0x3e0] sm:$0xff]
    %v1176 = vld [vmem:[%s17 + $0x3e8] sm:$0xff]
    %v1177 = vld [vmem:[%s17 + $0x3f0] sm:$0xff]
    %v1178 = vld [vmem:[%s17 + $0x3f8] sm:$0xff]
    %v1179 = vld [vmem:[%s17 + $0x400] sm:$0xff]
    %v1180 = vld [vmem:[%s17 + $0x408] sm:$0xff]
    %v1181 = vld [vmem:[%s17 + $0x410] sm:$0xff]
    %v1182 = vld [vmem:[%s17 + $0x418] sm:$0xff]
    %v1183 = vld [vmem:[%s17 + $0x420] sm:$0xff]
    %v1184 = vld [vmem:[%s17 + $0x428] sm:$0xff]
    %v1185 = vld [vmem:[%s17 + $0x430] sm:$0xff]
    %v1186 = vld [vmem:[%s17 + $0x438] sm:$0xff]
    %v1187 = vld [vmem:[%s17 + $0x440] sm:$0xff]
    %v1188 = vld [vmem:[%s17 + $0x448] sm:$0xff]
    %v1189 = vld [vmem:[%s17 + $0x450] sm:$0xff]
    %v1190 = vld [vmem:[%s17 + $0x458] sm:$0xff]
    %v1191 = vld [vmem:[%s17 + $0x460] sm:$0xff]
    %v1192 = vld [vmem:[%s17 + $0x468] sm:$0xff]
    %v1193 = vld [vmem:[%s17 + $0x470] sm:$0xff]
    %v1194 = vld [vmem:[%s17 + $0x478] sm:$0xff]
    %v1195 = vld [vmem:[%s17 + $0x480] sm:$0xff]
    %v1196 = vld [vmem:[%s17 + $0x488] sm:$0xff]
    %v1197 = vld [vmem:[%s17 + $0x490] sm:$0xff]
    %v1198 = vld [vmem:[%s17 + $0x498] sm:$0xff]
    %v1199 = vld [vmem:[%s17 + $0x4a0] sm:$0xff]
    %v1200 = vld [vmem:[%s17 + $0x4a8] sm:$0xff]
    %v1201 = vld [vmem:[%s17 + $0x4b0] sm:$0xff]
    %v1202 = vld [vmem:[%s17 + $0x4b8] sm:$0xff]
    %v1203 = vld [vmem:[%s17 + $0x4c0] sm:$0xff]
    %v1204 = vld [vmem:[%s17 + $0x4c8] sm:$0xff]
    %v1205 = vld [vmem:[%s17 + $0x4d0] sm:$0xff]
    %v1206 = vld [vmem:[%s17 + $0x4d8] sm:$0xff]
    %v1207 = vld [vmem:[%s17 + $0x4e0] sm:$0xff]
    %v1208 = vld [vmem:[%s17 + $0x4e8] sm:$0xff]
    %v1209 = vld [vmem:[%s17 + $0x4f0] sm:$0xff]
    %v1210 = vld [vmem:[%s17 + $0x4f8] sm:$0xff]
    %v1211 = vld [vmem:[%s17 + $0x500] sm:$0xff]
    %v1212 = vld [vmem:[%s17 + $0x508] sm:$0xff]
    %v1213 = vld [vmem:[%s17 + $0x510] sm:$0xff]
    %v1214 = vld [vmem:[%s17 + $0x518] sm:$0xff]
    %v1215 = vld [vmem:[%s17 + $0x520] sm:$0xff]
    %v1216 = vld [vmem:[%s17 + $0x528] sm:$0xff]
    %v1217 = vld [vmem:[%s17 + $0x530] sm:$0xff]
    %v1218 = vld [vmem:[%s17 + $0x538] sm:$0xff]
    %v1219 = vld [vmem:[%s17 + $0x540] sm:$0xff]
    %v1220 = vld [vmem:[%s17 + $0x548] sm:$0xff]
    %v1221 = vld [vmem:[%s17 + $0x550] sm:$0xff]
    %v1222 = vld [vmem:[%s17 + $0x558] sm:$0xff]
    %v1223 = vld [vmem:[%s17 + $0x560] sm:$0xff]
    %v1224 = vld [vmem:[%s17 + $0x568] sm:$0xff]
    %v1225 = vld [vmem:[%s17 + $0x570] sm:$0xff]
    %v1226 = vld [vmem:[%s17 + $0x578] sm:$0xff]
    %v1227 = vld [vmem:[%s17 + $0x580] sm:$0xff]
    %v1228 = vld [vmem:[%s17 + $0x588] sm:$0xff]
    %v1229 = vld [vmem:[%s17 + $0x590] sm:$0xff]
    %v1230 = vld [vmem:[%s17 + $0x598] sm:$0xff]
    %v1231 = vld [vmem:[%s17 + $0x5a0] sm:$0xff]
    %v1232 = vld [vmem:[%s17 + $0x5a8] sm:$0xff]
    %v1233 = vld [vmem:[%s17 + $0x5b0] sm:$0xff]
    %v1234 = vld [vmem:[%s17 + $0x5b8] sm:$0xff]
    %v1235 = vld [vmem:[%s17 + $0x5c0] sm:$0xff]
    %v1236 = vld [vmem:[%s17 + $0x5c8] sm:$0xff]
    %v1237 = vld [vmem:[%s17 + $0x5d0] sm:$0xff]
    %v1238 = vld [vmem:[%s17 + $0x5d8] sm:$0xff]
    %v1239 = vld [vmem:[%s17 + $0x5e0] sm:$0xff]
    %v1240 = vld [vmem:[%s17 + $0x5e8] sm:$0xff]
    %v1241 = vld [vmem:[%s17 + $0x5f0] sm:$0xff]
    %v1242 = vld [vmem:[%s17 + $0x5f8] sm:$0xff]
    %v1243 = vld [vmem:[%s17 + $0x600] sm:$0xff]
    %v1244 = vld [vmem:[%s17 + $0x608] sm:$0xff]
    %v1245 = vld [vmem:[%s17 + $0x610] sm:$0xff]
    %v1246 = vld [vmem:[%s17 + $0x618] sm:$0xff]
    %v1247 = vld [vmem:[%s17 + $0x620] sm:$0xff]
    %v1248 = vld [vmem:[%s17 + $0x628] sm:$0xff]
    %v1249 = vld [vmem:[%s17 + $0x630] sm:$0xff]
    %v1250 = vld [vmem:[%s17 + $0x638] sm:$0xff]
    %v1251 = vld [vmem:[%s17 + $0x640] sm:$0xff]
    %v1252 = vld [vmem:[%s17 + $0x648] sm:$0xff]
    %v1253 = vld [vmem:[%s17 + $0x650] sm:$0xff]
    %v1254 = vld [vmem:[%s17 + $0x658] sm:$0xff]
    %v1255 = vld [vmem:[%s17 + $0x660] sm:$0xff]
    %v1256 = vld [vmem:[%s17 + $0x668] sm:$0xff]
    %v1257 = vld [vmem:[%s17 + $0x670] sm:$0xff]
    %v1258 = vld [vmem:[%s17 + $0x678] sm:$0xff]
    %v1259 = vld [vmem:[%s17 + $0x680] sm:$0xff]
    %v1260 = vld [vmem:[%s17 + $0x688] sm:$0xff]
    %v1261 = vld [vmem:[%s17 + $0x690] sm:$0xff]
    %v1262 = vld [vmem:[%s17 + $0x698] sm:$0xff]
    %v1263 = vld [vmem:[%s17 + $0x6a0] sm:$0xff]
    %v1264 = vld [vmem:[%s17 + $0x6a8] sm:$0xff]
    %v1265 = vld [vmem:[%s17 + $0x6b0] sm:$0xff]
    %v1266 = vld [vmem:[%s17 + $0x6b8] sm:$0xff]
    %v1267 = vld [vmem:[%s17 + $0x6c0] sm:$0xff]
    %v1268 = vld [vmem:[%s17 + $0x6c8] sm:$0xff]
    %v1269 = vld [vmem:[%s17 + $0x6d0] sm:$0xff]
    %v1270 = vld [vmem:[%s17 + $0x6d8] sm:$0xff]
    %v1271 = vld [vmem:[%s17 + $0x6e0] sm:$0xff]
    %v1272 = vld [vmem:[%s17 + $0x6e8] sm:$0xff]
    %v1273 = vld [vmem:[%s17 + $0x6f0] sm:$0xff]
    %v1274 = vld [vmem:[%s17 + $0x6f8] sm:$0xff]
    %v1275 = vld [vmem:[%s17 + $0x700] sm:$0xff]
    %v1276 = vld [vmem:[%s17 + $0x708] sm:$0xff]
    %v1277 = vld [vmem:[%s17 + $0x710] sm:$0xff]
    %v1278 = vld [vmem:[%s17 + $0x718] sm:$0xff]
    %v1279 = vld [vmem:[%s17 + $0x720] sm:$0xff]
    %v1280 = vld [vmem:[%s17 + $0x728] sm:$0xff]
    %v1281 = vld [vmem:[%s17 + $0x730] sm:$0xff]
    %v1282 = vld [vmem:[%s17 + $0x738] sm:$0xff]
    %v1283 = vld [vmem:[%s17 + $0x740] sm:$0xff]
    %v1284 = vld [vmem:[%s17 + $0x748] sm:$0xff]
    %v1285 = vld [vmem:[%s17 + $0x750] sm:$0xff]
    %v1286 = vld [vmem:[%s17 + $0x758] sm:$0xff]
    %v1287 = vld [vmem:[%s17 + $0x760] sm:$0xff]
    %v1288 = vld [vmem:[%s17 + $0x768] sm:$0xff]
    %v1289 = vld [vmem:[%s17 + $0x770] sm:$0xff]
    %v1290 = vld [vmem:[%s17 + $0x778] sm:$0xff]
    %v1291 = vld [vmem:[%s17 + $0x780] sm:$0xff]
    %v1292 = vld [vmem:[%s17 + $0x788] sm:$0xff]
    %v1293 = vld [vmem:[%s17 + $0x790] sm:$0xff]
    %v1294 = vld [vmem:[%s17 + $0x798] sm:$0xff]
    %v1295 = vld [vmem:[%s17 + $0x7a0] sm:$0xff]
    %v1296 = vld [vmem:[%s17 + $0x7a8] sm:$0xff]
    %v1297 = vld [vmem:[%s17 + $0x7b0] sm:$0xff]
    %v1298 = vld [vmem:[%s17 + $0x7b8] sm:$0xff]
    %v1299 = vld [vmem:[%s17 + $0x7c0] sm:$0xff]
    %v1300 = vld [vmem:[%s17 + $0x7c8] sm:$0xff]
    %v1301 = vld [vmem:[%s17 + $0x7d0] sm:$0xff]
    %v1302 = vld [vmem:[%s17 + $0x7d8] sm:$0xff]
    %v1303 = vld [vmem:[%s17 + $0x7e0] sm:$0xff]
    %v1304 = vld [vmem:[%s17 + $0x7e8] sm:$0xff]
    %v1305 = vld [vmem:[%s17 + $0x7f0] sm:$0xff]
    %v1306 = vld [vmem:[%s17 + $0x7f8] sm:$0xff]
    %v1307 = vld [vmem:[%s19] sm:$0x1]
    %v1309 = vperm.slane %v1307, 0
    %1311 = vmatpush.msra.mxu0 %v1066
    %1312 = vmatpush.msra.mxu0 %v1065
    %1313 = vmatpush.msra.mxu0 %v1064
    %1314 = vmatpush.msra.mxu0 %v1063
    %1315 = vmatpush.msra.mxu0 %v1062
    %1316 = vmatpush.msra.mxu0 %v1061
    %1317 = vmatpush.msra.mxu0 %v1060
    %1318 = vmatpush.msra.mxu0 %v1059
    %1319 = vmatpush.msra.mxu0 %v1058
    %1320 = vmatpush.msra.mxu0 %v1057
    %1321 = vmatpush.msra.mxu0 %v1056
    %1322 = vmatpush.msra.mxu0 %v1055
    %1323 = vmatpush.msra.mxu0 %v1054
    %1324 = vmatpush.msra.mxu0 %v1053
    %1325 = vmatpush.msra.mxu0 %v1052
    %1326 = vmatpush.msra.mxu0 %v1051
    %1327 = vmatmul.f32.gmra.mxu0 %v1019
    %v1328 = vpop.f32.mrf.mxu0
    %v1329 = vadd.f32 %v1309, %v1328
    %1330 = vmatmul.f32.gmra.mxu0 %v1035
    %v1331 = vpop.f32.mrf.mxu0
    %v1332 = vadd.f32 %v1309, %v1331
    %1333 = vdwg.mxu0
    %1334 = vmatpush.msra.mxu0 %v1082
    %1335 = vmatpush.msra.mxu0 %v1081
    %1336 = vmatpush.msra.mxu0 %v1080
    %1337 = vmatpush.msra.mxu0 %v1079
    %1338 = vmatpush.msra.mxu0 %v1078
    %1339 = vmatpush.msra.mxu0 %v1077
    %1340 = vmatpush.msra.mxu0 %v1076
    %1341 = vmatpush.msra.mxu0 %v1075
    %1342 = vmatpush.msra.mxu0 %v1074
    %1343 = vmatpush.msra.mxu0 %v1073
    %1344 = vmatpush.msra.mxu0 %v1072
    %1345 = vmatpush.msra.mxu0 %v1071
    %1346 = vmatpush.msra.mxu0 %v1070
    %1347 = vmatpush.msra.mxu0 %v1069
    %1348 = vmatpush.msra.mxu0 %v1068
    %1349 = vmatpush.msra.mxu0 %v1067
    %1350 = vmatmul.f32.gmra.mxu0 %v1020
    %v1351 = vpop.f32.mrf.mxu0
    %v1352 = vadd.f32 %v1329, %v1351
    %1353 = vmatmul.f32.gmra.mxu0 %v1036
    %v1354 = vpop.f32.mrf.mxu0
    %v1355 = vadd.f32 %v1332, %v1354
    %1356 = vdwg.mxu0
    %1357 = vmatpush.msra.mxu0 %v1098
    %1358 = vmatpush.msra.mxu0 %v1097
    %1359 = vmatpush.msra.mxu0 %v1096
    %1360 = vmatpush.msra.mxu0 %v1095
    %1361 = vmatpush.msra.mxu0 %v1094
    %1362 = vmatpush.msra.mxu0 %v1093
    %1363 = vmatpush.msra.mxu0 %v1092
    %1364 = vmatpush.msra.mxu0 %v1091
    %1365 = vmatpush.msra.mxu0 %v1090
    %1366 = vmatpush.msra.mxu0 %v1089
    %1367 = vmatpush.msra.mxu0 %v1088
    %1368 = vmatpush.msra.mxu0 %v1087
    %1369 = vmatpush.msra.mxu0 %v1086
    %1370 = vmatpush.msra.mxu0 %v1085
    %1371 = vmatpush.msra.mxu0 %v1084
    %1372 = vmatpush.msra.mxu0 %v1083
    %1373 = vmatmul.f32.gmra.mxu0 %v1021
    %v1374 = vpop.f32.mrf.mxu0
    %v1375 = vadd.f32 %v1352, %v1374
    %1376 = vmatmul.f32.gmra.mxu0 %v1037
    %v1377 = vpop.f32.mrf.mxu0
    %v1378 = vadd.f32 %v1355, %v1377
    %1379 = vdwg.mxu0
    %1380 = vmatpush.msra.mxu0 %v1114
    %1381 = vmatpush.msra.mxu0 %v1113
    %1382 = vmatpush.msra.mxu0 %v1112
    %1383 = vmatpush.msra.mxu0 %v1111
    %1384 = vmatpush.msra.mxu0 %v1110
    %1385 = vmatpush.msra.mxu0 %v1109
    %1386 = vmatpush.msra.mxu0 %v1108
    %1387 = vmatpush.msra.mxu0 %v1107
    %1388 = vmatpush.msra.mxu0 %v1106
    %1389 = vmatpush.msra.mxu0 %v1105
    %1390 = vmatpush.msra.mxu0 %v1104
    %1391 = vmatpush.msra.mxu0 %v1103
    %1392 = vmatpush.msra.mxu0 %v1102
    %1393 = vmatpush.msra.mxu0 %v1101
    %1394 = vmatpush.msra.mxu0 %v1100
    %1395 = vmatpush.msra.mxu0 %v1099
    %1396 = vmatmul.f32.gmra.mxu0 %v1022
    %v1397 = vpop.f32.mrf.mxu0
    %v1398 = vadd.f32 %v1375, %v1397
    %1399 = vmatmul.f32.gmra.mxu0 %v1038
    %v1400 = vpop.f32.mrf.mxu0
    %v1401 = vadd.f32 %v1378, %v1400
    %1402 = vdwg.mxu0
    %1403 = vmatpush.msra.mxu0 %v1130
    %1404 = vmatpush.msra.mxu0 %v1129
    %1405 = vmatpush.msra.mxu0 %v1128
    %1406 = vmatpush.msra.mxu0 %v1127
    %1407 = vmatpush.msra.mxu0 %v1126
    %1408 = vmatpush.msra.mxu0 %v1125
    %1409 = vmatpush.msra.mxu0 %v1124
    %1410 = vmatpush.msra.mxu0 %v1123
    %1411 = vmatpush.msra.mxu0 %v1122
    %1412 = vmatpush.msra.mxu0 %v1121
    %1413 = vmatpush.msra.mxu0 %v1120
    %1414 = vmatpush.msra.mxu0 %v1119
    %1415 = vmatpush.msra.mxu0 %v1118
    %1416 = vmatpush.msra.mxu0 %v1117
    %1417 = vmatpush.msra.mxu0 %v1116
    %1418 = vmatpush.msra.mxu0 %v1115
    %1419 = vmatmul.f32.gmra.mxu0 %v1023
    %v1420 = vpop.f32.mrf.mxu0
    %v1421 = vadd.f32 %v1398, %v1420
    %1422 = vmatmul.f32.gmra.mxu0 %v1039
    %v1423 = vpop.f32.mrf.mxu0
    %v1424 = vadd.f32 %v1401, %v1423
    %1425 = vdwg.mxu0
    %1426 = vmatpush.msra.mxu0 %v1146
    %1427 = vmatpush.msra.mxu0 %v1145
    %1428 = vmatpush.msra.mxu0 %v1144
    %1429 = vmatpush.msra.mxu0 %v1143
    %1430 = vmatpush.msra.mxu0 %v1142
    %1431 = vmatpush.msra.mxu0 %v1141
    %1432 = vmatpush.msra.mxu0 %v1140
    %1433 = vmatpush.msra.mxu0 %v1139
    %1434 = vmatpush.msra.mxu0 %v1138
    %1435 = vmatpush.msra.mxu0 %v1137
    %1436 = vmatpush.msra.mxu0 %v1136
    %1437 = vmatpush.msra.mxu0 %v1135
    %1438 = vmatpush.msra.mxu0 %v1134
    %1439 = vmatpush.msra.mxu0 %v1133
    %1440 = vmatpush.msra.mxu0 %v1132
    %1441 = vmatpush.msra.mxu0 %v1131
    %1442 = vmatmul.f32.gmra.mxu0 %v1024
    %v1443 = vpop.f32.mrf.mxu0
    %v1444 = vadd.f32 %v1421, %v1443
    %1445 = vmatmul.f32.gmra.mxu0 %v1040
    %v1446 = vpop.f32.mrf.mxu0
    %v1447 = vadd.f32 %v1424, %v1446
    %1448 = vdwg.mxu0
    %1449 = vmatpush.msra.mxu0 %v1162
    %1450 = vmatpush.msra.mxu0 %v1161
    %1451 = vmatpush.msra.mxu0 %v1160
    %1452 = vmatpush.msra.mxu0 %v1159
    %1453 = vmatpush.msra.mxu0 %v1158
    %1454 = vmatpush.msra.mxu0 %v1157
    %1455 = vmatpush.msra.mxu0 %v1156
    %1456 = vmatpush.msra.mxu0 %v1155
    %1457 = vmatpush.msra.mxu0 %v1154
    %1458 = vmatpush.msra.mxu0 %v1153
    %1459 = vmatpush.msra.mxu0 %v1152
    %1460 = vmatpush.msra.mxu0 %v1151
    %1461 = vmatpush.msra.mxu0 %v1150
    %1462 = vmatpush.msra.mxu0 %v1149
    %1463 = vmatpush.msra.mxu0 %v1148
    %1464 = vmatpush.msra.mxu0 %v1147
    %1465 = vmatmul.f32.gmra.mxu0 %v1025
    %v1466 = vpop.f32.mrf.mxu0
    %v1467 = vadd.f32 %v1444, %v1466
    %1468 = vmatmul.f32.gmra.mxu0 %v1041
    %v1469 = vpop.f32.mrf.mxu0
    %v1470 = vadd.f32 %v1447, %v1469
    %1471 = vdwg.mxu0
    %1472 = vmatpush.msra.mxu0 %v1178
    %1473 = vmatpush.msra.mxu0 %v1177
    %1474 = vmatpush.msra.mxu0 %v1176
    %1475 = vmatpush.msra.mxu0 %v1175
    %1476 = vmatpush.msra.mxu0 %v1174
    %1477 = vmatpush.msra.mxu0 %v1173
    %1478 = vmatpush.msra.mxu0 %v1172
    %1479 = vmatpush.msra.mxu0 %v1171
    %1480 = vmatpush.msra.mxu0 %v1170
    %1481 = vmatpush.msra.mxu0 %v1169
    %1482 = vmatpush.msra.mxu0 %v1168
    %1483 = vmatpush.msra.mxu0 %v1167
    %1484 = vmatpush.msra.mxu0 %v1166
    %1485 = vmatpush.msra.mxu0 %v1165
    %1486 = vmatpush.msra.mxu0 %v1164
    %1487 = vmatpush.msra.mxu0 %v1163
    %1488 = vmatmul.f32.gmra.mxu0 %v1026
    %v1489 = vpop.f32.mrf.mxu0
    %v1490 = vadd.f32 %v1467, %v1489
    %1491 = vmatmul.f32.gmra.mxu0 %v1042
    %v1492 = vpop.f32.mrf.mxu0
    %v1493 = vadd.f32 %v1470, %v1492
    %1494 = vdwg.mxu0
    %1495 = vmatpush.msra.mxu0 %v1194
    %1496 = vmatpush.msra.mxu0 %v1193
    %1497 = vmatpush.msra.mxu0 %v1192
    %1498 = vmatpush.msra.mxu0 %v1191
    %1499 = vmatpush.msra.mxu0 %v1190
    %1500 = vmatpush.msra.mxu0 %v1189
    %1501 = vmatpush.msra.mxu0 %v1188
    %1502 = vmatpush.msra.mxu0 %v1187
    %1503 = vmatpush.msra.mxu0 %v1186
    %1504 = vmatpush.msra.mxu0 %v1185
    %1505 = vmatpush.msra.mxu0 %v1184
    %1506 = vmatpush.msra.mxu0 %v1183
    %1507 = vmatpush.msra.mxu0 %v1182
    %1508 = vmatpush.msra.mxu0 %v1181
    %1509 = vmatpush.msra.mxu0 %v1180
    %1510 = vmatpush.msra.mxu0 %v1179
    %1511 = vmatmul.f32.gmra.mxu0 %v1027
    %v1512 = vpop.f32.mrf.mxu0
    %v1513 = vadd.f32 %v1490, %v1512
    %1514 = vmatmul.f32.gmra.mxu0 %v1043
    %v1515 = vpop.f32.mrf.mxu0
    %v1516 = vadd.f32 %v1493, %v1515
    %1517 = vdwg.mxu0
    %1518 = vmatpush.msra.mxu0 %v1210
    %1519 = vmatpush.msra.mxu0 %v1209
    %1520 = vmatpush.msra.mxu0 %v1208
    %1521 = vmatpush.msra.mxu0 %v1207
    %1522 = vmatpush.msra.mxu0 %v1206
    %1523 = vmatpush.msra.mxu0 %v1205
    %1524 = vmatpush.msra.mxu0 %v1204
    %1525 = vmatpush.msra.mxu0 %v1203
    %1526 = vmatpush.msra.mxu0 %v1202
    %1527 = vmatpush.msra.mxu0 %v1201
    %1528 = vmatpush.msra.mxu0 %v1200
    %1529 = vmatpush.msra.mxu0 %v1199
    %1530 = vmatpush.msra.mxu0 %v1198
    %1531 = vmatpush.msra.mxu0 %v1197
    %1532 = vmatpush.msra.mxu0 %v1196
    %1533 = vmatpush.msra.mxu0 %v1195
    %1534 = vmatmul.f32.gmra.mxu0 %v1028
    %v1535 = vpop.f32.mrf.mxu0
    %v1536 = vadd.f32 %v1513, %v1535
    %1537 = vmatmul.f32.gmra.mxu0 %v1044
    %v1538 = vpop.f32.mrf.mxu0
    %v1539 = vadd.f32 %v1516, %v1538
    %1540 = vdwg.mxu0
    %1541 = vmatpush.msra.mxu0 %v1226
    %1542 = vmatpush.msra.mxu0 %v1225
    %1543 = vmatpush.msra.mxu0 %v1224
    %1544 = vmatpush.msra.mxu0 %v1223
    %1545 = vmatpush.msra.mxu0 %v1222
    %1546 = vmatpush.msra.mxu0 %v1221
    %1547 = vmatpush.msra.mxu0 %v1220
    %1548 = vmatpush.msra.mxu0 %v1219
    %1549 = vmatpush.msra.mxu0 %v1218
    %1550 = vmatpush.msra.mxu0 %v1217
    %1551 = vmatpush.msra.mxu0 %v1216
    %1552 = vmatpush.msra.mxu0 %v1215
    %1553 = vmatpush.msra.mxu0 %v1214
    %1554 = vmatpush.msra.mxu0 %v1213
    %1555 = vmatpush.msra.mxu0 %v1212
    %1556 = vmatpush.msra.mxu0 %v1211
    %1557 = vmatmul.f32.gmra.mxu0 %v1029
    %v1558 = vpop.f32.mrf.mxu0
    %v1559 = vadd.f32 %v1536, %v1558
    %1560 = vmatmul.f32.gmra.mxu0 %v1045
    %v1561 = vpop.f32.mrf.mxu0
    %v1562 = vadd.f32 %v1539, %v1561
    %1563 = vdwg.mxu0
    %1564 = vmatpush.msra.mxu0 %v1242
    %1565 = vmatpush.msra.mxu0 %v1241
    %1566 = vmatpush.msra.mxu0 %v1240
    %1567 = vmatpush.msra.mxu0 %v1239
    %1568 = vmatpush.msra.mxu0 %v1238
    %1569 = vmatpush.msra.mxu0 %v1237
    %1570 = vmatpush.msra.mxu0 %v1236
    %1571 = vmatpush.msra.mxu0 %v1235
    %1572 = vmatpush.msra.mxu0 %v1234
    %1573 = vmatpush.msra.mxu0 %v1233
    %1574 = vmatpush.msra.mxu0 %v1232
    %1575 = vmatpush.msra.mxu0 %v1231
    %1576 = vmatpush.msra.mxu0 %v1230
    %1577 = vmatpush.msra.mxu0 %v1229
    %1578 = vmatpush.msra.mxu0 %v1228
    %1579 = vmatpush.msra.mxu0 %v1227
    %1580 = vmatmul.f32.gmra.mxu0 %v1030
    %v1581 = vpop.f32.mrf.mxu0
    %v1582 = vadd.f32 %v1559, %v1581
    %1583 = vmatmul.f32.gmra.mxu0 %v1046
    %v1584 = vpop.f32.mrf.mxu0
    %v1585 = vadd.f32 %v1562, %v1584
    %1586 = vdwg.mxu0
    %1587 = vmatpush.msra.mxu0 %v1258
    %1588 = vmatpush.msra.mxu0 %v1257
    %1589 = vmatpush.msra.mxu0 %v1256
    %1590 = vmatpush.msra.mxu0 %v1255
    %1591 = vmatpush.msra.mxu0 %v1254
    %1592 = vmatpush.msra.mxu0 %v1253
    %1593 = vmatpush.msra.mxu0 %v1252
    %1594 = vmatpush.msra.mxu0 %v1251
    %1595 = vmatpush.msra.mxu0 %v1250
    %1596 = vmatpush.msra.mxu0 %v1249
    %1597 = vmatpush.msra.mxu0 %v1248
    %1598 = vmatpush.msra.mxu0 %v1247
    %1599 = vmatpush.msra.mxu0 %v1246
    %1600 = vmatpush.msra.mxu0 %v1245
    %1601 = vmatpush.msra.mxu0 %v1244
    %1602 = vmatpush.msra.mxu0 %v1243
    %1603 = vmatmul.f32.gmra.mxu0 %v1031
    %v1604 = vpop.f32.mrf.mxu0
    %v1605 = vadd.f32 %v1582, %v1604
    %1606 = vmatmul.f32.gmra.mxu0 %v1047
    %v1607 = vpop.f32.mrf.mxu0
    %v1608 = vadd.f32 %v1585, %v1607
    %1609 = vdwg.mxu0
    %1610 = vmatpush.msra.mxu0 %v1274
    %1611 = vmatpush.msra.mxu0 %v1273
    %1612 = vmatpush.msra.mxu0 %v1272
    %1613 = vmatpush.msra.mxu0 %v1271
    %1614 = vmatpush.msra.mxu0 %v1270
    %1615 = vmatpush.msra.mxu0 %v1269
    %1616 = vmatpush.msra.mxu0 %v1268
    %1617 = vmatpush.msra.mxu0 %v1267
    %1618 = vmatpush.msra.mxu0 %v1266
    %1619 = vmatpush.msra.mxu0 %v1265
    %1620 = vmatpush.msra.mxu0 %v1264
    %1621 = vmatpush.msra.mxu0 %v1263
    %1622 = vmatpush.msra.mxu0 %v1262
    %1623 = vmatpush.msra.mxu0 %v1261
    %1624 = vmatpush.msra.mxu0 %v1260
    %1625 = vmatpush.msra.mxu0 %v1259
    %1626 = vmatmul.f32.gmra.mxu0 %v1032
    %v1627 = vpop.f32.mrf.mxu0
    %v1628 = vadd.f32 %v1605, %v1627
    %1629 = vmatmul.f32.gmra.mxu0 %v1048
    %v1630 = vpop.f32.mrf.mxu0
    %v1631 = vadd.f32 %v1608, %v1630
    %1632 = vdwg.mxu0
    %1633 = vmatpush.msra.mxu0 %v1290
    %1634 = vmatpush.msra.mxu0 %v1289
    %1635 = vmatpush.msra.mxu0 %v1288
    %1636 = vmatpush.msra.mxu0 %v1287
    %1637 = vmatpush.msra.mxu0 %v1286
    %1638 = vmatpush.msra.mxu0 %v1285
    %1639 = vmatpush.msra.mxu0 %v1284
    %1640 = vmatpush.msra.mxu0 %v1283
    %1641 = vmatpush.msra.mxu0 %v1282
    %1642 = vmatpush.msra.mxu0 %v1281
    %1643 = vmatpush.msra.mxu0 %v1280
    %1644 = vmatpush.msra.mxu0 %v1279
    %1645 = vmatpush.msra.mxu0 %v1278
    %1646 = vmatpush.msra.mxu0 %v1277
    %1647 = vmatpush.msra.mxu0 %v1276
    %1648 = vmatpush.msra.mxu0 %v1275
    %1649 = vmatmul.f32.gmra.mxu0 %v1033
    %v1650 = vpop.f32.mrf.mxu0
    %v1651 = vadd.f32 %v1628, %v1650
    %1652 = vmatmul.f32.gmra.mxu0 %v1049
    %v1653 = vpop.f32.mrf.mxu0
    %v1654 = vadd.f32 %v1631, %v1653
    %1655 = vdwg.mxu0
    %1656 = vmatpush.msra.mxu0 %v1306
    %1657 = vmatpush.msra.mxu0 %v1305
    %1658 = vmatpush.msra.mxu0 %v1304
    %1659 = vmatpush.msra.mxu0 %v1303
    %1660 = vmatpush.msra.mxu0 %v1302
    %1661 = vmatpush.msra.mxu0 %v1301
    %1662 = vmatpush.msra.mxu0 %v1300
    %1663 = vmatpush.msra.mxu0 %v1299
    %1664 = vmatpush.msra.mxu0 %v1298
    %1665 = vmatpush.msra.mxu0 %v1297
    %1666 = vmatpush.msra.mxu0 %v1296
    %1667 = vmatpush.msra.mxu0 %v1295
    %1668 = vmatpush.msra.mxu0 %v1294
    %1669 = vmatpush.msra.mxu0 %v1293
    %1670 = vmatpush.msra.mxu0 %v1292
    %1671 = vmatpush.msra.mxu0 %v1291
    %1672 = vmatmul.f32.gmra.mxu0 %v1034
    %v1673 = vpop.f32.mrf.mxu0
    %v1674 = vadd.f32 %v1651, %v1673
    %1675 = vmatmul.f32.gmra.mxu0 %v1050
    %v1676 = vpop.f32.mrf.mxu0
    %v1677 = vadd.f32 %v1654, %v1676
    %1678 = vdwg.mxu0
    %v1679 = vadd.f32 %v575, %v1674
    %v1680 = vadd.f32 %v576, %v1677
    %v1681 = vsel %vm208, %v1679, 0.0
    %1682 = vadd.xlane.f32.xlu0 %v1681
    %v1683 = vpop.xlane.xlu0 %1682
    %v1684 = vsel %vm208, %v1680, 0.0
    %1685 = vadd.xlane.f32.xlu0 %v1684
    %v1686 = vpop.xlane.xlu0 %1685
    %v1687 = vmul.f32 %v1683, %v526
    %v1688 = vmul.f32 %v1686, %v526
    %v1689 = vsub.f32 %v1679, %v1687
    %v1690 = vsub.f32 %v1680, %v1688
    %v1691 = vmul.f32 %v1689, %v1689
    %v1692 = vmul.f32 %v1690, %v1690
    %v1693 = vsel %vm208, %v1691, 0.0
    %1694 = vadd.xlane.f32.xlu0 %v1693
    %v1695 = vpop.xlane.xlu0 %1694
    %v1696 = vsel %vm208, %v1692, 0.0
    %1697 = vadd.xlane.f32.xlu0 %v1696
    %v1698 = vpop.xlane.xlu0 %1697
    %v1699 = vmul.f32 %v1695, %v526
    %v1700 = vmul.f32 %v1698, %v526
    %v1701 = vadd.f32 %v1699, 1e-05
    %v1702 = vadd.f32 %v1700, 1e-05
    %v1703 = vrsqrt.pop %v1701
    %v1704 = vmul.f32 %v1703, %v1701
    %v1705 = vmul.f32 %v1704, %v1703
    %v1706 = vmul.f32 0.5, %v1705
    %v1707 = vsub.f32 1.5, %v1706
    %v1708 = vmul.f32 %v1703, %v1707
    %vm1709 = vweird.f32 %v1701
    %vm1710 = vweird.f32 %v1703
    %vm1711 = vmor %vm1709, %vm1710
    %v1712 = vsel %vm1711, %v1703, %v1708
    %v1713 = vrsqrt.pop %v1702
    %v1714 = vmul.f32 %v1713, %v1702
    %v1715 = vmul.f32 %v1714, %v1713
    %v1716 = vmul.f32 0.5, %v1715
    %v1717 = vsub.f32 1.5, %v1716
    %v1718 = vmul.f32 %v1713, %v1717
    %vm1719 = vweird.f32 %v1702
    %vm1720 = vweird.f32 %v1713
    %vm1721 = vmor %vm1719, %vm1720
    %v1722 = vsel %vm1721, %v1713, %v1718
    %v1723 = vmul.f32 %v1689, %v1712
    %v1724 = vmul.f32 %v1690, %v1722
    %v1725 = vld [vmem:[%s25] sm:$0x1]
    %v1727 = vperm.slane %v1725, 0
    %v1729 = vmul.f32 %v1723, %v1727
    %v1730 = vmul.f32 %v1724, %v1727
    %v1731 = vld [vmem:[%s27] sm:$0x1]
    %v1733 = vperm.slane %v1731, 0
    %v1735 = vadd.f32 %v1729, %v1733
    %v1736 = vadd.f32 %v1730, %v1733
    %s1737 = scalar_lea.vmem %s5, 16
    %v1738 = vld [vmem:[%s1737] sm:$0xff]
    %v1739 = vld [vmem:[%s1737 + $0x8] sm:$0xff]
    %s1740 = scalar_lea.vmem %s7, 1
    %v1741 = vld [vmem:[%s1740] sm:$0x1]
    %v1743 = vperm.slane %v1741, 0
    %v1746 = vsel %vm208, %v1735, 0
    %v1749 = vsel %vm208, %v1736, 0
    %1751 = vmatpush.msra.mxu0 0.0
    %1752 = vmatpush.msra.mxu0 0.0
    %1753 = vmatpush.msra.mxu0 0.0
    %1754 = vmatpush.msra.mxu0 0.0
    %1755 = vmatpush.msra.mxu0 0.0
    %1756 = vmatpush.msra.mxu0 0.0
    %1757 = vmatpush.msra.mxu0 0.0
    %1758 = vmatpush.msra.mxu0 0.0
    %1759 = vmatpush.msra.mxu0 0.0
    %1760 = vmatpush.msra.mxu0 0.0
    %1761 = vmatpush.msra.mxu0 0.0
    %1762 = vmatpush.msra.mxu0 0.0
    %1763 = vmatpush.msra.mxu0 0.0
    %1764 = vmatpush.msra.mxu0 0.0
    %1765 = vmatpush.msra.mxu0 %v1739
    %1766 = vmatpush.msra.mxu0 %v1738
    %1767 = vmatmul.f32.gmra.mxu0 %v1746
    %v1768 = vpop.f32.mrf.mxu0
    %v1769 = vadd.f32 %v1743, %v1768
    %1770 = vmatmul.f32.gmra.mxu0 %v1749
    %v1771 = vpop.f32.mrf.mxu0
    %v1772 = vadd.f32 %v1743, %v1771
    %1773 = vdwg.mxu0
    %v1774 = vmul.f32 %v1769, 0.35355338
    %v1775 = vmul.f32 %v1772, 0.35355338
    %1777 = vrot.lane.b32.xlu0 %v1769, 112
    %v1778 = vpop.permute.xlu0 %1777
    %v1780 = vmul.f32 %v1774, %v1778
    %v1782 = vsel %vm208, %v1780, 0
    %1784 = vmatpush.msra.mxu0 0.0
    %1785 = vmatpush.msra.mxu0 0.0
    %1786 = vmatpush.msra.mxu0 0.0
    %1787 = vmatpush.msra.mxu0 0.0
    %1788 = vmatpush.msra.mxu0 0.0
    %1789 = vmatpush.msra.mxu0 0.0
    %1790 = vmatpush.msra.mxu0 0.0
    %1791 = vmatpush.msra.mxu0 0.0
    %1792 = vmatpush.msra.mxu0 0.0
    %1793 = vmatpush.msra.mxu0 0.0
    %1794 = vmatpush.msra.mxu0 0.0
    %1795 = vmatpush.msra.mxu0 0.0
    %1796 = vmatpush.msra.mxu0 0.0
    %1797 = vmatpush.msra.mxu0 0.0
    %1798 = vmatpush.msra.mxu0 %v200
    %1799 = vmatpush.msra.mxu0 %v199
    %1800 = vmatmul.f32.gmra.mxu0 %v1782
    %v1801 = vpop.f32.mrf.mxu0
    %v1802 = vadd.f32 0.0, %v1801
    %1803 = vdwg.mxu0
    %1805 = vrot.lane.b32.xlu0 %v1772, 112
    %v1806 = vpop.permute.xlu0 %1805
    %v1808 = vmul.f32 %v1774, %v1806
    %v1810 = vsel %vm208, %v1808, 0
    %1812 = vmatpush.msra.mxu0 0.0
    %1813 = vmatpush.msra.mxu0 0.0
    %1814 = vmatpush.msra.mxu0 0.0
    %1815 = vmatpush.msra.mxu0 0.0
    %1816 = vmatpush.msra.mxu0 0.0
    %1817 = vmatpush.msra.mxu0 0.0
    %1818 = vmatpush.msra.mxu0 0.0
    %1819 = vmatpush.msra.mxu0 0.0
    %1820 = vmatpush.msra.mxu0 0.0
    %1821 = vmatpush.msra.mxu0 0.0
    %1822 = vmatpush.msra.mxu0 0.0
    %1823 = vmatpush.msra.mxu0 0.0
    %1824 = vmatpush.msra.mxu0 0.0
    %1825 = vmatpush.msra.mxu0 0.0
    %1826 = vmatpush.msra.mxu0 %v200
    %1827 = vmatpush.msra.mxu0 %v199
    %1828 = vmatmul.f32.gmra.mxu0 %v1810
    %v1829 = vpop.f32.mrf.mxu0
    %v1830 = vadd.f32 0.0, %v1829
    %1831 = vdwg.mxu0
    %v1832 = vmax.f32 %v1802, %v1830
    %v1833 = vsub.f32 %v1802, %v1832
    %v1834 = vmul.f32 %v1833, 1.442695
    %v1835 = vpow.pop %v1834
    %v1836 = vsub.f32 %v1830, %v1832
    %v1837 = vmul.f32 %v1836, 1.442695
    %v1838 = vpow.pop %v1837
    %v1839 = vadd.f32 %v1835, %v1838
    %v1840 = vrcp.pop %v1839
    %v1841 = vmul.f32 %v1835, %v1840
    %v1843 = vsel %vm306, %v1841, 0
    %1845 = vmatpush.msra.mxu0 0.0
    %1846 = vmatpush.msra.mxu0 0.0
    %1847 = vmatpush.msra.mxu0 0.0
    %1848 = vmatpush.msra.mxu0 0.0
    %1849 = vmatpush.msra.mxu0 0.0
    %1850 = vmatpush.msra.mxu0 0.0
    %1851 = vmatpush.msra.mxu0 0.0
    %1852 = vmatpush.msra.mxu0 0.0
    %1853 = vmatpush.msra.mxu0 0.0
    %1854 = vmatpush.msra.mxu0 0.0
    %1855 = vmatpush.msra.mxu0 0.0
    %1856 = vmatpush.msra.mxu0 0.0
    %1857 = vmatpush.msra.mxu0 0.0
    %1858 = vmatpush.msra.mxu0 0.0
    %1859 = vmatpush.msra.mxu0 0.0
    %1860 = vmatpush.msra.mxu0 %v312
    %1861 = vmatmul.f32.gmra.mxu0 %v1843
    %v1862 = vpop.f32.mrf.mxu0
    %v1863 = vadd.f32 0.0, %v1862
    %1864 = vdwg.mxu0
    %1865 = vrot.lane.b32.xlu0 %v1769, 96
    %v1866 = vpop.permute.xlu0 %1865
    %v1868 = vmul.f32 %v1863, %v1866
    %v1869 = vadd.f32 %v1868, 0.0
    %v1870 = vmul.f32 %v1838, %v1840
    %v1872 = vsel %vm306, %v1870, 0
    %1874 = vmatpush.msra.mxu0 0.0
    %1875 = vmatpush.msra.mxu0 0.0
    %1876 = vmatpush.msra.mxu0 0.0
    %1877 = vmatpush.msra.mxu0 0.0
    %1878 = vmatpush.msra.mxu0 0.0
    %1879 = vmatpush.msra.mxu0 0.0
    %1880 = vmatpush.msra.mxu0 0.0
    %1881 = vmatpush.msra.mxu0 0.0
    %1882 = vmatpush.msra.mxu0 0.0
    %1883 = vmatpush.msra.mxu0 0.0
    %1884 = vmatpush.msra.mxu0 0.0
    %1885 = vmatpush.msra.mxu0 0.0
    %1886 = vmatpush.msra.mxu0 0.0
    %1887 = vmatpush.msra.mxu0 0.0
    %1888 = vmatpush.msra.mxu0 0.0
    %1889 = vmatpush.msra.mxu0 %v312
    %1890 = vmatmul.f32.gmra.mxu0 %v1872
    %v1891 = vpop.f32.mrf.mxu0
    %v1892 = vadd.f32 0.0, %v1891
    %1893 = vdwg.mxu0
    %1894 = vrot.lane.b32.xlu0 %v1772, 96
    %v1895 = vpop.permute.xlu0 %1894
    %v1897 = vmul.f32 %v1892, %v1895
    %v1898 = vadd.f32 %v1869, %v1897
    %v1899 = vmul.f32 %v1775, %v1778
    %v1901 = vsel %vm208, %v1899, 0
    %1903 = vmatpush.msra.mxu0 0.0
    %1904 = vmatpush.msra.mxu0 0.0
    %1905 = vmatpush.msra.mxu0 0.0
    %1906 = vmatpush.msra.mxu0 0.0
    %1907 = vmatpush.msra.mxu0 0.0
    %1908 = vmatpush.msra.mxu0 0.0
    %1909 = vmatpush.msra.mxu0 0.0
    %1910 = vmatpush.msra.mxu0 0.0
    %1911 = vmatpush.msra.mxu0 0.0
    %1912 = vmatpush.msra.mxu0 0.0
    %1913 = vmatpush.msra.mxu0 0.0
    %1914 = vmatpush.msra.mxu0 0.0
    %1915 = vmatpush.msra.mxu0 0.0
    %1916 = vmatpush.msra.mxu0 0.0
    %1917 = vmatpush.msra.mxu0 %v200
    %1918 = vmatpush.msra.mxu0 %v199
    %1919 = vmatmul.f32.gmra.mxu0 %v1901
    %v1920 = vpop.f32.mrf.mxu0
    %v1921 = vadd.f32 0.0, %v1920
    %1922 = vdwg.mxu0
    %v1923 = vmul.f32 %v1775, %v1806
    %v1925 = vsel %vm208, %v1923, 0
    %1927 = vmatpush.msra.mxu0 0.0
    %1928 = vmatpush.msra.mxu0 0.0
    %1929 = vmatpush.msra.mxu0 0.0
    %1930 = vmatpush.msra.mxu0 0.0
    %1931 = vmatpush.msra.mxu0 0.0
    %1932 = vmatpush.msra.mxu0 0.0
    %1933 = vmatpush.msra.mxu0 0.0
    %1934 = vmatpush.msra.mxu0 0.0
    %1935 = vmatpush.msra.mxu0 0.0
    %1936 = vmatpush.msra.mxu0 0.0
    %1937 = vmatpush.msra.mxu0 0.0
    %1938 = vmatpush.msra.mxu0 0.0
    %1939 = vmatpush.msra.mxu0 0.0
    %1940 = vmatpush.msra.mxu0 0.0
    %1941 = vmatpush.msra.mxu0 %v200
    %1942 = vmatpush.msra.mxu0 %v199
    %1943 = vmatmul.f32.gmra.mxu0 %v1925
    %v1944 = vpop.f32.mrf.mxu0
    %v1945 = vadd.f32 0.0, %v1944
    %1946 = vdwg.mxu0
    %v1947 = vmax.f32 %v1921, %v1945
    %v1948 = vsub.f32 %v1921, %v1947
    %v1949 = vmul.f32 %v1948, 1.442695
    %v1950 = vpow.pop %v1949
    %v1951 = vsub.f32 %v1945, %v1947
    %v1952 = vmul.f32 %v1951, 1.442695
    %v1953 = vpow.pop %v1952
    %v1954 = vadd.f32 %v1950, %v1953
    %v1955 = vrcp.pop %v1954
    %v1956 = vmul.f32 %v1950, %v1955
    %v1958 = vsel %vm306, %v1956, 0
    %1960 = vmatpush.msra.mxu0 0.0
    %1961 = vmatpush.msra.mxu0 0.0
    %1962 = vmatpush.msra.mxu0 0.0
    %1963 = vmatpush.msra.mxu0 0.0
    %1964 = vmatpush.msra.mxu0 0.0
    %1965 = vmatpush.msra.mxu0 0.0
    %1966 = vmatpush.msra.mxu0 0.0
    %1967 = vmatpush.msra.mxu0 0.0
    %1968 = vmatpush.msra.mxu0 0.0
    %1969 = vmatpush.msra.mxu0 0.0
    %1970 = vmatpush.msra.mxu0 0.0
    %1971 = vmatpush.msra.mxu0 0.0
    %1972 = vmatpush.msra.mxu0 0.0
    %1973 = vmatpush.msra.mxu0 0.0
    %1974 = vmatpush.msra.mxu0 0.0
    %1975 = vmatpush.msra.mxu0 %v312
    %1976 = vmatmul.f32.gmra.mxu0 %v1958
    %v1977 = vpop.f32.mrf.mxu0
    %v1978 = vadd.f32 0.0, %v1977
    %1979 = vdwg.mxu0
    %v1980 = vmul.f32 %v1978, %v1866
    %v1981 = vadd.f32 %v1980, 0.0
    %v1982 = vmul.f32 %v1953, %v1955
    %v1984 = vsel %vm306, %v1982, 0
    %1986 = vmatpush.msra.mxu0 0.0
    %1987 = vmatpush.msra.mxu0 0.0
    %1988 = vmatpush.msra.mxu0 0.0
    %1989 = vmatpush.msra.mxu0 0.0
    %1990 = vmatpush.msra.mxu0 0.0
    %1991 = vmatpush.msra.mxu0 0.0
    %1992 = vmatpush.msra.mxu0 0.0
    %1993 = vmatpush.msra.mxu0 0.0
    %1994 = vmatpush.msra.mxu0 0.0
    %1995 = vmatpush.msra.mxu0 0.0
    %1996 = vmatpush.msra.mxu0 0.0
    %1997 = vmatpush.msra.mxu0 0.0
    %1998 = vmatpush.msra.mxu0 0.0
    %1999 = vmatpush.msra.mxu0 0.0
    %2000 = vmatpush.msra.mxu0 0.0
    %2001 = vmatpush.msra.mxu0 %v312
    %2002 = vmatmul.f32.gmra.mxu0 %v1984
    %v2003 = vpop.f32.mrf.mxu0
    %v2004 = vadd.f32 0.0, %v2003
    %2005 = vdwg.mxu0
    %v2006 = vmul.f32 %v2004, %v1895
    %v2007 = vadd.f32 %v1981, %v2006
    %s2008 = scalar_lea.vmem %s9, 16
    %v2009 = vld [vmem:[%s2008] sm:$0xff]
    %v2010 = vld [vmem:[%s2008 + $0x8] sm:$0xff]
    %s2011 = scalar_lea.vmem %s11, 1
    %v2012 = vld [vmem:[%s2011] sm:$0x1]
    %v2014 = vperm.slane %v2012, 0
    %v2017 = vsel %vm208, %v1898, 0
    %v2020 = vsel %vm208, %v2007, 0
    %2022 = vmatpush.msra.mxu0 0.0
    %2023 = vmatpush.msra.mxu0 0.0
    %2024 = vmatpush.msra.mxu0 0.0
    %2025 = vmatpush.msra.mxu0 0.0
    %2026 = vmatpush.msra.mxu0 0.0
    %2027 = vmatpush.msra.mxu0 0.0
    %2028 = vmatpush.msra.mxu0 0.0
    %2029 = vmatpush.msra.mxu0 0.0
    %2030 = vmatpush.msra.mxu0 0.0
    %2031 = vmatpush.msra.mxu0 0.0
    %2032 = vmatpush.msra.mxu0 0.0
    %2033 = vmatpush.msra.mxu0 0.0
    %2034 = vmatpush.msra.mxu0 0.0
    %2035 = vmatpush.msra.mxu0 0.0
    %2036 = vmatpush.msra.mxu0 %v2010
    %2037 = vmatpush.msra.mxu0 %v2009
    %2038 = vmatmul.f32.gmra.mxu0 %v2017
    %v2039 = vpop.f32.mrf.mxu0
    %v2040 = vadd.f32 %v2014, %v2039
    %2041 = vmatmul.f32.gmra.mxu0 %v2020
    %v2042 = vpop.f32.mrf.mxu0
    %v2043 = vadd.f32 %v2014, %v2042
    %2044 = vdwg.mxu0
    %v2045 = vadd.f32 %v1735, %v2040
    %v2046 = vadd.f32 %v1736, %v2043
    %v2047 = vsel %vm208, %v2045, 0.0
    %2048 = vadd.xlane.f32.xlu0 %v2047
    %v2049 = vpop.xlane.xlu0 %2048
    %v2050 = vsel %vm208, %v2046, 0.0
    %2051 = vadd.xlane.f32.xlu0 %v2050
    %v2052 = vpop.xlane.xlu0 %2051
    %v2053 = vmul.f32 %v2049, %v526
    %v2054 = vmul.f32 %v2052, %v526
    %v2055 = vsub.f32 %v2045, %v2053
    %v2056 = vsub.f32 %v2046, %v2054
    %v2057 = vmul.f32 %v2055, %v2055
    %v2058 = vmul.f32 %v2056, %v2056
    %v2059 = vsel %vm208, %v2057, 0.0
    %2060 = vadd.xlane.f32.xlu0 %v2059
    %v2061 = vpop.xlane.xlu0 %2060
    %v2062 = vsel %vm208, %v2058, 0.0
    %2063 = vadd.xlane.f32.xlu0 %v2062
    %v2064 = vpop.xlane.xlu0 %2063
    %v2065 = vmul.f32 %v2061, %v526
    %v2066 = vmul.f32 %v2064, %v526
    %v2067 = vadd.f32 %v2065, 1e-05
    %v2068 = vadd.f32 %v2066, 1e-05
    %v2069 = vrsqrt.pop %v2067
    %v2070 = vmul.f32 %v2069, %v2067
    %v2071 = vmul.f32 %v2070, %v2069
    %v2072 = vmul.f32 0.5, %v2071
    %v2073 = vsub.f32 1.5, %v2072
    %v2074 = vmul.f32 %v2069, %v2073
    %vm2075 = vweird.f32 %v2067
    %vm2076 = vweird.f32 %v2069
    %vm2077 = vmor %vm2075, %vm2076
    %v2078 = vsel %vm2077, %v2069, %v2074
    %v2079 = vrsqrt.pop %v2068
    %v2080 = vmul.f32 %v2079, %v2068
    %v2081 = vmul.f32 %v2080, %v2079
    %v2082 = vmul.f32 0.5, %v2081
    %v2083 = vsub.f32 1.5, %v2082
    %v2084 = vmul.f32 %v2079, %v2083
    %vm2085 = vweird.f32 %v2068
    %vm2086 = vweird.f32 %v2079
    %vm2087 = vmor %vm2085, %vm2086
    %v2088 = vsel %vm2087, %v2079, %v2084
    %v2089 = vmul.f32 %v2055, %v2078
    %v2090 = vmul.f32 %v2056, %v2088
    %s2091 = scalar_lea.vmem %s21, 1
    %v2092 = vld [vmem:[%s2091] sm:$0x1]
    %v2094 = vperm.slane %v2092, 0
    %v2096 = vmul.f32 %v2089, %v2094
    %v2097 = vmul.f32 %v2090, %v2094
    %s2098 = scalar_lea.vmem %s23, 1
    %v2099 = vld [vmem:[%s2098] sm:$0x1]
    %v2101 = vperm.slane %v2099, 0
    %v2103 = vadd.f32 %v2096, %v2101
    %v2104 = vadd.f32 %v2097, %v2101
    %s2105 = scalar_lea.vmem %s13, 256
    %v2106 = vld [vmem:[%s2105] sm:$0xff]
    %v2107 = vld [vmem:[%s2105 + $0x8] sm:$0xff]
    %v2108 = vld [vmem:[%s2105 + $0x10] sm:$0xff]
    %v2109 = vld [vmem:[%s2105 + $0x18] sm:$0xff]
    %v2110 = vld [vmem:[%s2105 + $0x20] sm:$0xff]
    %v2111 = vld [vmem:[%s2105 + $0x28] sm:$0xff]
    %v2112 = vld [vmem:[%s2105 + $0x30] sm:$0xff]
    %v2113 = vld [vmem:[%s2105 + $0x38] sm:$0xff]
    %v2114 = vld [vmem:[%s2105 + $0x40] sm:$0xff]
    %v2115 = vld [vmem:[%s2105 + $0x48] sm:$0xff]
    %v2116 = vld [vmem:[%s2105 + $0x50] sm:$0xff]
    %v2117 = vld [vmem:[%s2105 + $0x58] sm:$0xff]
    %v2118 = vld [vmem:[%s2105 + $0x60] sm:$0xff]
    %v2119 = vld [vmem:[%s2105 + $0x68] sm:$0xff]
    %v2120 = vld [vmem:[%s2105 + $0x70] sm:$0xff]
    %v2121 = vld [vmem:[%s2105 + $0x78] sm:$0xff]
    %v2122 = vld [vmem:[%s2105 + $0x80] sm:$0xff]
    %v2123 = vld [vmem:[%s2105 + $0x88] sm:$0xff]
    %v2124 = vld [vmem:[%s2105 + $0x90] sm:$0xff]
    %v2125 = vld [vmem:[%s2105 + $0x98] sm:$0xff]
    %v2126 = vld [vmem:[%s2105 + $0xa0] sm:$0xff]
    %v2127 = vld [vmem:[%s2105 + $0xa8] sm:$0xff]
    %v2128 = vld [vmem:[%s2105 + $0xb0] sm:$0xff]
    %v2129 = vld [vmem:[%s2105 + $0xb8] sm:$0xff]
    %v2130 = vld [vmem:[%s2105 + $0xc0] sm:$0xff]
    %v2131 = vld [vmem:[%s2105 + $0xc8] sm:$0xff]
    %v2132 = vld [vmem:[%s2105 + $0xd0] sm:$0xff]
    %v2133 = vld [vmem:[%s2105 + $0xd8] sm:$0xff]
    %v2134 = vld [vmem:[%s2105 + $0xe0] sm:$0xff]
    %v2135 = vld [vmem:[%s2105 + $0xe8] sm:$0xff]
    %v2136 = vld [vmem:[%s2105 + $0xf0] sm:$0xff]
    %v2137 = vld [vmem:[%s2105 + $0xf8] sm:$0xff]
    %s2138 = scalar_lea.vmem %s15, 16
    %v2139 = vld [vmem:[%s2138] sm:$0xff]
    %v2140 = vld [vmem:[%s2138 + $0x8] sm:$0xff]
    %v2143 = vperm.slane %v2139, 0
    %v2144 = vperm.slane %v2139, 1
    %v2145 = vperm.slane %v2139, 2
    %v2146 = vperm.slane %v2139, 3
    %v2147 = vperm.slane %v2139, 4
    %v2148 = vperm.slane %v2139, 5
    %v2149 = vperm.slane %v2139, 6
    %v2150 = vperm.slane %v2139, 7
    %v2151 = vperm.slane %v2140, 0
    %v2152 = vperm.slane %v2140, 1
    %v2153 = vperm.slane %v2140, 2
    %v2154 = vperm.slane %v2140, 3
    %v2155 = vperm.slane %v2140, 4
    %v2156 = vperm.slane %v2140, 5
    %v2157 = vperm.slane %v2140, 6
    %v2158 = vperm.slane %v2140, 7
    %v2176 = vsel %vm208, %v2103, 0
    %v2179 = vsel %vm208, %v2104, 0
    %2181 = vmatpush.msra.mxu0 0.0
    %2182 = vmatpush.msra.mxu0 0.0
    %2183 = vmatpush.msra.mxu0 0.0
    %2184 = vmatpush.msra.mxu0 0.0
    %2185 = vmatpush.msra.mxu0 0.0
    %2186 = vmatpush.msra.mxu0 0.0
    %2187 = vmatpush.msra.mxu0 0.0
    %2188 = vmatpush.msra.mxu0 0.0
    %2189 = vmatpush.msra.mxu0 0.0
    %2190 = vmatpush.msra.mxu0 0.0
    %2191 = vmatpush.msra.mxu0 0.0
    %2192 = vmatpush.msra.mxu0 0.0
    %2193 = vmatpush.msra.mxu0 0.0
    %2194 = vmatpush.msra.mxu0 0.0
    %2195 = vmatpush.msra.mxu0 %v2122
    %2196 = vmatpush.msra.mxu0 %v2106
    %2197 = vmatmul.f32.gmra.mxu0 %v2176
    %v2198 = vpop.f32.mrf.mxu0
    %v2199 = vadd.f32 %v2143, %v2198
    %2200 = vmatmul.f32.gmra.mxu0 %v2179
    %v2201 = vpop.f32.mrf.mxu0
    %v2202 = vadd.f32 %v2143, %v2201
    %2203 = vdwg.mxu0
    %2204 = vmatpush.msra.mxu0 0.0
    %2205 = vmatpush.msra.mxu0 0.0
    %2206 = vmatpush.msra.mxu0 0.0
    %2207 = vmatpush.msra.mxu0 0.0
    %2208 = vmatpush.msra.mxu0 0.0
    %2209 = vmatpush.msra.mxu0 0.0
    %2210 = vmatpush.msra.mxu0 0.0
    %2211 = vmatpush.msra.mxu0 0.0
    %2212 = vmatpush.msra.mxu0 0.0
    %2213 = vmatpush.msra.mxu0 0.0
    %2214 = vmatpush.msra.mxu0 0.0
    %2215 = vmatpush.msra.mxu0 0.0
    %2216 = vmatpush.msra.mxu0 0.0
    %2217 = vmatpush.msra.mxu0 0.0
    %2218 = vmatpush.msra.mxu0 %v2123
    %2219 = vmatpush.msra.mxu0 %v2107
    %2220 = vmatmul.f32.gmra.mxu0 %v2176
    %v2221 = vpop.f32.mrf.mxu0
    %v2222 = vadd.f32 %v2144, %v2221
    %2223 = vmatmul.f32.gmra.mxu0 %v2179
    %v2224 = vpop.f32.mrf.mxu0
    %v2225 = vadd.f32 %v2144, %v2224
    %2226 = vdwg.mxu0
    %2227 = vmatpush.msra.mxu0 0.0
    %2228 = vmatpush.msra.mxu0 0.0
    %2229 = vmatpush.msra.mxu0 0.0
    %2230 = vmatpush.msra.mxu0 0.0
    %2231 = vmatpush.msra.mxu0 0.0
    %2232 = vmatpush.msra.mxu0 0.0
    %2233 = vmatpush.msra.mxu0 0.0
    %2234 = vmatpush.msra.mxu0 0.0
    %2235 = vmatpush.msra.mxu0 0.0
    %2236 = vmatpush.msra.mxu0 0.0
    %2237 = vmatpush.msra.mxu0 0.0
    %2238 = vmatpush.msra.mxu0 0.0
    %2239 = vmatpush.msra.mxu0 0.0
    %2240 = vmatpush.msra.mxu0 0.0
    %2241 = vmatpush.msra.mxu0 %v2124
    %2242 = vmatpush.msra.mxu0 %v2108
    %2243 = vmatmul.f32.gmra.mxu0 %v2176
    %v2244 = vpop.f32.mrf.mxu0
    %v2245 = vadd.f32 %v2145, %v2244
    %2246 = vmatmul.f32.gmra.mxu0 %v2179
    %v2247 = vpop.f32.mrf.mxu0
    %v2248 = vadd.f32 %v2145, %v2247
    %2249 = vdwg.mxu0
    %2250 = vmatpush.msra.mxu0 0.0
    %2251 = vmatpush.msra.mxu0 0.0
    %2252 = vmatpush.msra.mxu0 0.0
    %2253 = vmatpush.msra.mxu0 0.0
    %2254 = vmatpush.msra.mxu0 0.0
    %2255 = vmatpush.msra.mxu0 0.0
    %2256 = vmatpush.msra.mxu0 0.0
    %2257 = vmatpush.msra.mxu0 0.0
    %2258 = vmatpush.msra.mxu0 0.0
    %2259 = vmatpush.msra.mxu0 0.0
    %2260 = vmatpush.msra.mxu0 0.0
    %2261 = vmatpush.msra.mxu0 0.0
    %2262 = vmatpush.msra.mxu0 0.0
    %2263 = vmatpush.msra.mxu0 0.0
    %2264 = vmatpush.msra.mxu0 %v2125
    %2265 = vmatpush.msra.mxu0 %v2109
    %2266 = vmatmul.f32.gmra.mxu0 %v2176
    %v2267 = vpop.f32.mrf.mxu0
    %v2268 = vadd.f32 %v2146, %v2267
    %2269 = vmatmul.f32.gmra.mxu0 %v2179
    %v2270 = vpop.f32.mrf.mxu0
    %v2271 = vadd.f32 %v2146, %v2270
    %2272 = vdwg.mxu0
    %2273 = vmatpush.msra.mxu0 0.0
    %2274 = vmatpush.msra.mxu0 0.0
    %2275 = vmatpush.msra.mxu0 0.0
    %2276 = vmatpush.msra.mxu0 0.0
    %2277 = vmatpush.msra.mxu0 0.0
    %2278 = vmatpush.msra.mxu0 0.0
    %2279 = vmatpush.msra.mxu0 0.0
    %2280 = vmatpush.msra.mxu0 0.0
    %2281 = vmatpush.msra.mxu0 0.0
    %2282 = vmatpush.msra.mxu0 0.0
    %2283 = vmatpush.msra.mxu0 0.0
    %2284 = vmatpush.msra.mxu0 0.0
    %2285 = vmatpush.msra.mxu0 0.0
    %2286 = vmatpush.msra.mxu0 0.0
    %2287 = vmatpush.msra.mxu0 %v2126
    %2288 = vmatpush.msra.mxu0 %v2110
    %2289 = vmatmul.f32.gmra.mxu0 %v2176
    %v2290 = vpop.f32.mrf.mxu0
    %v2291 = vadd.f32 %v2147, %v2290
    %2292 = vmatmul.f32.gmra.mxu0 %v2179
    %v2293 = vpop.f32.mrf.mxu0
    %v2294 = vadd.f32 %v2147, %v2293
    %2295 = vdwg.mxu0
    %2296 = vmatpush.msra.mxu0 0.0
    %2297 = vmatpush.msra.mxu0 0.0
    %2298 = vmatpush.msra.mxu0 0.0
    %2299 = vmatpush.msra.mxu0 0.0
    %2300 = vmatpush.msra.mxu0 0.0
    %2301 = vmatpush.msra.mxu0 0.0
    %2302 = vmatpush.msra.mxu0 0.0
    %2303 = vmatpush.msra.mxu0 0.0
    %2304 = vmatpush.msra.mxu0 0.0
    %2305 = vmatpush.msra.mxu0 0.0
    %2306 = vmatpush.msra.mxu0 0.0
    %2307 = vmatpush.msra.mxu0 0.0
    %2308 = vmatpush.msra.mxu0 0.0
    %2309 = vmatpush.msra.mxu0 0.0
    %2310 = vmatpush.msra.mxu0 %v2127
    %2311 = vmatpush.msra.mxu0 %v2111
    %2312 = vmatmul.f32.gmra.mxu0 %v2176
    %v2313 = vpop.f32.mrf.mxu0
    %v2314 = vadd.f32 %v2148, %v2313
    %2315 = vmatmul.f32.gmra.mxu0 %v2179
    %v2316 = vpop.f32.mrf.mxu0
    %v2317 = vadd.f32 %v2148, %v2316
    %2318 = vdwg.mxu0
    %2319 = vmatpush.msra.mxu0 0.0
    %2320 = vmatpush.msra.mxu0 0.0
    %2321 = vmatpush.msra.mxu0 0.0
    %2322 = vmatpush.msra.mxu0 0.0
    %2323 = vmatpush.msra.mxu0 0.0
    %2324 = vmatpush.msra.mxu0 0.0
    %2325 = vmatpush.msra.mxu0 0.0
    %2326 = vmatpush.msra.mxu0 0.0
    %2327 = vmatpush.msra.mxu0 0.0
    %2328 = vmatpush.msra.mxu0 0.0
    %2329 = vmatpush.msra.mxu0 0.0
    %2330 = vmatpush.msra.mxu0 0.0
    %2331 = vmatpush.msra.mxu0 0.0
    %2332 = vmatpush.msra.mxu0 0.0
    %2333 = vmatpush.msra.mxu0 %v2128
    %2334 = vmatpush.msra.mxu0 %v2112
    %2335 = vmatmul.f32.gmra.mxu0 %v2176
    %v2336 = vpop.f32.mrf.mxu0
    %v2337 = vadd.f32 %v2149, %v2336
    %2338 = vmatmul.f32.gmra.mxu0 %v2179
    %v2339 = vpop.f32.mrf.mxu0
    %v2340 = vadd.f32 %v2149, %v2339
    %2341 = vdwg.mxu0
    %2342 = vmatpush.msra.mxu0 0.0
    %2343 = vmatpush.msra.mxu0 0.0
    %2344 = vmatpush.msra.mxu0 0.0
    %2345 = vmatpush.msra.mxu0 0.0
    %2346 = vmatpush.msra.mxu0 0.0
    %2347 = vmatpush.msra.mxu0 0.0
    %2348 = vmatpush.msra.mxu0 0.0
    %2349 = vmatpush.msra.mxu0 0.0
    %2350 = vmatpush.msra.mxu0 0.0
    %2351 = vmatpush.msra.mxu0 0.0
    %2352 = vmatpush.msra.mxu0 0.0
    %2353 = vmatpush.msra.mxu0 0.0
    %2354 = vmatpush.msra.mxu0 0.0
    %2355 = vmatpush.msra.mxu0 0.0
    %2356 = vmatpush.msra.mxu0 %v2129
    %2357 = vmatpush.msra.mxu0 %v2113
    %2358 = vmatmul.f32.gmra.mxu0 %v2176
    %v2359 = vpop.f32.mrf.mxu0
    %v2360 = vadd.f32 %v2150, %v2359
    %2361 = vmatmul.f32.gmra.mxu0 %v2179
    %v2362 = vpop.f32.mrf.mxu0
    %v2363 = vadd.f32 %v2150, %v2362
    %2364 = vdwg.mxu0
    %2365 = vmatpush.msra.mxu0 0.0
    %2366 = vmatpush.msra.mxu0 0.0
    %2367 = vmatpush.msra.mxu0 0.0
    %2368 = vmatpush.msra.mxu0 0.0
    %2369 = vmatpush.msra.mxu0 0.0
    %2370 = vmatpush.msra.mxu0 0.0
    %2371 = vmatpush.msra.mxu0 0.0
    %2372 = vmatpush.msra.mxu0 0.0
    %2373 = vmatpush.msra.mxu0 0.0
    %2374 = vmatpush.msra.mxu0 0.0
    %2375 = vmatpush.msra.mxu0 0.0
    %2376 = vmatpush.msra.mxu0 0.0
    %2377 = vmatpush.msra.mxu0 0.0
    %2378 = vmatpush.msra.mxu0 0.0
    %2379 = vmatpush.msra.mxu0 %v2130
    %2380 = vmatpush.msra.mxu0 %v2114
    %2381 = vmatmul.f32.gmra.mxu0 %v2176
    %v2382 = vpop.f32.mrf.mxu0
    %v2383 = vadd.f32 %v2151, %v2382
    %2384 = vmatmul.f32.gmra.mxu0 %v2179
    %v2385 = vpop.f32.mrf.mxu0
    %v2386 = vadd.f32 %v2151, %v2385
    %2387 = vdwg.mxu0
    %2388 = vmatpush.msra.mxu0 0.0
    %2389 = vmatpush.msra.mxu0 0.0
    %2390 = vmatpush.msra.mxu0 0.0
    %2391 = vmatpush.msra.mxu0 0.0
    %2392 = vmatpush.msra.mxu0 0.0
    %2393 = vmatpush.msra.mxu0 0.0
    %2394 = vmatpush.msra.mxu0 0.0
    %2395 = vmatpush.msra.mxu0 0.0
    %2396 = vmatpush.msra.mxu0 0.0
    %2397 = vmatpush.msra.mxu0 0.0
    %2398 = vmatpush.msra.mxu0 0.0
    %2399 = vmatpush.msra.mxu0 0.0
    %2400 = vmatpush.msra.mxu0 0.0
    %2401 = vmatpush.msra.mxu0 0.0
    %2402 = vmatpush.msra.mxu0 %v2131
    %2403 = vmatpush.msra.mxu0 %v2115
    %2404 = vmatmul.f32.gmra.mxu0 %v2176
    %v2405 = vpop.f32.mrf.mxu0
    %v2406 = vadd.f32 %v2152, %v2405
    %2407 = vmatmul.f32.gmra.mxu0 %v2179
    %v2408 = vpop.f32.mrf.mxu0
    %v2409 = vadd.f32 %v2152, %v2408
    %2410 = vdwg.mxu0
    %2411 = vmatpush.msra.mxu0 0.0
    %2412 = vmatpush.msra.mxu0 0.0
    %2413 = vmatpush.msra.mxu0 0.0
    %2414 = vmatpush.msra.mxu0 0.0
    %2415 = vmatpush.msra.mxu0 0.0
    %2416 = vmatpush.msra.mxu0 0.0
    %2417 = vmatpush.msra.mxu0 0.0
    %2418 = vmatpush.msra.mxu0 0.0
    %2419 = vmatpush.msra.mxu0 0.0
    %2420 = vmatpush.msra.mxu0 0.0
    %2421 = vmatpush.msra.mxu0 0.0
    %2422 = vmatpush.msra.mxu0 0.0
    %2423 = vmatpush.msra.mxu0 0.0
    %2424 = vmatpush.msra.mxu0 0.0
    %2425 = vmatpush.msra.mxu0 %v2132
    %2426 = vmatpush.msra.mxu0 %v2116
    %2427 = vmatmul.f32.gmra.mxu0 %v2176
    %v2428 = vpop.f32.mrf.mxu0
    %v2429 = vadd.f32 %v2153, %v2428
    %2430 = vmatmul.f32.gmra.mxu0 %v2179
    %v2431 = vpop.f32.mrf.mxu0
    %v2432 = vadd.f32 %v2153, %v2431
    %2433 = vdwg.mxu0
    %2434 = vmatpush.msra.mxu0 0.0
    %2435 = vmatpush.msra.mxu0 0.0
    %2436 = vmatpush.msra.mxu0 0.0
    %2437 = vmatpush.msra.mxu0 0.0
    %2438 = vmatpush.msra.mxu0 0.0
    %2439 = vmatpush.msra.mxu0 0.0
    %2440 = vmatpush.msra.mxu0 0.0
    %2441 = vmatpush.msra.mxu0 0.0
    %2442 = vmatpush.msra.mxu0 0.0
    %2443 = vmatpush.msra.mxu0 0.0
    %2444 = vmatpush.msra.mxu0 0.0
    %2445 = vmatpush.msra.mxu0 0.0
    %2446 = vmatpush.msra.mxu0 0.0
    %2447 = vmatpush.msra.mxu0 0.0
    %2448 = vmatpush.msra.mxu0 %v2133
    %2449 = vmatpush.msra.mxu0 %v2117
    %2450 = vmatmul.f32.gmra.mxu0 %v2176
    %v2451 = vpop.f32.mrf.mxu0
    %v2452 = vadd.f32 %v2154, %v2451
    %2453 = vmatmul.f32.gmra.mxu0 %v2179
    %v2454 = vpop.f32.mrf.mxu0
    %v2455 = vadd.f32 %v2154, %v2454
    %2456 = vdwg.mxu0
    %2457 = vmatpush.msra.mxu0 0.0
    %2458 = vmatpush.msra.mxu0 0.0
    %2459 = vmatpush.msra.mxu0 0.0
    %2460 = vmatpush.msra.mxu0 0.0
    %2461 = vmatpush.msra.mxu0 0.0
    %2462 = vmatpush.msra.mxu0 0.0
    %2463 = vmatpush.msra.mxu0 0.0
    %2464 = vmatpush.msra.mxu0 0.0
    %2465 = vmatpush.msra.mxu0 0.0
    %2466 = vmatpush.msra.mxu0 0.0
    %2467 = vmatpush.msra.mxu0 0.0
    %2468 = vmatpush.msra.mxu0 0.0
    %2469 = vmatpush.msra.mxu0 0.0
    %2470 = vmatpush.msra.mxu0 0.0
    %2471 = vmatpush.msra.mxu0 %v2134
    %2472 = vmatpush.msra.mxu0 %v2118
    %2473 = vmatmul.f32.gmra.mxu0 %v2176
    %v2474 = vpop.f32.mrf.mxu0
    %v2475 = vadd.f32 %v2155, %v2474
    %2476 = vmatmul.f32.gmra.mxu0 %v2179
    %v2477 = vpop.f32.mrf.mxu0
    %v2478 = vadd.f32 %v2155, %v2477
    %2479 = vdwg.mxu0
    %2480 = vmatpush.msra.mxu0 0.0
    %2481 = vmatpush.msra.mxu0 0.0
    %2482 = vmatpush.msra.mxu0 0.0
    %2483 = vmatpush.msra.mxu0 0.0
    %2484 = vmatpush.msra.mxu0 0.0
    %2485 = vmatpush.msra.mxu0 0.0
    %2486 = vmatpush.msra.mxu0 0.0
    %2487 = vmatpush.msra.mxu0 0.0
    %2488 = vmatpush.msra.mxu0 0.0
    %2489 = vmatpush.msra.mxu0 0.0
    %2490 = vmatpush.msra.mxu0 0.0
    %2491 = vmatpush.msra.mxu0 0.0
    %2492 = vmatpush.msra.mxu0 0.0
    %2493 = vmatpush.msra.mxu0 0.0
    %2494 = vmatpush.msra.mxu0 %v2135
    %2495 = vmatpush.msra.mxu0 %v2119
    %2496 = vmatmul.f32.gmra.mxu0 %v2176
    %v2497 = vpop.f32.mrf.mxu0
    %v2498 = vadd.f32 %v2156, %v2497
    %2499 = vmatmul.f32.gmra.mxu0 %v2179
    %v2500 = vpop.f32.mrf.mxu0
    %v2501 = vadd.f32 %v2156, %v2500
    %2502 = vdwg.mxu0
    %2503 = vmatpush.msra.mxu0 0.0
    %2504 = vmatpush.msra.mxu0 0.0
    %2505 = vmatpush.msra.mxu0 0.0
    %2506 = vmatpush.msra.mxu0 0.0
    %2507 = vmatpush.msra.mxu0 0.0
    %2508 = vmatpush.msra.mxu0 0.0
    %2509 = vmatpush.msra.mxu0 0.0
    %2510 = vmatpush.msra.mxu0 0.0
    %2511 = vmatpush.msra.mxu0 0.0
    %2512 = vmatpush.msra.mxu0 0.0
    %2513 = vmatpush.msra.mxu0 0.0
    %2514 = vmatpush.msra.mxu0 0.0
    %2515 = vmatpush.msra.mxu0 0.0
    %2516 = vmatpush.msra.mxu0 0.0
    %2517 = vmatpush.msra.mxu0 %v2136
    %2518 = vmatpush.msra.mxu0 %v2120
    %2519 = vmatmul.f32.gmra.mxu0 %v2176
    %v2520 = vpop.f32.mrf.mxu0
    %v2521 = vadd.f32 %v2157, %v2520
    %2522 = vmatmul.f32.gmra.mxu0 %v2179
    %v2523 = vpop.f32.mrf.mxu0
    %v2524 = vadd.f32 %v2157, %v2523
    %2525 = vdwg.mxu0
    %2526 = vmatpush.msra.mxu0 0.0
    %2527 = vmatpush.msra.mxu0 0.0
    %2528 = vmatpush.msra.mxu0 0.0
    %2529 = vmatpush.msra.mxu0 0.0
    %2530 = vmatpush.msra.mxu0 0.0
    %2531 = vmatpush.msra.mxu0 0.0
    %2532 = vmatpush.msra.mxu0 0.0
    %2533 = vmatpush.msra.mxu0 0.0
    %2534 = vmatpush.msra.mxu0 0.0
    %2535 = vmatpush.msra.mxu0 0.0
    %2536 = vmatpush.msra.mxu0 0.0
    %2537 = vmatpush.msra.mxu0 0.0
    %2538 = vmatpush.msra.mxu0 0.0
    %2539 = vmatpush.msra.mxu0 0.0
    %2540 = vmatpush.msra.mxu0 %v2137
    %2541 = vmatpush.msra.mxu0 %v2121
    %2542 = vmatmul.f32.gmra.mxu0 %v2176
    %v2543 = vpop.f32.mrf.mxu0
    %v2544 = vadd.f32 %v2158, %v2543
    %2545 = vmatmul.f32.gmra.mxu0 %v2179
    %v2546 = vpop.f32.mrf.mxu0
    %v2547 = vadd.f32 %v2158, %v2546
    %2548 = vdwg.mxu0
    %v2549 = vmax.f32 %v2199, 0.0
    %v2550 = vmax.f32 %v2222, 0.0
    %v2551 = vmax.f32 %v2245, 0.0
    %v2552 = vmax.f32 %v2268, 0.0
    %v2553 = vmax.f32 %v2291, 0.0
    %v2554 = vmax.f32 %v2314, 0.0
    %v2555 = vmax.f32 %v2337, 0.0
    %v2556 = vmax.f32 %v2360, 0.0
    %v2557 = vmax.f32 %v2383, 0.0
    %v2558 = vmax.f32 %v2406, 0.0
    %v2559 = vmax.f32 %v2429, 0.0
    %v2560 = vmax.f32 %v2452, 0.0
    %v2561 = vmax.f32 %v2475, 0.0
    %v2562 = vmax.f32 %v2498, 0.0
    %v2563 = vmax.f32 %v2521, 0.0
    %v2564 = vmax.f32 %v2544, 0.0
    %v2565 = vmax.f32 %v2202, 0.0
    %v2566 = vmax.f32 %v2225, 0.0
    %v2567 = vmax.f32 %v2248, 0.0
    %v2568 = vmax.f32 %v2271, 0.0
    %v2569 = vmax.f32 %v2294, 0.0
    %v2570 = vmax.f32 %v2317, 0.0
    %v2571 = vmax.f32 %v2340, 0.0
    %v2572 = vmax.f32 %v2363, 0.0
    %v2573 = vmax.f32 %v2386, 0.0
    %v2574 = vmax.f32 %v2409, 0.0
    %v2575 = vmax.f32 %v2432, 0.0
    %v2576 = vmax.f32 %v2455, 0.0
    %v2577 = vmax.f32 %v2478, 0.0
    %v2578 = vmax.f32 %v2501, 0.0
    %v2579 = vmax.f32 %v2524, 0.0
    %v2580 = vmax.f32 %v2547, 0.0
    %s2581 = scalar_lea.vmem %s17, 2048
    %v2582 = vld [vmem:[%s2581] sm:$0xff]
    %v2583 = vld [vmem:[%s2581 + $0x8] sm:$0xff]
    %v2584 = vld [vmem:[%s2581 + $0x10] sm:$0xff]
    %v2585 = vld [vmem:[%s2581 + $0x18] sm:$0xff]
    %v2586 = vld [vmem:[%s2581 + $0x20] sm:$0xff]
    %v2587 = vld [vmem:[%s2581 + $0x28] sm:$0xff]
    %v2588 = vld [vmem:[%s2581 + $0x30] sm:$0xff]
    %v2589 = vld [vmem:[%s2581 + $0x38] sm:$0xff]
    %v2590 = vld [vmem:[%s2581 + $0x40] sm:$0xff]
    %v2591 = vld [vmem:[%s2581 + $0x48] sm:$0xff]
    %v2592 = vld [vmem:[%s2581 + $0x50] sm:$0xff]
    %v2593 = vld [vmem:[%s2581 + $0x58] sm:$0xff]
    %v2594 = vld [vmem:[%s2581 + $0x60] sm:$0xff]
    %v2595 = vld [vmem:[%s2581 + $0x68] sm:$0xff]
    %v2596 = vld [vmem:[%s2581 + $0x70] sm:$0xff]
    %v2597 = vld [vmem:[%s2581 + $0x78] sm:$0xff]
    %v2598 = vld [vmem:[%s2581 + $0x80] sm:$0xff]
    %v2599 = vld [vmem:[%s2581 + $0x88] sm:$0xff]
    %v2600 = vld [vmem:[%s2581 + $0x90] sm:$0xff]
    %v2601 = vld [vmem:[%s2581 + $0x98] sm:$0xff]
    %v2602 = vld [vmem:[%s2581 + $0xa0] sm:$0xff]
    %v2603 = vld [vmem:[%s2581 + $0xa8] sm:$0xff]
    %v2604 = vld [vmem:[%s2581 + $0xb0] sm:$0xff]
    %v2605 = vld [vmem:[%s2581 + $0xb8] sm:$0xff]
    %v2606 = vld [vmem:[%s2581 + $0xc0] sm:$0xff]
    %v2607 = vld [vmem:[%s2581 + $0xc8] sm:$0xff]
    %v2608 = vld [vmem:[%s2581 + $0xd0] sm:$0xff]
    %v2609 = vld [vmem:[%s2581 + $0xd8] sm:$0xff]
    %v2610 = vld [vmem:[%s2581 + $0xe0] sm:$0xff]
    %v2611 = vld [vmem:[%s2581 + $0xe8] sm:$0xff]
    %v2612 = vld [vmem:[%s2581 + $0xf0] sm:$0xff]
    %v2613 = vld [vmem:[%s2581 + $0xf8] sm:$0xff]
    %v2614 = vld [vmem:[%s2581 + $0x100] sm:$0xff]
    %v2615 = vld [vmem:[%s2581 + $0x108] sm:$0xff]
    %v2616 = vld [vmem:[%s2581 + $0x110] sm:$0xff]
    %v2617 = vld [vmem:[%s2581 + $0x118] sm:$0xff]
    %v2618 = vld [vmem:[%s2581 + $0x120] sm:$0xff]
    %v2619 = vld [vmem:[%s2581 + $0x128] sm:$0xff]
    %v2620 = vld [vmem:[%s2581 + $0x130] sm:$0xff]
    %v2621 = vld [vmem:[%s2581 + $0x138] sm:$0xff]
    %v2622 = vld [vmem:[%s2581 + $0x140] sm:$0xff]
    %v2623 = vld [vmem:[%s2581 + $0x148] sm:$0xff]
    %v2624 = vld [vmem:[%s2581 + $0x150] sm:$0xff]
    %v2625 = vld [vmem:[%s2581 + $0x158] sm:$0xff]
    %v2626 = vld [vmem:[%s2581 + $0x160] sm:$0xff]
    %v2627 = vld [vmem:[%s2581 + $0x168] sm:$0xff]
    %v2628 = vld [vmem:[%s2581 + $0x170] sm:$0xff]
    %v2629 = vld [vmem:[%s2581 + $0x178] sm:$0xff]
    %v2630 = vld [vmem:[%s2581 + $0x180] sm:$0xff]
    %v2631 = vld [vmem:[%s2581 + $0x188] sm:$0xff]
    %v2632 = vld [vmem:[%s2581 + $0x190] sm:$0xff]
    %v2633 = vld [vmem:[%s2581 + $0x198] sm:$0xff]
    %v2634 = vld [vmem:[%s2581 + $0x1a0] sm:$0xff]
    %v2635 = vld [vmem:[%s2581 + $0x1a8] sm:$0xff]
    %v2636 = vld [vmem:[%s2581 + $0x1b0] sm:$0xff]
    %v2637 = vld [vmem:[%s2581 + $0x1b8] sm:$0xff]
    %v2638 = vld [vmem:[%s2581 + $0x1c0] sm:$0xff]
    %v2639 = vld [vmem:[%s2581 + $0x1c8] sm:$0xff]
    %v2640 = vld [vmem:[%s2581 + $0x1d0] sm:$0xff]
    %v2641 = vld [vmem:[%s2581 + $0x1d8] sm:$0xff]
    %v2642 = vld [vmem:[%s2581 + $0x1e0] sm:$0xff]
    %v2643 = vld [vmem:[%s2581 + $0x1e8] sm:$0xff]
    %v2644 = vld [vmem:[%s2581 + $0x1f0] sm:$0xff]
    %v2645 = vld [vmem:[%s2581 + $0x1f8] sm:$0xff]
    %v2646 = vld [vmem:[%s2581 + $0x200] sm:$0xff]
    %v2647 = vld [vmem:[%s2581 + $0x208] sm:$0xff]
    %v2648 = vld [vmem:[%s2581 + $0x210] sm:$0xff]
    %v2649 = vld [vmem:[%s2581 + $0x218] sm:$0xff]
    %v2650 = vld [vmem:[%s2581 + $0x220] sm:$0xff]
    %v2651 = vld [vmem:[%s2581 + $0x228] sm:$0xff]
    %v2652 = vld [vmem:[%s2581 + $0x230] sm:$0xff]
    %v2653 = vld [vmem:[%s2581 + $0x238] sm:$0xff]
    %v2654 = vld [vmem:[%s2581 + $0x240] sm:$0xff]
    %v2655 = vld [vmem:[%s2581 + $0x248] sm:$0xff]
    %v2656 = vld [vmem:[%s2581 + $0x250] sm:$0xff]
    %v2657 = vld [vmem:[%s2581 + $0x258] sm:$0xff]
    %v2658 = vld [vmem:[%s2581 + $0x260] sm:$0xff]
    %v2659 = vld [vmem:[%s2581 + $0x268] sm:$0xff]
    %v2660 = vld [vmem:[%s2581 + $0x270] sm:$0xff]
    %v2661 = vld [vmem:[%s2581 + $0x278] sm:$0xff]
    %v2662 = vld [vmem:[%s2581 + $0x280] sm:$0xff]
    %v2663 = vld [vmem:[%s2581 + $0x288] sm:$0xff]
    %v2664 = vld [vmem:[%s2581 + $0x290] sm:$0xff]
    %v2665 = vld [vmem:[%s2581 + $0x298] sm:$0xff]
    %v2666 = vld [vmem:[%s2581 + $0x2a0] sm:$0xff]
    %v2667 = vld [vmem:[%s2581 + $0x2a8] sm:$0xff]
    %v2668 = vld [vmem:[%s2581 + $0x2b0] sm:$0xff]
    %v2669 = vld [vmem:[%s2581 + $0x2b8] sm:$0xff]
    %v2670 = vld [vmem:[%s2581 + $0x2c0] sm:$0xff]
    %v2671 = vld [vmem:[%s2581 + $0x2c8] sm:$0xff]
    %v2672 = vld [vmem:[%s2581 + $0x2d0] sm:$0xff]
    %v2673 = vld [vmem:[%s2581 + $0x2d8] sm:$0xff]
    %v2674 = vld [vmem:[%s2581 + $0x2e0] sm:$0xff]
    %v2675 = vld [vmem:[%s2581 + $0x2e8] sm:$0xff]
    %v2676 = vld [vmem:[%s2581 + $0x2f0] sm:$0xff]
    %v2677 = vld [vmem:[%s2581 + $0x2f8] sm:$0xff]
    %v2678 = vld [vmem:[%s2581 + $0x300] sm:$0xff]
    %v2679 = vld [vmem:[%s2581 + $0x308] sm:$0xff]
    %v2680 = vld [vmem:[%s2581 + $0x310] sm:$0xff]
    %v2681 = vld [vmem:[%s2581 + $0x318] sm:$0xff]
    %v2682 = vld [vmem:[%s2581 + $0x320] sm:$0xff]
    %v2683 = vld [vmem:[%s2581 + $0x328] sm:$0xff]
    %v2684 = vld [vmem:[%s2581 + $0x330] sm:$0xff]
    %v2685 = vld [vmem:[%s2581 + $0x338] sm:$0xff]
    %v2686 = vld [vmem:[%s2581 + $0x340] sm:$0xff]
    %v2687 = vld [vmem:[%s2581 + $0x348] sm:$0xff]
    %v2688 = vld [vmem:[%s2581 + $0x350] sm:$0xff]
    %v2689 = vld [vmem:[%s2581 + $0x358] sm:$0xff]
    %v2690 = vld [vmem:[%s2581 + $0x360] sm:$0xff]
    %v2691 = vld [vmem:[%s2581 + $0x368] sm:$0xff]
    %v2692 = vld [vmem:[%s2581 + $0x370] sm:$0xff]
    %v2693 = vld [vmem:[%s2581 + $0x378] sm:$0xff]
    %v2694 = vld [vmem:[%s2581 + $0x380] sm:$0xff]
    %v2695 = vld [vmem:[%s2581 + $0x388] sm:$0xff]
    %v2696 = vld [vmem:[%s2581 + $0x390] sm:$0xff]
    %v2697 = vld [vmem:[%s2581 + $0x398] sm:$0xff]
    %v2698 = vld [vmem:[%s2581 + $0x3a0] sm:$0xff]
    %v2699 = vld [vmem:[%s2581 + $0x3a8] sm:$0xff]
    %v2700 = vld [vmem:[%s2581 + $0x3b0] sm:$0xff]
    %v2701 = vld [vmem:[%s2581 + $0x3b8] sm:$0xff]
    %v2702 = vld [vmem:[%s2581 + $0x3c0] sm:$0xff]
    %v2703 = vld [vmem:[%s2581 + $0x3c8] sm:$0xff]
    %v2704 = vld [vmem:[%s2581 + $0x3d0] sm:$0xff]
    %v2705 = vld [vmem:[%s2581 + $0x3d8] sm:$0xff]
    %v2706 = vld [vmem:[%s2581 + $0x3e0] sm:$0xff]
    %v2707 = vld [vmem:[%s2581 + $0x3e8] sm:$0xff]
    %v2708 = vld [vmem:[%s2581 + $0x3f0] sm:$0xff]
    %v2709 = vld [vmem:[%s2581 + $0x3f8] sm:$0xff]
    %v2710 = vld [vmem:[%s2581 + $0x400] sm:$0xff]
    %v2711 = vld [vmem:[%s2581 + $0x408] sm:$0xff]
    %v2712 = vld [vmem:[%s2581 + $0x410] sm:$0xff]
    %v2713 = vld [vmem:[%s2581 + $0x418] sm:$0xff]
    %v2714 = vld [vmem:[%s2581 + $0x420] sm:$0xff]
    %v2715 = vld [vmem:[%s2581 + $0x428] sm:$0xff]
    %v2716 = vld [vmem:[%s2581 + $0x430] sm:$0xff]
    %v2717 = vld [vmem:[%s2581 + $0x438] sm:$0xff]
    %v2718 = vld [vmem:[%s2581 + $0x440] sm:$0xff]
    %v2719 = vld [vmem:[%s2581 + $0x448] sm:$0xff]
    %v2720 = vld [vmem:[%s2581 + $0x450] sm:$0xff]
    %v2721 = vld [vmem:[%s2581 + $0x458] sm:$0xff]
    %v2722 = vld [vmem:[%s2581 + $0x460] sm:$0xff]
    %v2723 = vld [vmem:[%s2581 + $0x468] sm:$0xff]
    %v2724 = vld [vmem:[%s2581 + $0x470] sm:$0xff]
    %v2725 = vld [vmem:[%s2581 + $0x478] sm:$0xff]
    %v2726 = vld [vmem:[%s2581 + $0x480] sm:$0xff]
    %v2727 = vld [vmem:[%s2581 + $0x488] sm:$0xff]
    %v2728 = vld [vmem:[%s2581 + $0x490] sm:$0xff]
    %v2729 = vld [vmem:[%s2581 + $0x498] sm:$0xff]
    %v2730 = vld [vmem:[%s2581 + $0x4a0] sm:$0xff]
    %v2731 = vld [vmem:[%s2581 + $0x4a8] sm:$0xff]
    %v2732 = vld [vmem:[%s2581 + $0x4b0] sm:$0xff]
    %v2733 = vld [vmem:[%s2581 + $0x4b8] sm:$0xff]
    %v2734 = vld [vmem:[%s2581 + $0x4c0] sm:$0xff]
    %v2735 = vld [vmem:[%s2581 + $0x4c8] sm:$0xff]
    %v2736 = vld [vmem:[%s2581 + $0x4d0] sm:$0xff]
    %v2737 = vld [vmem:[%s2581 + $0x4d8] sm:$0xff]
    %v2738 = vld [vmem:[%s2581 + $0x4e0] sm:$0xff]
    %v2739 = vld [vmem:[%s2581 + $0x4e8] sm:$0xff]
    %v2740 = vld [vmem:[%s2581 + $0x4f0] sm:$0xff]
    %v2741 = vld [vmem:[%s2581 + $0x4f8] sm:$0xff]
    %v2742 = vld [vmem:[%s2581 + $0x500] sm:$0xff]
    %v2743 = vld [vmem:[%s2581 + $0x508] sm:$0xff]
    %v2744 = vld [vmem:[%s2581 + $0x510] sm:$0xff]
    %v2745 = vld [vmem:[%s2581 + $0x518] sm:$0xff]
    %v2746 = vld [vmem:[%s2581 + $0x520] sm:$0xff]
    %v2747 = vld [vmem:[%s2581 + $0x528] sm:$0xff]
    %v2748 = vld [vmem:[%s2581 + $0x530] sm:$0xff]
    %v2749 = vld [vmem:[%s2581 + $0x538] sm:$0xff]
    %v2750 = vld [vmem:[%s2581 + $0x540] sm:$0xff]
    %v2751 = vld [vmem:[%s2581 + $0x548] sm:$0xff]
    %v2752 = vld [vmem:[%s2581 + $0x550] sm:$0xff]
    %v2753 = vld [vmem:[%s2581 + $0x558] sm:$0xff]
    %v2754 = vld [vmem:[%s2581 + $0x560] sm:$0xff]
    %v2755 = vld [vmem:[%s2581 + $0x568] sm:$0xff]
    %v2756 = vld [vmem:[%s2581 + $0x570] sm:$0xff]
    %v2757 = vld [vmem:[%s2581 + $0x578] sm:$0xff]
    %v2758 = vld [vmem:[%s2581 + $0x580] sm:$0xff]
    %v2759 = vld [vmem:[%s2581 + $0x588] sm:$0xff]
    %v2760 = vld [vmem:[%s2581 + $0x590] sm:$0xff]
    %v2761 = vld [vmem:[%s2581 + $0x598] sm:$0xff]
    %v2762 = vld [vmem:[%s2581 + $0x5a0] sm:$0xff]
    %v2763 = vld [vmem:[%s2581 + $0x5a8] sm:$0xff]
    %v2764 = vld [vmem:[%s2581 + $0x5b0] sm:$0xff]
    %v2765 = vld [vmem:[%s2581 + $0x5b8] sm:$0xff]
    %v2766 = vld [vmem:[%s2581 + $0x5c0] sm:$0xff]
    %v2767 = vld [vmem:[%s2581 + $0x5c8] sm:$0xff]
    %v2768 = vld [vmem:[%s2581 + $0x5d0] sm:$0xff]
    %v2769 = vld [vmem:[%s2581 + $0x5d8] sm:$0xff]
    %v2770 = vld [vmem:[%s2581 + $0x5e0] sm:$0xff]
    %v2771 = vld [vmem:[%s2581 + $0x5e8] sm:$0xff]
    %v2772 = vld [vmem:[%s2581 + $0x5f0] sm:$0xff]
    %v2773 = vld [vmem:[%s2581 + $0x5f8] sm:$0xff]
    %v2774 = vld [vmem:[%s2581 + $0x600] sm:$0xff]
    %v2775 = vld [vmem:[%s2581 + $0x608] sm:$0xff]
    %v2776 = vld [vmem:[%s2581 + $0x610] sm:$0xff]
    %v2777 = vld [vmem:[%s2581 + $0x618] sm:$0xff]
    %v2778 = vld [vmem:[%s2581 + $0x620] sm:$0xff]
    %v2779 = vld [vmem:[%s2581 + $0x628] sm:$0xff]
    %v2780 = vld [vmem:[%s2581 + $0x630] sm:$0xff]
    %v2781 = vld [vmem:[%s2581 + $0x638] sm:$0xff]
    %v2782 = vld [vmem:[%s2581 + $0x640] sm:$0xff]
    %v2783 = vld [vmem:[%s2581 + $0x648] sm:$0xff]
    %v2784 = vld [vmem:[%s2581 + $0x650] sm:$0xff]
    %v2785 = vld [vmem:[%s2581 + $0x658] sm:$0xff]
    %v2786 = vld [vmem:[%s2581 + $0x660] sm:$0xff]
    %v2787 = vld [vmem:[%s2581 + $0x668] sm:$0xff]
    %v2788 = vld [vmem:[%s2581 + $0x670] sm:$0xff]
    %v2789 = vld [vmem:[%s2581 + $0x678] sm:$0xff]
    %v2790 = vld [vmem:[%s2581 + $0x680] sm:$0xff]
    %v2791 = vld [vmem:[%s2581 + $0x688] sm:$0xff]
    %v2792 = vld [vmem:[%s2581 + $0x690] sm:$0xff]
    %v2793 = vld [vmem:[%s2581 + $0x698] sm:$0xff]
    %v2794 = vld [vmem:[%s2581 + $0x6a0] sm:$0xff]
    %v2795 = vld [vmem:[%s2581 + $0x6a8] sm:$0xff]
    %v2796 = vld [vmem:[%s2581 + $0x6b0] sm:$0xff]
    %v2797 = vld [vmem:[%s2581 + $0x6b8] sm:$0xff]
    %v2798 = vld [vmem:[%s2581 + $0x6c0] sm:$0xff]
    %v2799 = vld [vmem:[%s2581 + $0x6c8] sm:$0xff]
    %v2800 = vld [vmem:[%s2581 + $0x6d0] sm:$0xff]
    %v2801 = vld [vmem:[%s2581 + $0x6d8] sm:$0xff]
    %v2802 = vld [vmem:[%s2581 + $0x6e0] sm:$0xff]
    %v2803 = vld [vmem:[%s2581 + $0x6e8] sm:$0xff]
    %v2804 = vld [vmem:[%s2581 + $0x6f0] sm:$0xff]
    %v2805 = vld [vmem:[%s2581 + $0x6f8] sm:$0xff]
    %v2806 = vld [vmem:[%s2581 + $0x700] sm:$0xff]
    %v2807 = vld [vmem:[%s2581 + $0x708] sm:$0xff]
    %v2808 = vld [vmem:[%s2581 + $0x710] sm:$0xff]
    %v2809 = vld [vmem:[%s2581 + $0x718] sm:$0xff]
    %v2810 = vld [vmem:[%s2581 + $0x720] sm:$0xff]
    %v2811 = vld [vmem:[%s2581 + $0x728] sm:$0xff]
    %v2812 = vld [vmem:[%s2581 + $0x730] sm:$0xff]
    %v2813 = vld [vmem:[%s2581 + $0x738] sm:$0xff]
    %v2814 = vld [vmem:[%s2581 + $0x740] sm:$0xff]
    %v2815 = vld [vmem:[%s2581 + $0x748] sm:$0xff]
    %v2816 = vld [vmem:[%s2581 + $0x750] sm:$0xff]
    %v2817 = vld [vmem:[%s2581 + $0x758] sm:$0xff]
    %v2818 = vld [vmem:[%s2581 + $0x760] sm:$0xff]
    %v2819 = vld [vmem:[%s2581 + $0x768] sm:$0xff]
    %v2820 = vld [vmem:[%s2581 + $0x770] sm:$0xff]
    %v2821 = vld [vmem:[%s2581 + $0x778] sm:$0xff]
    %v2822 = vld [vmem:[%s2581 + $0x780] sm:$0xff]
    %v2823 = vld [vmem:[%s2581 + $0x788] sm:$0xff]
    %v2824 = vld [vmem:[%s2581 + $0x790] sm:$0xff]
    %v2825 = vld [vmem:[%s2581 + $0x798] sm:$0xff]
    %v2826 = vld [vmem:[%s2581 + $0x7a0] sm:$0xff]
    %v2827 = vld [vmem:[%s2581 + $0x7a8] sm:$0xff]
    %v2828 = vld [vmem:[%s2581 + $0x7b0] sm:$0xff]
    %v2829 = vld [vmem:[%s2581 + $0x7b8] sm:$0xff]
    %v2830 = vld [vmem:[%s2581 + $0x7c0] sm:$0xff]
    %v2831 = vld [vmem:[%s2581 + $0x7c8] sm:$0xff]
    %v2832 = vld [vmem:[%s2581 + $0x7d0] sm:$0xff]
    %v2833 = vld [vmem:[%s2581 + $0x7d8] sm:$0xff]
    %v2834 = vld [vmem:[%s2581 + $0x7e0] sm:$0xff]
    %v2835 = vld [vmem:[%s2581 + $0x7e8] sm:$0xff]
    %v2836 = vld [vmem:[%s2581 + $0x7f0] sm:$0xff]
    %v2837 = vld [vmem:[%s2581 + $0x7f8] sm:$0xff]
    %s2838 = scalar_lea.vmem %s19, 1
    %v2839 = vld [vmem:[%s2838] sm:$0x1]
    %v2841 = vperm.slane %v2839, 0
    %2843 = vmatpush.msra.mxu0 %v2597
    %2844 = vmatpush.msra.mxu0 %v2596
    %2845 = vmatpush.msra.mxu0 %v2595
    %2846 = vmatpush.msra.mxu0 %v2594
    %2847 = vmatpush.msra.mxu0 %v2593
    %2848 = vmatpush.msra.mxu0 %v2592
    %2849 = vmatpush.msra.mxu0 %v2591
    %2850 = vmatpush.msra.mxu0 %v2590
    %2851 = vmatpush.msra.mxu0 %v2589
    %2852 = vmatpush.msra.mxu0 %v2588
    %2853 = vmatpush.msra.mxu0 %v2587
    %2854 = vmatpush.msra.mxu0 %v2586
    %2855 = vmatpush.msra.mxu0 %v2585
    %2856 = vmatpush.msra.mxu0 %v2584
    %2857 = vmatpush.msra.mxu0 %v2583
    %2858 = vmatpush.msra.mxu0 %v2582
    %2859 = vmatmul.f32.gmra.mxu0 %v2549
    %v2860 = vpop.f32.mrf.mxu0
    %v2861 = vadd.f32 %v2841, %v2860
    %2862 = vmatmul.f32.gmra.mxu0 %v2565
    %v2863 = vpop.f32.mrf.mxu0
    %v2864 = vadd.f32 %v2841, %v2863
    %2865 = vdwg.mxu0
    %2866 = vmatpush.msra.mxu0 %v2613
    %2867 = vmatpush.msra.mxu0 %v2612
    %2868 = vmatpush.msra.mxu0 %v2611
    %2869 = vmatpush.msra.mxu0 %v2610
    %2870 = vmatpush.msra.mxu0 %v2609
    %2871 = vmatpush.msra.mxu0 %v2608
    %2872 = vmatpush.msra.mxu0 %v2607
    %2873 = vmatpush.msra.mxu0 %v2606
    %2874 = vmatpush.msra.mxu0 %v2605
    %2875 = vmatpush.msra.mxu0 %v2604
    %2876 = vmatpush.msra.mxu0 %v2603
    %2877 = vmatpush.msra.mxu0 %v2602
    %2878 = vmatpush.msra.mxu0 %v2601
    %2879 = vmatpush.msra.mxu0 %v2600
    %2880 = vmatpush.msra.mxu0 %v2599
    %2881 = vmatpush.msra.mxu0 %v2598
    %2882 = vmatmul.f32.gmra.mxu0 %v2550
    %v2883 = vpop.f32.mrf.mxu0
    %v2884 = vadd.f32 %v2861, %v2883
    %2885 = vmatmul.f32.gmra.mxu0 %v2566
    %v2886 = vpop.f32.mrf.mxu0
    %v2887 = vadd.f32 %v2864, %v2886
    %2888 = vdwg.mxu0
    %2889 = vmatpush.msra.mxu0 %v2629
    %2890 = vmatpush.msra.mxu0 %v2628
    %2891 = vmatpush.msra.mxu0 %v2627
    %2892 = vmatpush.msra.mxu0 %v2626
    %2893 = vmatpush.msra.mxu0 %v2625
    %2894 = vmatpush.msra.mxu0 %v2624
    %2895 = vmatpush.msra.mxu0 %v2623
    %2896 = vmatpush.msra.mxu0 %v2622
    %2897 = vmatpush.msra.mxu0 %v2621
    %2898 = vmatpush.msra.mxu0 %v2620
    %2899 = vmatpush.msra.mxu0 %v2619
    %2900 = vmatpush.msra.mxu0 %v2618
    %2901 = vmatpush.msra.mxu0 %v2617
    %2902 = vmatpush.msra.mxu0 %v2616
    %2903 = vmatpush.msra.mxu0 %v2615
    %2904 = vmatpush.msra.mxu0 %v2614
    %2905 = vmatmul.f32.gmra.mxu0 %v2551
    %v2906 = vpop.f32.mrf.mxu0
    %v2907 = vadd.f32 %v2884, %v2906
    %2908 = vmatmul.f32.gmra.mxu0 %v2567
    %v2909 = vpop.f32.mrf.mxu0
    %v2910 = vadd.f32 %v2887, %v2909
    %2911 = vdwg.mxu0
    %2912 = vmatpush.msra.mxu0 %v2645
    %2913 = vmatpush.msra.mxu0 %v2644
    %2914 = vmatpush.msra.mxu0 %v2643
    %2915 = vmatpush.msra.mxu0 %v2642
    %2916 = vmatpush.msra.mxu0 %v2641
    %2917 = vmatpush.msra.mxu0 %v2640
    %2918 = vmatpush.msra.mxu0 %v2639
    %2919 = vmatpush.msra.mxu0 %v2638
    %2920 = vmatpush.msra.mxu0 %v2637
    %2921 = vmatpush.msra.mxu0 %v2636
    %2922 = vmatpush.msra.mxu0 %v2635
    %2923 = vmatpush.msra.mxu0 %v2634
    %2924 = vmatpush.msra.mxu0 %v2633
    %2925 = vmatpush.msra.mxu0 %v2632
    %2926 = vmatpush.msra.mxu0 %v2631
    %2927 = vmatpush.msra.mxu0 %v2630
    %2928 = vmatmul.f32.gmra.mxu0 %v2552
    %v2929 = vpop.f32.mrf.mxu0
    %v2930 = vadd.f32 %v2907, %v2929
    %2931 = vmatmul.f32.gmra.mxu0 %v2568
    %v2932 = vpop.f32.mrf.mxu0
    %v2933 = vadd.f32 %v2910, %v2932
    %2934 = vdwg.mxu0
    %2935 = vmatpush.msra.mxu0 %v2661
    %2936 = vmatpush.msra.mxu0 %v2660
    %2937 = vmatpush.msra.mxu0 %v2659
    %2938 = vmatpush.msra.mxu0 %v2658
    %2939 = vmatpush.msra.mxu0 %v2657
    %2940 = vmatpush.msra.mxu0 %v2656
    %2941 = vmatpush.msra.mxu0 %v2655
    %2942 = vmatpush.msra.mxu0 %v2654
    %2943 = vmatpush.msra.mxu0 %v2653
    %2944 = vmatpush.msra.mxu0 %v2652
    %2945 = vmatpush.msra.mxu0 %v2651
    %2946 = vmatpush.msra.mxu0 %v2650
    %2947 = vmatpush.msra.mxu0 %v2649
    %2948 = vmatpush.msra.mxu0 %v2648
    %2949 = vmatpush.msra.mxu0 %v2647
    %2950 = vmatpush.msra.mxu0 %v2646
    %2951 = vmatmul.f32.gmra.mxu0 %v2553
    %v2952 = vpop.f32.mrf.mxu0
    %v2953 = vadd.f32 %v2930, %v2952
    %2954 = vmatmul.f32.gmra.mxu0 %v2569
    %v2955 = vpop.f32.mrf.mxu0
    %v2956 = vadd.f32 %v2933, %v2955
    %2957 = vdwg.mxu0
    %2958 = vmatpush.msra.mxu0 %v2677
    %2959 = vmatpush.msra.mxu0 %v2676
    %2960 = vmatpush.msra.mxu0 %v2675
    %2961 = vmatpush.msra.mxu0 %v2674
    %2962 = vmatpush.msra.mxu0 %v2673
    %2963 = vmatpush.msra.mxu0 %v2672
    %2964 = vmatpush.msra.mxu0 %v2671
    %2965 = vmatpush.msra.mxu0 %v2670
    %2966 = vmatpush.msra.mxu0 %v2669
    %2967 = vmatpush.msra.mxu0 %v2668
    %2968 = vmatpush.msra.mxu0 %v2667
    %2969 = vmatpush.msra.mxu0 %v2666
    %2970 = vmatpush.msra.mxu0 %v2665
    %2971 = vmatpush.msra.mxu0 %v2664
    %2972 = vmatpush.msra.mxu0 %v2663
    %2973 = vmatpush.msra.mxu0 %v2662
    %2974 = vmatmul.f32.gmra.mxu0 %v2554
    %v2975 = vpop.f32.mrf.mxu0
    %v2976 = vadd.f32 %v2953, %v2975
    %2977 = vmatmul.f32.gmra.mxu0 %v2570
    %v2978 = vpop.f32.mrf.mxu0
    %v2979 = vadd.f32 %v2956, %v2978
    %2980 = vdwg.mxu0
    %2981 = vmatpush.msra.mxu0 %v2693
    %2982 = vmatpush.msra.mxu0 %v2692
    %2983 = vmatpush.msra.mxu0 %v2691
    %2984 = vmatpush.msra.mxu0 %v2690
    %2985 = vmatpush.msra.mxu0 %v2689
    %2986 = vmatpush.msra.mxu0 %v2688
    %2987 = vmatpush.msra.mxu0 %v2687
    %2988 = vmatpush.msra.mxu0 %v2686
    %2989 = vmatpush.msra.mxu0 %v2685
    %2990 = vmatpush.msra.mxu0 %v2684
    %2991 = vmatpush.msra.mxu0 %v2683
    %2992 = vmatpush.msra.mxu0 %v2682
    %2993 = vmatpush.msra.mxu0 %v2681
    %2994 = vmatpush.msra.mxu0 %v2680
    %2995 = vmatpush.msra.mxu0 %v2679
    %2996 = vmatpush.msra.mxu0 %v2678
    %2997 = vmatmul.f32.gmra.mxu0 %v2555
    %v2998 = vpop.f32.mrf.mxu0
    %v2999 = vadd.f32 %v2976, %v2998
    %3000 = vmatmul.f32.gmra.mxu0 %v2571
    %v3001 = vpop.f32.mrf.mxu0
    %v3002 = vadd.f32 %v2979, %v3001
    %3003 = vdwg.mxu0
    %3004 = vmatpush.msra.mxu0 %v2709
    %3005 = vmatpush.msra.mxu0 %v2708
    %3006 = vmatpush.msra.mxu0 %v2707
    %3007 = vmatpush.msra.mxu0 %v2706
    %3008 = vmatpush.msra.mxu0 %v2705
    %3009 = vmatpush.msra.mxu0 %v2704
    %3010 = vmatpush.msra.mxu0 %v2703
    %3011 = vmatpush.msra.mxu0 %v2702
    %3012 = vmatpush.msra.mxu0 %v2701
    %3013 = vmatpush.msra.mxu0 %v2700
    %3014 = vmatpush.msra.mxu0 %v2699
    %3015 = vmatpush.msra.mxu0 %v2698
    %3016 = vmatpush.msra.mxu0 %v2697
    %3017 = vmatpush.msra.mxu0 %v2696
    %3018 = vmatpush.msra.mxu0 %v2695
    %3019 = vmatpush.msra.mxu0 %v2694
    %3020 = vmatmul.f32.gmra.mxu0 %v2556
    %v3021 = vpop.f32.mrf.mxu0
    %v3022 = vadd.f32 %v2999, %v3021
    %3023 = vmatmul.f32.gmra.mxu0 %v2572
    %v3024 = vpop.f32.mrf.mxu0
    %v3025 = vadd.f32 %v3002, %v3024
    %3026 = vdwg.mxu0
    %3027 = vmatpush.msra.mxu0 %v2725
    %3028 = vmatpush.msra.mxu0 %v2724
    %3029 = vmatpush.msra.mxu0 %v2723
    %3030 = vmatpush.msra.mxu0 %v2722
    %3031 = vmatpush.msra.mxu0 %v2721
    %3032 = vmatpush.msra.mxu0 %v2720
    %3033 = vmatpush.msra.mxu0 %v2719
    %3034 = vmatpush.msra.mxu0 %v2718
    %3035 = vmatpush.msra.mxu0 %v2717
    %3036 = vmatpush.msra.mxu0 %v2716
    %3037 = vmatpush.msra.mxu0 %v2715
    %3038 = vmatpush.msra.mxu0 %v2714
    %3039 = vmatpush.msra.mxu0 %v2713
    %3040 = vmatpush.msra.mxu0 %v2712
    %3041 = vmatpush.msra.mxu0 %v2711
    %3042 = vmatpush.msra.mxu0 %v2710
    %3043 = vmatmul.f32.gmra.mxu0 %v2557
    %v3044 = vpop.f32.mrf.mxu0
    %v3045 = vadd.f32 %v3022, %v3044
    %3046 = vmatmul.f32.gmra.mxu0 %v2573
    %v3047 = vpop.f32.mrf.mxu0
    %v3048 = vadd.f32 %v3025, %v3047
    %3049 = vdwg.mxu0
    %3050 = vmatpush.msra.mxu0 %v2741
    %3051 = vmatpush.msra.mxu0 %v2740
    %3052 = vmatpush.msra.mxu0 %v2739
    %3053 = vmatpush.msra.mxu0 %v2738
    %3054 = vmatpush.msra.mxu0 %v2737
    %3055 = vmatpush.msra.mxu0 %v2736
    %3056 = vmatpush.msra.mxu0 %v2735
    %3057 = vmatpush.msra.mxu0 %v2734
    %3058 = vmatpush.msra.mxu0 %v2733
    %3059 = vmatpush.msra.mxu0 %v2732
    %3060 = vmatpush.msra.mxu0 %v2731
    %3061 = vmatpush.msra.mxu0 %v2730
    %3062 = vmatpush.msra.mxu0 %v2729
    %3063 = vmatpush.msra.mxu0 %v2728
    %3064 = vmatpush.msra.mxu0 %v2727
    %3065 = vmatpush.msra.mxu0 %v2726
    %3066 = vmatmul.f32.gmra.mxu0 %v2558
    %v3067 = vpop.f32.mrf.mxu0
    %v3068 = vadd.f32 %v3045, %v3067
    %3069 = vmatmul.f32.gmra.mxu0 %v2574
    %v3070 = vpop.f32.mrf.mxu0
    %v3071 = vadd.f32 %v3048, %v3070
    %3072 = vdwg.mxu0
    %3073 = vmatpush.msra.mxu0 %v2757
    %3074 = vmatpush.msra.mxu0 %v2756
    %3075 = vmatpush.msra.mxu0 %v2755
    %3076 = vmatpush.msra.mxu0 %v2754
    %3077 = vmatpush.msra.mxu0 %v2753
    %3078 = vmatpush.msra.mxu0 %v2752
    %3079 = vmatpush.msra.mxu0 %v2751
    %3080 = vmatpush.msra.mxu0 %v2750
    %3081 = vmatpush.msra.mxu0 %v2749
    %3082 = vmatpush.msra.mxu0 %v2748
    %3083 = vmatpush.msra.mxu0 %v2747
    %3084 = vmatpush.msra.mxu0 %v2746
    %3085 = vmatpush.msra.mxu0 %v2745
    %3086 = vmatpush.msra.mxu0 %v2744
    %3087 = vmatpush.msra.mxu0 %v2743
    %3088 = vmatpush.msra.mxu0 %v2742
    %3089 = vmatmul.f32.gmra.mxu0 %v2559
    %v3090 = vpop.f32.mrf.mxu0
    %v3091 = vadd.f32 %v3068, %v3090
    %3092 = vmatmul.f32.gmra.mxu0 %v2575
    %v3093 = vpop.f32.mrf.mxu0
    %v3094 = vadd.f32 %v3071, %v3093
    %3095 = vdwg.mxu0
    %3096 = vmatpush.msra.mxu0 %v2773
    %3097 = vmatpush.msra.mxu0 %v2772
    %3098 = vmatpush.msra.mxu0 %v2771
    %3099 = vmatpush.msra.mxu0 %v2770
    %3100 = vmatpush.msra.mxu0 %v2769
    %3101 = vmatpush.msra.mxu0 %v2768
    %3102 = vmatpush.msra.mxu0 %v2767
    %3103 = vmatpush.msra.mxu0 %v2766
    %3104 = vmatpush.msra.mxu0 %v2765
    %3105 = vmatpush.msra.mxu0 %v2764
    %3106 = vmatpush.msra.mxu0 %v2763
    %3107 = vmatpush.msra.mxu0 %v2762
    %3108 = vmatpush.msra.mxu0 %v2761
    %3109 = vmatpush.msra.mxu0 %v2760
    %3110 = vmatpush.msra.mxu0 %v2759
    %3111 = vmatpush.msra.mxu0 %v2758
    %3112 = vmatmul.f32.gmra.mxu0 %v2560
    %v3113 = vpop.f32.mrf.mxu0
    %v3114 = vadd.f32 %v3091, %v3113
    %3115 = vmatmul.f32.gmra.mxu0 %v2576
    %v3116 = vpop.f32.mrf.mxu0
    %v3117 = vadd.f32 %v3094, %v3116
    %3118 = vdwg.mxu0
    %3119 = vmatpush.msra.mxu0 %v2789
    %3120 = vmatpush.msra.mxu0 %v2788
    %3121 = vmatpush.msra.mxu0 %v2787
    %3122 = vmatpush.msra.mxu0 %v2786
    %3123 = vmatpush.msra.mxu0 %v2785
    %3124 = vmatpush.msra.mxu0 %v2784
    %3125 = vmatpush.msra.mxu0 %v2783
    %3126 = vmatpush.msra.mxu0 %v2782
    %3127 = vmatpush.msra.mxu0 %v2781
    %3128 = vmatpush.msra.mxu0 %v2780
    %3129 = vmatpush.msra.mxu0 %v2779
    %3130 = vmatpush.msra.mxu0 %v2778
    %3131 = vmatpush.msra.mxu0 %v2777
    %3132 = vmatpush.msra.mxu0 %v2776
    %3133 = vmatpush.msra.mxu0 %v2775
    %3134 = vmatpush.msra.mxu0 %v2774
    %3135 = vmatmul.f32.gmra.mxu0 %v2561
    %v3136 = vpop.f32.mrf.mxu0
    %v3137 = vadd.f32 %v3114, %v3136
    %3138 = vmatmul.f32.gmra.mxu0 %v2577
    %v3139 = vpop.f32.mrf.mxu0
    %v3140 = vadd.f32 %v3117, %v3139
    %3141 = vdwg.mxu0
    %3142 = vmatpush.msra.mxu0 %v2805
    %3143 = vmatpush.msra.mxu0 %v2804
    %3144 = vmatpush.msra.mxu0 %v2803
    %3145 = vmatpush.msra.mxu0 %v2802
    %3146 = vmatpush.msra.mxu0 %v2801
    %3147 = vmatpush.msra.mxu0 %v2800
    %3148 = vmatpush.msra.mxu0 %v2799
    %3149 = vmatpush.msra.mxu0 %v2798
    %3150 = vmatpush.msra.mxu0 %v2797
    %3151 = vmatpush.msra.mxu0 %v2796
    %3152 = vmatpush.msra.mxu0 %v2795
    %3153 = vmatpush.msra.mxu0 %v2794
    %3154 = vmatpush.msra.mxu0 %v2793
    %3155 = vmatpush.msra.mxu0 %v2792
    %3156 = vmatpush.msra.mxu0 %v2791
    %3157 = vmatpush.msra.mxu0 %v2790
    %3158 = vmatmul.f32.gmra.mxu0 %v2562
    %v3159 = vpop.f32.mrf.mxu0
    %v3160 = vadd.f32 %v3137, %v3159
    %3161 = vmatmul.f32.gmra.mxu0 %v2578
    %v3162 = vpop.f32.mrf.mxu0
    %v3163 = vadd.f32 %v3140, %v3162
    %3164 = vdwg.mxu0
    %3165 = vmatpush.msra.mxu0 %v2821
    %3166 = vmatpush.msra.mxu0 %v2820
    %3167 = vmatpush.msra.mxu0 %v2819
    %3168 = vmatpush.msra.mxu0 %v2818
    %3169 = vmatpush.msra.mxu0 %v2817
    %3170 = vmatpush.msra.mxu0 %v2816
    %3171 = vmatpush.msra.mxu0 %v2815
    %3172 = vmatpush.msra.mxu0 %v2814
    %3173 = vmatpush.msra.mxu0 %v2813
    %3174 = vmatpush.msra.mxu0 %v2812
    %3175 = vmatpush.msra.mxu0 %v2811
    %3176 = vmatpush.msra.mxu0 %v2810
    %3177 = vmatpush.msra.mxu0 %v2809
    %3178 = vmatpush.msra.mxu0 %v2808
    %3179 = vmatpush.msra.mxu0 %v2807
    %3180 = vmatpush.msra.mxu0 %v2806
    %3181 = vmatmul.f32.gmra.mxu0 %v2563
    %v3182 = vpop.f32.mrf.mxu0
    %v3183 = vadd.f32 %v3160, %v3182
    %3184 = vmatmul.f32.gmra.mxu0 %v2579
    %v3185 = vpop.f32.mrf.mxu0
    %v3186 = vadd.f32 %v3163, %v3185
    %3187 = vdwg.mxu0
    %3188 = vmatpush.msra.mxu0 %v2837
    %3189 = vmatpush.msra.mxu0 %v2836
    %3190 = vmatpush.msra.mxu0 %v2835
    %3191 = vmatpush.msra.mxu0 %v2834
    %3192 = vmatpush.msra.mxu0 %v2833
    %3193 = vmatpush.msra.mxu0 %v2832
    %3194 = vmatpush.msra.mxu0 %v2831
    %3195 = vmatpush.msra.mxu0 %v2830
    %3196 = vmatpush.msra.mxu0 %v2829
    %3197 = vmatpush.msra.mxu0 %v2828
    %3198 = vmatpush.msra.mxu0 %v2827
    %3199 = vmatpush.msra.mxu0 %v2826
    %3200 = vmatpush.msra.mxu0 %v2825
    %3201 = vmatpush.msra.mxu0 %v2824
    %3202 = vmatpush.msra.mxu0 %v2823
    %3203 = vmatpush.msra.mxu0 %v2822
    %3204 = vmatmul.f32.gmra.mxu0 %v2564
    %v3205 = vpop.f32.mrf.mxu0
    %v3206 = vadd.f32 %v3183, %v3205
    %3207 = vmatmul.f32.gmra.mxu0 %v2580
    %v3208 = vpop.f32.mrf.mxu0
    %v3209 = vadd.f32 %v3186, %v3208
    %3210 = vdwg.mxu0
    %v3211 = vadd.f32 %v2103, %v3206
    %v3212 = vadd.f32 %v2104, %v3209
    %v3213 = vsel %vm208, %v3211, 0.0
    %3214 = vadd.xlane.f32.xlu0 %v3213
    %v3215 = vpop.xlane.xlu0 %3214
    %v3216 = vsel %vm208, %v3212, 0.0
    %3217 = vadd.xlane.f32.xlu0 %v3216
    %v3218 = vpop.xlane.xlu0 %3217
    %v3219 = vmul.f32 %v3215, %v526
    %v3220 = vmul.f32 %v3218, %v526
    %v3221 = vsub.f32 %v3211, %v3219
    %v3222 = vsub.f32 %v3212, %v3220
    %v3223 = vmul.f32 %v3221, %v3221
    %v3224 = vmul.f32 %v3222, %v3222
    %v3225 = vsel %vm208, %v3223, 0.0
    %3226 = vadd.xlane.f32.xlu0 %v3225
    %v3227 = vpop.xlane.xlu0 %3226
    %v3228 = vsel %vm208, %v3224, 0.0
    %3229 = vadd.xlane.f32.xlu0 %v3228
    %v3230 = vpop.xlane.xlu0 %3229
    %v3231 = vmul.f32 %v3227, %v526
    %v3232 = vmul.f32 %v3230, %v526
    %v3233 = vadd.f32 %v3231, 1e-05
    %v3234 = vadd.f32 %v3232, 1e-05
    %v3235 = vrsqrt.pop %v3233
    %v3236 = vmul.f32 %v3235, %v3233
    %v3237 = vmul.f32 %v3236, %v3235
    %v3238 = vmul.f32 0.5, %v3237
    %v3239 = vsub.f32 1.5, %v3238
    %v3240 = vmul.f32 %v3235, %v3239
    %vm3241 = vweird.f32 %v3233
    %vm3242 = vweird.f32 %v3235
    %vm3243 = vmor %vm3241, %vm3242
    %v3244 = vsel %vm3243, %v3235, %v3240
    %v3245 = vrsqrt.pop %v3234
    %v3246 = vmul.f32 %v3245, %v3234
    %v3247 = vmul.f32 %v3246, %v3245
    %v3248 = vmul.f32 0.5, %v3247
    %v3249 = vsub.f32 1.5, %v3248
    %v3250 = vmul.f32 %v3245, %v3249
    %vm3251 = vweird.f32 %v3234
    %vm3252 = vweird.f32 %v3245
    %vm3253 = vmor %vm3251, %vm3252
    %v3254 = vsel %vm3253, %v3245, %v3250
    %v3255 = vmul.f32 %v3221, %v3244
    %v3256 = vmul.f32 %v3222, %v3254
    %s3257 = scalar_lea.vmem %s25, 1
    %v3258 = vld [vmem:[%s3257] sm:$0x1]
    %v3260 = vperm.slane %v3258, 0
    %v3262 = vmul.f32 %v3255, %v3260
    %v3263 = vmul.f32 %v3256, %v3260
    %s3264 = scalar_lea.vmem %s27, 1
    %v3265 = vld [vmem:[%s3264] sm:$0x1]
    %v3267 = vperm.slane %v3265, 0
    %v3269 = vadd.f32 %v3262, %v3267
    %v3270 = vadd.f32 %v3263, %v3267
    %v3271 = vld [vmem:[%s33] sm:$0xff]
    %v3272 = vld [vmem:[%s33 + $0x8] sm:$0xff]
    %v3273 = vld [vmem:[%s35] sm:$0x1]
    %v3275 = vrot.slane %v3269, 7
    %v3276 = vsel %vm208, %v3275, 0
    %3278 = vmatpush.msra.mxu0 0.0
    %3279 = vmatpush.msra.mxu0 0.0
    %3280 = vmatpush.msra.mxu0 0.0
    %3281 = vmatpush.msra.mxu0 0.0
    %3282 = vmatpush.msra.mxu0 0.0
    %3283 = vmatpush.msra.mxu0 0.0
    %3284 = vmatpush.msra.mxu0 0.0
    %3285 = vmatpush.msra.mxu0 0.0
    %3286 = vmatpush.msra.mxu0 0.0
    %3287 = vmatpush.msra.mxu0 0.0
    %3288 = vmatpush.msra.mxu0 0.0
    %3289 = vmatpush.msra.mxu0 0.0
    %3290 = vmatpush.msra.mxu0 0.0
    %3291 = vmatpush.msra.mxu0 0.0
    %3292 = vmatpush.msra.mxu0 %v3272
    %3293 = vmatpush.msra.mxu0 %v3271
    %3294 = vmatmul.f32.gmra.mxu0 %v3276
    %v3295 = vpop.f32.mrf.mxu0
    %v3296 = vadd.f32 %v3273, %v3295
    %3297 = vdwg.mxu0
    %v3298 = vld [vmem:[%s37] sm:$0xff]
    %v3299 = vld [vmem:[%s37 + $0x8] sm:$0xff]
    %v3300 = vld [vmem:[%s39] sm:$0x1]
    %v3302 = vperm.slane %v3300, 0
    %v3304 = vsel %vm208, %v3269, 0
    %3306 = vmatpush.msra.mxu0 0.0
    %3307 = vmatpush.msra.mxu0 0.0
    %3308 = vmatpush.msra.mxu0 0.0
    %3309 = vmatpush.msra.mxu0 0.0
    %3310 = vmatpush.msra.mxu0 0.0
    %3311 = vmatpush.msra.mxu0 0.0
    %3312 = vmatpush.msra.mxu0 0.0
    %3313 = vmatpush.msra.mxu0 0.0
    %3314 = vmatpush.msra.mxu0 0.0
    %3315 = vmatpush.msra.mxu0 0.0
    %3316 = vmatpush.msra.mxu0 0.0
    %3317 = vmatpush.msra.mxu0 0.0
    %3318 = vmatpush.msra.mxu0 0.0
    %3319 = vmatpush.msra.mxu0 0.0
    %3320 = vmatpush.msra.mxu0 %v3299
    %3321 = vmatpush.msra.mxu0 %v3298
    %3322 = vmatmul.f32.gmra.mxu0 %v3304
    %v3323 = vpop.f32.mrf.mxu0
    %v3324 = vadd.f32 %v3302, %v3323
    %3325 = vdwg.mxu0
    %v3326 = vld [vmem:[%s41] sm:$0xff]
    %v3327 = vld [vmem:[%s41 + $0x8] sm:$0xff]
    %v3328 = vld [vmem:[%s43] sm:$0x1]
    %v3330 = vperm.slane %v3328, 0
    %3332 = vmatpush.msra.mxu0 0.0
    %3333 = vmatpush.msra.mxu0 0.0
    %3334 = vmatpush.msra.mxu0 0.0
    %3335 = vmatpush.msra.mxu0 0.0
    %3336 = vmatpush.msra.mxu0 0.0
    %3337 = vmatpush.msra.mxu0 0.0
    %3338 = vmatpush.msra.mxu0 0.0
    %3339 = vmatpush.msra.mxu0 0.0
    %3340 = vmatpush.msra.mxu0 0.0
    %3341 = vmatpush.msra.mxu0 0.0
    %3342 = vmatpush.msra.mxu0 0.0
    %3343 = vmatpush.msra.mxu0 0.0
    %3344 = vmatpush.msra.mxu0 0.0
    %3345 = vmatpush.msra.mxu0 0.0
    %3346 = vmatpush.msra.mxu0 %v3327
    %3347 = vmatpush.msra.mxu0 %v3326
    %3348 = vmatmul.f32.gmra.mxu0 %v3304
    %v3349 = vpop.f32.mrf.mxu0
    %v3350 = vadd.f32 %v3330, %v3349
    %3351 = vdwg.mxu0
    %v3353 = vsel %vm208, %v3296, 0
    %v3356 = vsel %vm208, %v3324, 0
    %3358 = vmatpush.xpose.msra.mxu0 0.0
    %3359 = vmatpush.xpose.msra.mxu0 0.0
    %3360 = vmatpush.xpose.msra.mxu0 0.0
    %3361 = vmatpush.xpose.msra.mxu0 0.0
    %3362 = vmatpush.xpose.msra.mxu0 0.0
    %3363 = vmatpush.xpose.msra.mxu0 0.0
    %3364 = vmatpush.xpose.msra.mxu0 0.0
    %3365 = vmatpush.xpose.msra.mxu0 0.0
    %3366 = vmatpush.xpose.msra.mxu0 0.0
    %3367 = vmatpush.xpose.msra.mxu0 0.0
    %3368 = vmatpush.xpose.msra.mxu0 0.0
    %3369 = vmatpush.xpose.msra.mxu0 0.0
    %3370 = vmatpush.xpose.msra.mxu0 0.0
    %3371 = vmatpush.xpose.msra.mxu0 0.0
    %3372 = vmatpush.xpose.msra.mxu0 0.0
    %3373 = vmatpush.xpose.msra.mxu0 %v3356
    %3374 = vmatmul.f32.gmra.mxu0 %v3353
    %v3375 = vpop.f32.mrf.mxu0
    %v3376 = vadd.f32 0.0, %v3375
    %3377 = vdwg.mxu0
    %v3378 = vmul.f32 %v3376, 0.25
    %vm3379 = vcmask 57344
    %v3380 = vsel %vm3379, %v3378, -inf
    %3381 = vmax.xlane.f32.xlu0 %v3380
    %v3382 = vpop.xlane.xlu0 %3381
    %v3383 = vsub.f32 %v3378, %v3382
    %v3384 = vmul.f32 %v3383, 1.442695
    %v3385 = vpow.pop %v3384
    %v3386 = vsel %vm3379, %v3385, 0.0
    %3387 = vadd.xlane.f32.xlu0 %v3386
    %v3388 = vpop.xlane.xlu0 %3387
    %v3389 = vrcp.pop %v3388
    %v3390 = vmul.f32 %v3385, %v3389
    %v3392 = vsel %vm153, %v3390, 0
    %3394 = vmatpush.msra.mxu0 0.0
    %3395 = vmatpush.msra.mxu0 0.0
    %3396 = vmatpush.msra.mxu0 0.0
    %3397 = vmatpush.msra.mxu0 0.0
    %3398 = vmatpush.msra.mxu0 0.0
    %3399 = vmatpush.msra.mxu0 0.0
    %3400 = vmatpush.msra.mxu0 0.0
    %3401 = vmatpush.msra.mxu0 0.0
    %3402 = vmatpush.msra.mxu0 0.0
    %3403 = vmatpush.msra.mxu0 0.0
    %3404 = vmatpush.msra.mxu0 0.0
    %3405 = vmatpush.msra.mxu0 0.0
    %3406 = vmatpush.msra.mxu0 0.0
    %3407 = vmatpush.msra.mxu0 0.0
    %3408 = vmatpush.msra.mxu0 0.0
    %3409 = vmatpush.msra.mxu0 %v3350
    %3410 = vmatmul.f32.gmra.mxu0 %v3392
    %v3411 = vpop.f32.mrf.mxu0
    %v3412 = vadd.f32 0.0, %v3411
    %3413 = vdwg.mxu0
    %v3415 = vrot.slane %v152, 5
    %vm3417 = vcmask 1042432
    %v3418 = vsel %vm3417, 0.0, %v3415
    %v3419 = vsel %vm3417, %v3415, 0.0
    %vm3422 = vcmask 1046528
    %v3423 = vrot.slane %v3418, 1
    %v3424 = vrot.slane %v3419, 1
    %v3425 = vsel %vm3422, %v3423, %v3424
    %3426 = vrot.lane.b32.xlu0 %v3425, 16
    %v3427 = vpop.permute.xlu0 %3426
    %vm3429 = vcmask 1045504
    %v3430 = vrot.slane %v3418, 2
    %v3431 = vrot.slane %v3419, 2
    %v3432 = vsel %vm3429, %v3430, %v3431
    %3433 = vrot.lane.b32.xlu0 %v3432, 32
    %v3434 = vpop.permute.xlu0 %3433
    %vm3436 = vcmask 1044480
    %v3437 = vrot.slane %v3418, 3
    %v3438 = vrot.slane %v3419, 3
    %v3439 = vsel %vm3436, %v3437, %v3438
    %3440 = vrot.lane.b32.xlu0 %v3439, 48
    %v3441 = vpop.permute.xlu0 %3440
    %vm3443 = vcmask 1043456
    %v3444 = vrot.slane %v3418, 4
    %v3445 = vrot.slane %v3419, 4
    %v3446 = vsel %vm3443, %v3444, %v3445
    %3447 = vrot.lane.b32.xlu0 %v3446, 64
    %v3448 = vpop.permute.xlu0 %3447
    %v3450 = vrot.slane %v3418, 5
    %v3451 = vrot.slane %v3419, 5
    %v3452 = vsel %vm3417, %v3450, %v3451
    %3453 = vrot.lane.b32.xlu0 %v3452, 80
    %v3454 = vpop.permute.xlu0 %3453
    %v3456 = vrot.slane %v3418, 6
    %v3457 = vrot.slane %v3419, 6
    %v3458 = vsel %vm310, %v3456, %v3457
    %3459 = vrot.lane.b32.xlu0 %v3458, 96
    %v3460 = vpop.permute.xlu0 %3459
    %vm3462 = vcmask 1040384
    %v3463 = vrot.slane %v3418, 7
    %v3464 = vrot.slane %v3419, 7
    %v3465 = vsel %vm3462, %v3463, %v3464
    %3466 = vrot.lane.b32.xlu0 %v3465, 112
    %v3467 = vpop.permute.xlu0 %3466
    %v3469 = vsel %vm208, %v3418, %v3427
    %vm3470 = vcmask 261120
    %v3471 = vsel %vm3470, %v3469, %v3434
    %vm3472 = vcmask 392192
    %v3473 = vsel %vm3472, %v3471, %v3441
    %vm3474 = vcmask 523264
    %v3475 = vsel %vm3474, %v3473, %v3448
    %vm3476 = vcmask 654336
    %v3477 = vsel %vm3476, %v3475, %v3454
    %vm3478 = vcmask 785408
    %v3479 = vsel %vm3478, %v3477, %v3460
    %vm3480 = vcmask 916480
    %v3481 = vsel %vm3480, %v3479, %v3467
    %v3482 = vld [vmem:[%s45] sm:$0xff]
    %v3483 = vld [vmem:[%s45 + $0x8] sm:$0xff]
    %v3484 = vld [vmem:[%s45 + $0x10] sm:$0xff]
    %v3485 = vld [vmem:[%s45 + $0x18] sm:$0xff]
    %v3486 = vld [vmem:[%s45 + $0x20] sm:$0xff]
    %v3487 = vld [vmem:[%s45 + $0x28] sm:$0xff]
    %v3488 = vld [vmem:[%s45 + $0x30] sm:$0xff]
    %v3489 = vld [vmem:[%s45 + $0x38] sm:$0xff]
    %v3490 = vld [vmem:[%s45 + $0x40] sm:$0xff]
    %v3491 = vld [vmem:[%s45 + $0x48] sm:$0xff]
    %v3492 = vld [vmem:[%s45 + $0x50] sm:$0xff]
    %v3493 = vld [vmem:[%s45 + $0x58] sm:$0xff]
    %v3494 = vld [vmem:[%s45 + $0x60] sm:$0xff]
    %v3495 = vld [vmem:[%s45 + $0x68] sm:$0xff]
    %v3496 = vld [vmem:[%s45 + $0x70] sm:$0xff]
    %v3497 = vld [vmem:[%s45 + $0x78] sm:$0xff]
    %v3498 = vld [vmem:[%s47] sm:$0x1]
    %v3500 = vperm.slane %v3498, 0
    %3502 = vmatpush.msra.mxu0 %v3497
    %3503 = vmatpush.msra.mxu0 %v3496
    %3504 = vmatpush.msra.mxu0 %v3495
    %3505 = vmatpush.msra.mxu0 %v3494
    %3506 = vmatpush.msra.mxu0 %v3493
    %3507 = vmatpush.msra.mxu0 %v3492
    %3508 = vmatpush.msra.mxu0 %v3491
    %3509 = vmatpush.msra.mxu0 %v3490
    %3510 = vmatpush.msra.mxu0 %v3489
    %3511 = vmatpush.msra.mxu0 %v3488
    %3512 = vmatpush.msra.mxu0 %v3487
    %3513 = vmatpush.msra.mxu0 %v3486
    %3514 = vmatpush.msra.mxu0 %v3485
    %3515 = vmatpush.msra.mxu0 %v3484
    %3516 = vmatpush.msra.mxu0 %v3483
    %3517 = vmatpush.msra.mxu0 %v3482
    %3518 = vmatmul.f32.gmra.mxu0 %v3481
    %v3519 = vpop.f32.mrf.mxu0
    %v3520 = vadd.f32 %v3500, %v3519
    %3521 = vdwg.mxu0
    %v3522 = vmax.f32 %v3520, 0.0
    %v3523 = vsel %vm3470, %v3522, 0.0
    %v3524 = vrot.slane %v3523, 4
    %v3525 = vadd.f32 %v3523, %v3524
    %v3526 = vrot.slane %v3525, 2
    %v3527 = vadd.f32 %v3525, %v3526
    %v3528 = vrot.slane %v3527, 1
    %v3529 = vadd.f32 %v3527, %v3528
    %v3530 = vrcp.pop 8.0
    %v3531 = vmul.f32 8.0, %v3530
    %v3532 = vsub.f32 1.0, %v3531
    %v3533 = vmul.f32 %v3530, %v3532
    %v3534 = vadd.f32 %v3530, %v3533
    %vm3535 = vweird.f32 %v3530
    %v3536 = vsel %vm3535, %v3530, %v3534
    %v3537 = vmul.f32 %v3529, %v3536
    %v3538 = vld [vmem:[%s49] sm:$0xff]
    %v3539 = vld [vmem:[%s49 + $0x8] sm:$0xff]
    %v3540 = vld [vmem:[%s49 + $0x10] sm:$0xff]
    %v3541 = vld [vmem:[%s49 + $0x18] sm:$0xff]
    %v3543 = vsel %vm3470, %v3537, 0
    %3545 = vmatpush.msra.mxu0 0.0
    %3546 = vmatpush.msra.mxu0 0.0
    %3547 = vmatpush.msra.mxu0 0.0
    %3548 = vmatpush.msra.mxu0 0.0
    %3549 = vmatpush.msra.mxu0 0.0
    %3550 = vmatpush.msra.mxu0 0.0
    %3551 = vmatpush.msra.mxu0 0.0
    %3552 = vmatpush.msra.mxu0 0.0
    %3553 = vmatpush.msra.mxu0 0.0
    %3554 = vmatpush.msra.mxu0 0.0
    %3555 = vmatpush.msra.mxu0 0.0
    %3556 = vmatpush.msra.mxu0 0.0
    %3557 = vmatpush.msra.mxu0 %v3541
    %3558 = vmatpush.msra.mxu0 %v3540
    %3559 = vmatpush.msra.mxu0 %v3539
    %3560 = vmatpush.msra.mxu0 %v3538
    %3561 = vmatmul.f32.gmra.mxu0 %v3543
    %v3562 = vpop.f32.mrf.mxu0
    %v3563 = vadd.f32 0.0, %v3562
    %3564 = vdwg.mxu0
    %v3565 = vmax.f32 %v3563, 0.0
    %v3566 = vld [vmem:[%s51] sm:$0x3]
    %v3568 = vsel %vm306, %v3565, 0
    %v3571 = vsel %vm310, %v3566, 0
    %3573 = vmatpush.msra.mxu0 0.0
    %3574 = vmatpush.msra.mxu0 0.0
    %3575 = vmatpush.msra.mxu0 0.0
    %3576 = vmatpush.msra.mxu0 0.0
    %3577 = vmatpush.msra.mxu0 0.0
    %3578 = vmatpush.msra.mxu0 0.0
    %3579 = vmatpush.msra.mxu0 0.0
    %3580 = vmatpush.msra.mxu0 0.0
    %3581 = vmatpush.msra.mxu0 0.0
    %3582 = vmatpush.msra.mxu0 0.0
    %3583 = vmatpush.msra.mxu0 0.0
    %3584 = vmatpush.msra.mxu0 0.0
    %3585 = vmatpush.msra.mxu0 0.0
    %3586 = vmatpush.msra.mxu0 0.0
    %3587 = vmatpush.msra.mxu0 0.0
    %3588 = vmatpush.msra.mxu0 %v3571
    %3589 = vmatmul.f32.gmra.mxu0 %v3568
    %v3590 = vpop.f32.mrf.mxu0
    %v3591 = vadd.f32 0.0, %v3590
    %3592 = vdwg.mxu0
    %v3593 = vxor.u32 %v3591, 2147483648
    %v3594 = vmul.f32 %v3593, 1.442695
    %v3595 = vpow.pop %v3594
    %v3596 = vadd.f32 %v3595, 1.0
    %v3597 = vrcp.pop %v3596
    %v3598 = vmul.f32 %v3596, %v3597
    %v3599 = vsub.f32 1.0, %v3598
    %v3600 = vmul.f32 %v3597, %v3599
    %v3601 = vadd.f32 %v3597, %v3600
    %vm3602 = vweird.f32 %v3596
    %vm3603 = vweird.f32 %v3597
    %vm3604 = vmor %vm3602, %vm3603
    %v3605 = vsel %vm3604, %v3597, %v3601
    %v3606 = vand.u32 2147483647, %v3596
    %vm3607 = vcmp.eq.f32.partialorder %v3606, 8.507059e+37
    %v3608 = vand.u32 %v3596, 2147483648
    %v3609 = vor.u32 1.1754944e-38, %v3608
    %v3610 = vsel %vm3607, %v3609, %v3605
    %v3611 = vmul.f32 1.0, %v3610
    %v3612 = vperm.slane %v3611, 0
    %v3613 = vmul.f32 %v3522, %v3612
    %v3615 = vrot.slane %v3613, 6
    %v3617 = vsel %vm310, 0.0, %v3615
    %v3618 = vsel %vm310, %v3615, 0.0
    %v3621 = vrot.slane %v3617, 1
    %v3622 = vrot.slane %v3618, 1
    %v3623 = vsel %vm3422, %v3621, %v3622
    %3624 = vrot.lane.b32.xlu0 %v3623, 32
    %v3625 = vpop.permute.xlu0 %3624
    %v3627 = vrot.slane %v3617, 2
    %v3628 = vrot.slane %v3618, 2
    %v3629 = vsel %vm3429, %v3627, %v3628
    %3630 = vrot.lane.b32.xlu0 %v3629, 64
    %v3631 = vpop.permute.xlu0 %3630
    %v3633 = vrot.slane %v3617, 3
    %v3634 = vrot.slane %v3618, 3
    %v3635 = vsel %vm3436, %v3633, %v3634
    %3636 = vrot.lane.b32.xlu0 %v3635, 96
    %v3637 = vpop.permute.xlu0 %3636
    %v3639 = vrot.slane %v3617, 4
    %v3640 = vrot.slane %v3618, 4
    %v3641 = vsel %vm3443, %v3639, %v3640
    %v3642 = vsel %vm3470, %v3617, %v3625
    %v3643 = vsel %vm3474, %v3642, %v3631
    %v3644 = vsel %vm3478, %v3643, %v3637
    %v3645 = vld [vmem:[%s53] sm:$0xff]
    %v3646 = vld [vmem:[%s53 + $0x8] sm:$0xff]
    %v3647 = vld [vmem:[%s53 + $0x10] sm:$0xff]
    %v3648 = vld [vmem:[%s53 + $0x18] sm:$0xff]
    %v3649 = vld [vmem:[%s53 + $0x20] sm:$0xff]
    %v3650 = vld [vmem:[%s53 + $0x28] sm:$0xff]
    %v3651 = vld [vmem:[%s53 + $0x30] sm:$0xff]
    %v3652 = vld [vmem:[%s53 + $0x38] sm:$0xff]
    %v3653 = vld [vmem:[%s53 + $0x40] sm:$0xff]
    %v3654 = vld [vmem:[%s53 + $0x48] sm:$0xff]
    %v3655 = vld [vmem:[%s53 + $0x50] sm:$0xff]
    %v3656 = vld [vmem:[%s53 + $0x58] sm:$0xff]
    %v3657 = vld [vmem:[%s53 + $0x60] sm:$0xff]
    %v3658 = vld [vmem:[%s53 + $0x68] sm:$0xff]
    %v3659 = vld [vmem:[%s53 + $0x70] sm:$0xff]
    %v3660 = vld [vmem:[%s53 + $0x78] sm:$0xff]
    %v3661 = vld [vmem:[%s53 + $0x80] sm:$0xff]
    %v3662 = vld [vmem:[%s53 + $0x88] sm:$0xff]
    %v3663 = vld [vmem:[%s53 + $0x90] sm:$0xff]
    %v3664 = vld [vmem:[%s53 + $0x98] sm:$0xff]
    %v3665 = vld [vmem:[%s55] sm:$0x1]
    %v3667 = vperm.slane %v3665, 0
    %v3669 = vsel %vm3470, %v3641, 0
    %3671 = vmatpush.msra.mxu0 %v3660
    %3672 = vmatpush.msra.mxu0 %v3659
    %3673 = vmatpush.msra.mxu0 %v3658
    %3674 = vmatpush.msra.mxu0 %v3657
    %3675 = vmatpush.msra.mxu0 %v3656
    %3676 = vmatpush.msra.mxu0 %v3655
    %3677 = vmatpush.msra.mxu0 %v3654
    %3678 = vmatpush.msra.mxu0 %v3653
    %3679 = vmatpush.msra.mxu0 %v3652
    %3680 = vmatpush.msra.mxu0 %v3651
    %3681 = vmatpush.msra.mxu0 %v3650
    %3682 = vmatpush.msra.mxu0 %v3649
    %3683 = vmatpush.msra.mxu0 %v3648
    %3684 = vmatpush.msra.mxu0 %v3647
    %3685 = vmatpush.msra.mxu0 %v3646
    %3686 = vmatpush.msra.mxu0 %v3645
    %3687 = vmatmul.f32.gmra.mxu0 %v3644
    %v3688 = vpop.f32.mrf.mxu0
    %v3689 = vadd.f32 %v3667, %v3688
    %3690 = vdwg.mxu0
    %3691 = vmatpush.msra.mxu0 0.0
    %3692 = vmatpush.msra.mxu0 0.0
    %3693 = vmatpush.msra.mxu0 0.0
    %3694 = vmatpush.msra.mxu0 0.0
    %3695 = vmatpush.msra.mxu0 0.0
    %3696 = vmatpush.msra.mxu0 0.0
    %3697 = vmatpush.msra.mxu0 0.0
    %3698 = vmatpush.msra.mxu0 0.0
    %3699 = vmatpush.msra.mxu0 0.0
    %3700 = vmatpush.msra.mxu0 0.0
    %3701 = vmatpush.msra.mxu0 0.0
    %3702 = vmatpush.msra.mxu0 0.0
    %3703 = vmatpush.msra.mxu0 %v3664
    %3704 = vmatpush.msra.mxu0 %v3663
    %3705 = vmatpush.msra.mxu0 %v3662
    %3706 = vmatpush.msra.mxu0 %v3661
    %3707 = vmatmul.f32.gmra.mxu0 %v3669
    %v3708 = vpop.f32.mrf.mxu0
    %v3709 = vadd.f32 %v3689, %v3708
    %3710 = vdwg.mxu0
    %v3711 = vmax.f32 %v3709, 0.0
    %v3712 = vsel %vm3470, %v3711, 0.0
    %v3713 = vrot.slane %v3712, 4
    %v3714 = vadd.f32 %v3712, %v3713
    %v3715 = vrot.slane %v3714, 2
    %v3716 = vadd.f32 %v3714, %v3715
    %v3717 = vrot.slane %v3716, 1
    %v3718 = vadd.f32 %v3716, %v3717
    %v3719 = vmul.f32 %v3718, %v3536
    %v3720 = vld [vmem:[%s57] sm:$0xff]
    %v3721 = vld [vmem:[%s57 + $0x8] sm:$0xff]
    %v3722 = vld [vmem:[%s57 + $0x10] sm:$0xff]
    %v3723 = vld [vmem:[%s57 + $0x18] sm:$0xff]
    %v3725 = vsel %vm3470, %v3719, 0
    %3727 = vmatpush.msra.mxu0 0.0
    %3728 = vmatpush.msra.mxu0 0.0
    %3729 = vmatpush.msra.mxu0 0.0
    %3730 = vmatpush.msra.mxu0 0.0
    %3731 = vmatpush.msra.mxu0 0.0
    %3732 = vmatpush.msra.mxu0 0.0
    %3733 = vmatpush.msra.mxu0 0.0
    %3734 = vmatpush.msra.mxu0 0.0
    %3735 = vmatpush.msra.mxu0 0.0
    %3736 = vmatpush.msra.mxu0 0.0
    %3737 = vmatpush.msra.mxu0 0.0
    %3738 = vmatpush.msra.mxu0 0.0
    %3739 = vmatpush.msra.mxu0 %v3723
    %3740 = vmatpush.msra.mxu0 %v3722
    %3741 = vmatpush.msra.mxu0 %v3721
    %3742 = vmatpush.msra.mxu0 %v3720
    %3743 = vmatmul.f32.gmra.mxu0 %v3725
    %v3744 = vpop.f32.mrf.mxu0
    %v3745 = vadd.f32 0.0, %v3744
    %3746 = vdwg.mxu0
    %v3747 = vmax.f32 %v3745, 0.0
    %v3748 = vld [vmem:[%s59] sm:$0x3]
    %v3750 = vsel %vm306, %v3747, 0
    %v3753 = vsel %vm310, %v3748, 0
    %3755 = vmatpush.msra.mxu0 0.0
    %3756 = vmatpush.msra.mxu0 0.0
    %3757 = vmatpush.msra.mxu0 0.0
    %3758 = vmatpush.msra.mxu0 0.0
    %3759 = vmatpush.msra.mxu0 0.0
    %3760 = vmatpush.msra.mxu0 0.0
    %3761 = vmatpush.msra.mxu0 0.0
    %3762 = vmatpush.msra.mxu0 0.0
    %3763 = vmatpush.msra.mxu0 0.0
    %3764 = vmatpush.msra.mxu0 0.0
    %3765 = vmatpush.msra.mxu0 0.0
    %3766 = vmatpush.msra.mxu0 0.0
    %3767 = vmatpush.msra.mxu0 0.0
    %3768 = vmatpush.msra.mxu0 0.0
    %3769 = vmatpush.msra.mxu0 0.0
    %3770 = vmatpush.msra.mxu0 %v3753
    %3771 = vmatmul.f32.gmra.mxu0 %v3750
    %v3772 = vpop.f32.mrf.mxu0
    %v3773 = vadd.f32 0.0, %v3772
    %3774 = vdwg.mxu0
    %v3775 = vxor.u32 %v3773, 2147483648
    %v3776 = vmul.f32 %v3775, 1.442695
    %v3777 = vpow.pop %v3776
    %v3778 = vadd.f32 %v3777, 1.0
    %v3779 = vrcp.pop %v3778
    %v3780 = vmul.f32 %v3778, %v3779
    %v3781 = vsub.f32 1.0, %v3780
    %v3782 = vmul.f32 %v3779, %v3781
    %v3783 = vadd.f32 %v3779, %v3782
    %vm3784 = vweird.f32 %v3778
    %vm3785 = vweird.f32 %v3779
    %vm3786 = vmor %vm3784, %vm3785
    %v3787 = vsel %vm3786, %v3779, %v3783
    %v3788 = vand.u32 2147483647, %v3778
    %vm3789 = vcmp.eq.f32.partialorder %v3788, 8.507059e+37
    %v3790 = vand.u32 %v3778, 2147483648
    %v3791 = vor.u32 1.1754944e-38, %v3790
    %v3792 = vsel %vm3789, %v3791, %v3787
    %v3793 = vmul.f32 1.0, %v3792
    %v3794 = vperm.slane %v3793, 0
    %v3795 = vmul.f32 %v3711, %v3794
    %v3797 = vrot.slane %v3795, 7
    %v3799 = vsel %vm3462, 0.0, %v3797
    %v3800 = vsel %vm3462, %v3797, 0.0
    %v3803 = vrot.slane %v3799, 1
    %v3804 = vrot.slane %v3800, 1
    %v3805 = vsel %vm3422, %v3803, %v3804
    %3806 = vrot.lane.b32.xlu0 %v3805, 32
    %v3807 = vpop.permute.xlu0 %3806
    %v3809 = vrot.slane %v3799, 2
    %v3810 = vrot.slane %v3800, 2
    %v3811 = vsel %vm3429, %v3809, %v3810
    %3812 = vrot.lane.b32.xlu0 %v3811, 64
    %v3813 = vpop.permute.xlu0 %3812
    %v3815 = vsel %vm3470, %v3799, %v3807
    %v3816 = vsel %vm3474, %v3815, %v3813
    %v3817 = vld [vmem:[%s61] sm:$0xff]
    %v3818 = vld [vmem:[%s61 + $0x8] sm:$0xff]
    %v3819 = vld [vmem:[%s61 + $0x10] sm:$0xff]
    %v3820 = vld [vmem:[%s61 + $0x18] sm:$0xff]
    %v3821 = vld [vmem:[%s61 + $0x20] sm:$0xff]
    %v3822 = vld [vmem:[%s61 + $0x28] sm:$0xff]
    %v3823 = vld [vmem:[%s61 + $0x30] sm:$0xff]
    %v3824 = vld [vmem:[%s61 + $0x38] sm:$0xff]
    %v3825 = vld [vmem:[%s61 + $0x40] sm:$0xff]
    %v3826 = vld [vmem:[%s61 + $0x48] sm:$0xff]
    %v3827 = vld [vmem:[%s61 + $0x50] sm:$0xff]
    %v3828 = vld [vmem:[%s61 + $0x58] sm:$0xff]
    %v3829 = vld [vmem:[%s63] sm:$0x1]
    %v3831 = vperm.slane %v3829, 0
    %v3834 = vsel %vm3478, %v3816, 0
    %3836 = vmatpush.msra.mxu0 0.0
    %3837 = vmatpush.msra.mxu0 0.0
    %3838 = vmatpush.msra.mxu0 0.0
    %3839 = vmatpush.msra.mxu0 0.0
    %3840 = vmatpush.msra.mxu0 %v3828
    %3841 = vmatpush.msra.mxu0 %v3827
    %3842 = vmatpush.msra.mxu0 %v3826
    %3843 = vmatpush.msra.mxu0 %v3825
    %3844 = vmatpush.msra.mxu0 %v3824
    %3845 = vmatpush.msra.mxu0 %v3823
    %3846 = vmatpush.msra.mxu0 %v3822
    %3847 = vmatpush.msra.mxu0 %v3821
    %3848 = vmatpush.msra.mxu0 %v3820
    %3849 = vmatpush.msra.mxu0 %v3819
    %3850 = vmatpush.msra.mxu0 %v3818
    %3851 = vmatpush.msra.mxu0 %v3817
    %3852 = vmatmul.f32.gmra.mxu0 %v3834
    %v3853 = vpop.f32.mrf.mxu0
    %v3854 = vadd.f32 %v3831, %v3853
    %3855 = vdwg.mxu0
    %v3856 = vmax.f32 %v3854, 0.0
    %v3857 = vsel %vm3470, %v3856, 0.0
    %v3858 = vrot.slane %v3857, 4
    %v3859 = vadd.f32 %v3857, %v3858
    %v3860 = vrot.slane %v3859, 2
    %v3861 = vadd.f32 %v3859, %v3860
    %v3862 = vrot.slane %v3861, 1
    %v3863 = vadd.f32 %v3861, %v3862
    %v3864 = vmul.f32 %v3863, %v3536
    %v3866 = vrot.slane %v3270, 7
    %v3867 = vsel %vm208, %v3866, 0
    %3869 = vmatpush.msra.mxu0 0.0
    %3870 = vmatpush.msra.mxu0 0.0
    %3871 = vmatpush.msra.mxu0 0.0
    %3872 = vmatpush.msra.mxu0 0.0
    %3873 = vmatpush.msra.mxu0 0.0
    %3874 = vmatpush.msra.mxu0 0.0
    %3875 = vmatpush.msra.mxu0 0.0
    %3876 = vmatpush.msra.mxu0 0.0
    %3877 = vmatpush.msra.mxu0 0.0
    %3878 = vmatpush.msra.mxu0 0.0
    %3879 = vmatpush.msra.mxu0 0.0
    %3880 = vmatpush.msra.mxu0 0.0
    %3881 = vmatpush.msra.mxu0 0.0
    %3882 = vmatpush.msra.mxu0 0.0
    %3883 = vmatpush.msra.mxu0 %v3272
    %3884 = vmatpush.msra.mxu0 %v3271
    %3885 = vmatmul.f32.gmra.mxu0 %v3867
    %v3886 = vpop.f32.mrf.mxu0
    %v3887 = vadd.f32 %v3273, %v3886
    %3888 = vdwg.mxu0
    %v3889 = vsel %vm208, %v3270, 0
    %3891 = vmatpush.msra.mxu0 0.0
    %3892 = vmatpush.msra.mxu0 0.0
    %3893 = vmatpush.msra.mxu0 0.0
    %3894 = vmatpush.msra.mxu0 0.0
    %3895 = vmatpush.msra.mxu0 0.0
    %3896 = vmatpush.msra.mxu0 0.0
    %3897 = vmatpush.msra.mxu0 0.0
    %3898 = vmatpush.msra.mxu0 0.0
    %3899 = vmatpush.msra.mxu0 0.0
    %3900 = vmatpush.msra.mxu0 0.0
    %3901 = vmatpush.msra.mxu0 0.0
    %3902 = vmatpush.msra.mxu0 0.0
    %3903 = vmatpush.msra.mxu0 0.0
    %3904 = vmatpush.msra.mxu0 0.0
    %3905 = vmatpush.msra.mxu0 %v3299
    %3906 = vmatpush.msra.mxu0 %v3298
    %3907 = vmatmul.f32.gmra.mxu0 %v3889
    %v3908 = vpop.f32.mrf.mxu0
    %v3909 = vadd.f32 %v3302, %v3908
    %3910 = vdwg.mxu0
    %3911 = vmatpush.msra.mxu0 0.0
    %3912 = vmatpush.msra.mxu0 0.0
    %3913 = vmatpush.msra.mxu0 0.0
    %3914 = vmatpush.msra.mxu0 0.0
    %3915 = vmatpush.msra.mxu0 0.0
    %3916 = vmatpush.msra.mxu0 0.0
    %3917 = vmatpush.msra.mxu0 0.0
    %3918 = vmatpush.msra.mxu0 0.0
    %3919 = vmatpush.msra.mxu0 0.0
    %3920 = vmatpush.msra.mxu0 0.0
    %3921 = vmatpush.msra.mxu0 0.0
    %3922 = vmatpush.msra.mxu0 0.0
    %3923 = vmatpush.msra.mxu0 0.0
    %3924 = vmatpush.msra.mxu0 0.0
    %3925 = vmatpush.msra.mxu0 %v3327
    %3926 = vmatpush.msra.mxu0 %v3326
    %3927 = vmatmul.f32.gmra.mxu0 %v3889
    %v3928 = vpop.f32.mrf.mxu0
    %v3929 = vadd.f32 %v3330, %v3928
    %3930 = vdwg.mxu0
    %v3932 = vsel %vm208, %v3887, 0
    %v3935 = vsel %vm208, %v3909, 0
    %3937 = vmatpush.xpose.msra.mxu0 0.0
    %3938 = vmatpush.xpose.msra.mxu0 0.0
    %3939 = vmatpush.xpose.msra.mxu0 0.0
    %3940 = vmatpush.xpose.msra.mxu0 0.0
    %3941 = vmatpush.xpose.msra.mxu0 0.0
    %3942 = vmatpush.xpose.msra.mxu0 0.0
    %3943 = vmatpush.xpose.msra.mxu0 0.0
    %3944 = vmatpush.xpose.msra.mxu0 0.0
    %3945 = vmatpush.xpose.msra.mxu0 0.0
    %3946 = vmatpush.xpose.msra.mxu0 0.0
    %3947 = vmatpush.xpose.msra.mxu0 0.0
    %3948 = vmatpush.xpose.msra.mxu0 0.0
    %3949 = vmatpush.xpose.msra.mxu0 0.0
    %3950 = vmatpush.xpose.msra.mxu0 0.0
    %3951 = vmatpush.xpose.msra.mxu0 0.0
    %3952 = vmatpush.xpose.msra.mxu0 %v3935
    %3953 = vmatmul.f32.gmra.mxu0 %v3932
    %v3954 = vpop.f32.mrf.mxu0
    %v3955 = vadd.f32 0.0, %v3954
    %3956 = vdwg.mxu0
    %v3957 = vmul.f32 %v3955, 0.25
    %v3958 = vsel %vm3379, %v3957, -inf
    %3959 = vmax.xlane.f32.xlu0 %v3958
    %v3960 = vpop.xlane.xlu0 %3959
    %v3961 = vsub.f32 %v3957, %v3960
    %v3962 = vmul.f32 %v3961, 1.442695
    %v3963 = vpow.pop %v3962
    %v3964 = vsel %vm3379, %v3963, 0.0
    %3965 = vadd.xlane.f32.xlu0 %v3964
    %v3966 = vpop.xlane.xlu0 %3965
    %v3967 = vrcp.pop %v3966
    %v3968 = vmul.f32 %v3963, %v3967
    %v3970 = vsel %vm153, %v3968, 0
    %3972 = vmatpush.msra.mxu0 0.0
    %3973 = vmatpush.msra.mxu0 0.0
    %3974 = vmatpush.msra.mxu0 0.0
    %3975 = vmatpush.msra.mxu0 0.0
    %3976 = vmatpush.msra.mxu0 0.0
    %3977 = vmatpush.msra.mxu0 0.0
    %3978 = vmatpush.msra.mxu0 0.0
    %3979 = vmatpush.msra.mxu0 0.0
    %3980 = vmatpush.msra.mxu0 0.0
    %3981 = vmatpush.msra.mxu0 0.0
    %3982 = vmatpush.msra.mxu0 0.0
    %3983 = vmatpush.msra.mxu0 0.0
    %3984 = vmatpush.msra.mxu0 0.0
    %3985 = vmatpush.msra.mxu0 0.0
    %3986 = vmatpush.msra.mxu0 0.0
    %3987 = vmatpush.msra.mxu0 %v3929
    %3988 = vmatmul.f32.gmra.mxu0 %v3970
    %v3989 = vpop.f32.mrf.mxu0
    %v3990 = vadd.f32 0.0, %v3989
    %3991 = vdwg.mxu0
    %v3993 = vrot.slane %v178, 5
    %v3995 = vsel %vm3417, 0.0, %v3993
    %v3996 = vsel %vm3417, %v3993, 0.0
    %v3999 = vrot.slane %v3995, 1
    %v4000 = vrot.slane %v3996, 1
    %v4001 = vsel %vm3422, %v3999, %v4000
    %4002 = vrot.lane.b32.xlu0 %v4001, 16
    %v4003 = vpop.permute.xlu0 %4002
    %v4005 = vrot.slane %v3995, 2
    %v4006 = vrot.slane %v3996, 2
    %v4007 = vsel %vm3429, %v4005, %v4006
    %4008 = vrot.lane.b32.xlu0 %v4007, 32
    %v4009 = vpop.permute.xlu0 %4008
    %v4011 = vrot.slane %v3995, 3
    %v4012 = vrot.slane %v3996, 3
    %v4013 = vsel %vm3436, %v4011, %v4012
    %4014 = vrot.lane.b32.xlu0 %v4013, 48
    %v4015 = vpop.permute.xlu0 %4014
    %v4017 = vrot.slane %v3995, 4
    %v4018 = vrot.slane %v3996, 4
    %v4019 = vsel %vm3443, %v4017, %v4018
    %4020 = vrot.lane.b32.xlu0 %v4019, 64
    %v4021 = vpop.permute.xlu0 %4020
    %v4023 = vrot.slane %v3995, 5
    %v4024 = vrot.slane %v3996, 5
    %v4025 = vsel %vm3417, %v4023, %v4024
    %4026 = vrot.lane.b32.xlu0 %v4025, 80
    %v4027 = vpop.permute.xlu0 %4026
    %v4029 = vrot.slane %v3995, 6
    %v4030 = vrot.slane %v3996, 6
    %v4031 = vsel %vm310, %v4029, %v4030
    %4032 = vrot.lane.b32.xlu0 %v4031, 96
    %v4033 = vpop.permute.xlu0 %4032
    %v4035 = vrot.slane %v3995, 7
    %v4036 = vrot.slane %v3996, 7
    %v4037 = vsel %vm3462, %v4035, %v4036
    %4038 = vrot.lane.b32.xlu0 %v4037, 112
    %v4039 = vpop.permute.xlu0 %4038
    %v4041 = vsel %vm208, %v3995, %v4003
    %v4042 = vsel %vm3470, %v4041, %v4009
    %v4043 = vsel %vm3472, %v4042, %v4015
    %v4044 = vsel %vm3474, %v4043, %v4021
    %v4045 = vsel %vm3476, %v4044, %v4027
    %v4046 = vsel %vm3478, %v4045, %v4033
    %v4047 = vsel %vm3480, %v4046, %v4039
    %4048 = vmatpush.msra.mxu0 %v3497
    %4049 = vmatpush.msra.mxu0 %v3496
    %4050 = vmatpush.msra.mxu0 %v3495
    %4051 = vmatpush.msra.mxu0 %v3494
    %4052 = vmatpush.msra.mxu0 %v3493
    %4053 = vmatpush.msra.mxu0 %v3492
    %4054 = vmatpush.msra.mxu0 %v3491
    %4055 = vmatpush.msra.mxu0 %v3490
    %4056 = vmatpush.msra.mxu0 %v3489
    %4057 = vmatpush.msra.mxu0 %v3488
    %4058 = vmatpush.msra.mxu0 %v3487
    %4059 = vmatpush.msra.mxu0 %v3486
    %4060 = vmatpush.msra.mxu0 %v3485
    %4061 = vmatpush.msra.mxu0 %v3484
    %4062 = vmatpush.msra.mxu0 %v3483
    %4063 = vmatpush.msra.mxu0 %v3482
    %4064 = vmatmul.f32.gmra.mxu0 %v4047
    %v4065 = vpop.f32.mrf.mxu0
    %v4066 = vadd.f32 %v3500, %v4065
    %4067 = vdwg.mxu0
    %v4068 = vmax.f32 %v4066, 0.0
    %v4069 = vsel %vm3470, %v4068, 0.0
    %v4070 = vrot.slane %v4069, 4
    %v4071 = vadd.f32 %v4069, %v4070
    %v4072 = vrot.slane %v4071, 2
    %v4073 = vadd.f32 %v4071, %v4072
    %v4074 = vrot.slane %v4073, 1
    %v4075 = vadd.f32 %v4073, %v4074
    %v4076 = vmul.f32 %v4075, %v3536
    %v4078 = vsel %vm3470, %v4076, 0
    %4080 = vmatpush.msra.mxu0 0.0
    %4081 = vmatpush.msra.mxu0 0.0
    %4082 = vmatpush.msra.mxu0 0.0
    %4083 = vmatpush.msra.mxu0 0.0
    %4084 = vmatpush.msra.mxu0 0.0
    %4085 = vmatpush.msra.mxu0 0.0
    %4086 = vmatpush.msra.mxu0 0.0
    %4087 = vmatpush.msra.mxu0 0.0
    %4088 = vmatpush.msra.mxu0 0.0
    %4089 = vmatpush.msra.mxu0 0.0
    %4090 = vmatpush.msra.mxu0 0.0
    %4091 = vmatpush.msra.mxu0 0.0
    %4092 = vmatpush.msra.mxu0 %v3541
    %4093 = vmatpush.msra.mxu0 %v3540
    %4094 = vmatpush.msra.mxu0 %v3539
    %4095 = vmatpush.msra.mxu0 %v3538
    %4096 = vmatmul.f32.gmra.mxu0 %v4078
    %v4097 = vpop.f32.mrf.mxu0
    %v4098 = vadd.f32 0.0, %v4097
    %4099 = vdwg.mxu0
    %v4100 = vmax.f32 %v4098, 0.0
    %v4102 = vsel %vm306, %v4100, 0
    %4104 = vmatpush.msra.mxu0 0.0
    %4105 = vmatpush.msra.mxu0 0.0
    %4106 = vmatpush.msra.mxu0 0.0
    %4107 = vmatpush.msra.mxu0 0.0
    %4108 = vmatpush.msra.mxu0 0.0
    %4109 = vmatpush.msra.mxu0 0.0
    %4110 = vmatpush.msra.mxu0 0.0
    %4111 = vmatpush.msra.mxu0 0.0
    %4112 = vmatpush.msra.mxu0 0.0
    %4113 = vmatpush.msra.mxu0 0.0
    %4114 = vmatpush.msra.mxu0 0.0
    %4115 = vmatpush.msra.mxu0 0.0
    %4116 = vmatpush.msra.mxu0 0.0
    %4117 = vmatpush.msra.mxu0 0.0
    %4118 = vmatpush.msra.mxu0 0.0
    %4119 = vmatpush.msra.mxu0 %v3571
    %4120 = vmatmul.f32.gmra.mxu0 %v4102
    %v4121 = vpop.f32.mrf.mxu0
    %v4122 = vadd.f32 0.0, %v4121
    %4123 = vdwg.mxu0
    %v4124 = vxor.u32 %v4122, 2147483648
    %v4125 = vmul.f32 %v4124, 1.442695
    %v4126 = vpow.pop %v4125
    %v4127 = vadd.f32 %v4126, 1.0
    %v4128 = vrcp.pop %v4127
    %v4129 = vmul.f32 %v4127, %v4128
    %v4130 = vsub.f32 1.0, %v4129
    %v4131 = vmul.f32 %v4128, %v4130
    %v4132 = vadd.f32 %v4128, %v4131
    %vm4133 = vweird.f32 %v4127
    %vm4134 = vweird.f32 %v4128
    %vm4135 = vmor %vm4133, %vm4134
    %v4136 = vsel %vm4135, %v4128, %v4132
    %v4137 = vand.u32 2147483647, %v4127
    %vm4138 = vcmp.eq.f32.partialorder %v4137, 8.507059e+37
    %v4139 = vand.u32 %v4127, 2147483648
    %v4140 = vor.u32 1.1754944e-38, %v4139
    %v4141 = vsel %vm4138, %v4140, %v4136
    %v4142 = vmul.f32 1.0, %v4141
    %v4143 = vperm.slane %v4142, 0
    %v4144 = vmul.f32 %v4068, %v4143
    %v4146 = vrot.slane %v4144, 6
    %v4148 = vsel %vm310, 0.0, %v4146
    %v4149 = vsel %vm310, %v4146, 0.0
    %v4152 = vrot.slane %v4148, 1
    %v4153 = vrot.slane %v4149, 1
    %v4154 = vsel %vm3422, %v4152, %v4153
    %4155 = vrot.lane.b32.xlu0 %v4154, 32
    %v4156 = vpop.permute.xlu0 %4155
    %v4158 = vrot.slane %v4148, 2
    %v4159 = vrot.slane %v4149, 2
    %v4160 = vsel %vm3429, %v4158, %v4159
    %4161 = vrot.lane.b32.xlu0 %v4160, 64
    %v4162 = vpop.permute.xlu0 %4161
    %v4164 = vrot.slane %v4148, 3
    %v4165 = vrot.slane %v4149, 3
    %v4166 = vsel %vm3436, %v4164, %v4165
    %4167 = vrot.lane.b32.xlu0 %v4166, 96
    %v4168 = vpop.permute.xlu0 %4167
    %v4170 = vrot.slane %v4148, 4
    %v4171 = vrot.slane %v4149, 4
    %v4172 = vsel %vm3443, %v4170, %v4171
    %v4173 = vsel %vm3470, %v4148, %v4156
    %v4174 = vsel %vm3474, %v4173, %v4162
    %v4175 = vsel %vm3478, %v4174, %v4168
    %v4176 = vsel %vm3470, %v4172, 0
    %4178 = vmatpush.msra.mxu0 %v3660
    %4179 = vmatpush.msra.mxu0 %v3659
    %4180 = vmatpush.msra.mxu0 %v3658
    %4181 = vmatpush.msra.mxu0 %v3657
    %4182 = vmatpush.msra.mxu0 %v3656
    %4183 = vmatpush.msra.mxu0 %v3655
    %4184 = vmatpush.msra.mxu0 %v3654
    %4185 = vmatpush.msra.mxu0 %v3653
    %4186 = vmatpush.msra.mxu0 %v3652
    %4187 = vmatpush.msra.mxu0 %v3651
    %4188 = vmatpush.msra.mxu0 %v3650
    %4189 = vmatpush.msra.mxu0 %v3649
    %4190 = vmatpush.msra.mxu0 %v3648
    %4191 = vmatpush.msra.mxu0 %v3647
    %4192 = vmatpush.msra.mxu0 %v3646
    %4193 = vmatpush.msra.mxu0 %v3645
    %4194 = vmatmul.f32.gmra.mxu0 %v4175
    %v4195 = vpop.f32.mrf.mxu0
    %v4196 = vadd.f32 %v3667, %v4195
    %4197 = vdwg.mxu0
    %4198 = vmatpush.msra.mxu0 0.0
    %4199 = vmatpush.msra.mxu0 0.0
    %4200 = vmatpush.msra.mxu0 0.0
    %4201 = vmatpush.msra.mxu0 0.0
    %4202 = vmatpush.msra.mxu0 0.0
    %4203 = vmatpush.msra.mxu0 0.0
    %4204 = vmatpush.msra.mxu0 0.0
    %4205 = vmatpush.msra.mxu0 0.0
    %4206 = vmatpush.msra.mxu0 0.0
    %4207 = vmatpush.msra.mxu0 0.0
    %4208 = vmatpush.msra.mxu0 0.0
    %4209 = vmatpush.msra.mxu0 0.0
    %4210 = vmatpush.msra.mxu0 %v3664
    %4211 = vmatpush.msra.mxu0 %v3663
    %4212 = vmatpush.msra.mxu0 %v3662
    %4213 = vmatpush.msra.mxu0 %v3661
    %4214 = vmatmul.f32.gmra.mxu0 %v4176
    %v4215 = vpop.f32.mrf.mxu0
    %v4216 = vadd.f32 %v4196, %v4215
    %4217 = vdwg.mxu0
    %v4218 = vmax.f32 %v4216, 0.0
    %v4219 = vsel %vm3470, %v4218, 0.0
    %v4220 = vrot.slane %v4219, 4
    %v4221 = vadd.f32 %v4219, %v4220
    %v4222 = vrot.slane %v4221, 2
    %v4223 = vadd.f32 %v4221, %v4222
    %v4224 = vrot.slane %v4223, 1
    %v4225 = vadd.f32 %v4223, %v4224
    %v4226 = vmul.f32 %v4225, %v3536
    %v4228 = vsel %vm3470, %v4226, 0
    %4230 = vmatpush.msra.mxu0 0.0
    %4231 = vmatpush.msra.mxu0 0.0
    %4232 = vmatpush.msra.mxu0 0.0
    %4233 = vmatpush.msra.mxu0 0.0
    %4234 = vmatpush.msra.mxu0 0.0
    %4235 = vmatpush.msra.mxu0 0.0
    %4236 = vmatpush.msra.mxu0 0.0
    %4237 = vmatpush.msra.mxu0 0.0
    %4238 = vmatpush.msra.mxu0 0.0
    %4239 = vmatpush.msra.mxu0 0.0
    %4240 = vmatpush.msra.mxu0 0.0
    %4241 = vmatpush.msra.mxu0 0.0
    %4242 = vmatpush.msra.mxu0 %v3723
    %4243 = vmatpush.msra.mxu0 %v3722
    %4244 = vmatpush.msra.mxu0 %v3721
    %4245 = vmatpush.msra.mxu0 %v3720
    %4246 = vmatmul.f32.gmra.mxu0 %v4228
    %v4247 = vpop.f32.mrf.mxu0
    %v4248 = vadd.f32 0.0, %v4247
    %4249 = vdwg.mxu0
    %v4250 = vmax.f32 %v4248, 0.0
    %v4252 = vsel %vm306, %v4250, 0
    %4254 = vmatpush.msra.mxu0 0.0
    %4255 = vmatpush.msra.mxu0 0.0
    %4256 = vmatpush.msra.mxu0 0.0
    %4257 = vmatpush.msra.mxu0 0.0
    %4258 = vmatpush.msra.mxu0 0.0
    %4259 = vmatpush.msra.mxu0 0.0
    %4260 = vmatpush.msra.mxu0 0.0
    %4261 = vmatpush.msra.mxu0 0.0
    %4262 = vmatpush.msra.mxu0 0.0
    %4263 = vmatpush.msra.mxu0 0.0
    %4264 = vmatpush.msra.mxu0 0.0
    %4265 = vmatpush.msra.mxu0 0.0
    %4266 = vmatpush.msra.mxu0 0.0
    %4267 = vmatpush.msra.mxu0 0.0
    %4268 = vmatpush.msra.mxu0 0.0
    %4269 = vmatpush.msra.mxu0 %v3753
    %4270 = vmatmul.f32.gmra.mxu0 %v4252
    %v4271 = vpop.f32.mrf.mxu0
    %v4272 = vadd.f32 0.0, %v4271
    %4273 = vdwg.mxu0
    %v4274 = vxor.u32 %v4272, 2147483648
    %v4275 = vmul.f32 %v4274, 1.442695
    %v4276 = vpow.pop %v4275
    %v4277 = vadd.f32 %v4276, 1.0
    %v4278 = vrcp.pop %v4277
    %v4279 = vmul.f32 %v4277, %v4278
    %v4280 = vsub.f32 1.0, %v4279
    %v4281 = vmul.f32 %v4278, %v4280
    %v4282 = vadd.f32 %v4278, %v4281
    %vm4283 = vweird.f32 %v4277
    %vm4284 = vweird.f32 %v4278
    %vm4285 = vmor %vm4283, %vm4284
    %v4286 = vsel %vm4285, %v4278, %v4282
    %v4287 = vand.u32 2147483647, %v4277
    %vm4288 = vcmp.eq.f32.partialorder %v4287, 8.507059e+37
    %v4289 = vand.u32 %v4277, 2147483648
    %v4290 = vor.u32 1.1754944e-38, %v4289
    %v4291 = vsel %vm4288, %v4290, %v4286
    %v4292 = vmul.f32 1.0, %v4291
    %v4293 = vperm.slane %v4292, 0
    %v4294 = vmul.f32 %v4218, %v4293
    %v4296 = vrot.slane %v4294, 7
    %v4298 = vsel %vm3462, 0.0, %v4296
    %v4299 = vsel %vm3462, %v4296, 0.0
    %v4302 = vrot.slane %v4298, 1
    %v4303 = vrot.slane %v4299, 1
    %v4304 = vsel %vm3422, %v4302, %v4303
    %4305 = vrot.lane.b32.xlu0 %v4304, 32
    %v4306 = vpop.permute.xlu0 %4305
    %v4308 = vrot.slane %v4298, 2
    %v4309 = vrot.slane %v4299, 2
    %v4310 = vsel %vm3429, %v4308, %v4309
    %4311 = vrot.lane.b32.xlu0 %v4310, 64
    %v4312 = vpop.permute.xlu0 %4311
    %v4314 = vsel %vm3470, %v4298, %v4306
    %v4315 = vsel %vm3474, %v4314, %v4312
    %v4317 = vsel %vm3478, %v4315, 0
    %4319 = vmatpush.msra.mxu0 0.0
    %4320 = vmatpush.msra.mxu0 0.0
    %4321 = vmatpush.msra.mxu0 0.0
    %4322 = vmatpush.msra.mxu0 0.0
    %4323 = vmatpush.msra.mxu0 %v3828
    %4324 = vmatpush.msra.mxu0 %v3827
    %4325 = vmatpush.msra.mxu0 %v3826
    %4326 = vmatpush.msra.mxu0 %v3825
    %4327 = vmatpush.msra.mxu0 %v3824
    %4328 = vmatpush.msra.mxu0 %v3823
    %4329 = vmatpush.msra.mxu0 %v3822
    %4330 = vmatpush.msra.mxu0 %v3821
    %4331 = vmatpush.msra.mxu0 %v3820
    %4332 = vmatpush.msra.mxu0 %v3819
    %4333 = vmatpush.msra.mxu0 %v3818
    %4334 = vmatpush.msra.mxu0 %v3817
    %4335 = vmatmul.f32.gmra.mxu0 %v4317
    %v4336 = vpop.f32.mrf.mxu0
    %v4337 = vadd.f32 %v3831, %v4336
    %4338 = vdwg.mxu0
    %v4339 = vmax.f32 %v4337, 0.0
    %v4340 = vsel %vm3470, %v4339, 0.0
    %v4341 = vrot.slane %v4340, 4
    %v4342 = vadd.f32 %v4340, %v4341
    %v4343 = vrot.slane %v4342, 2
    %v4344 = vadd.f32 %v4342, %v4343
    %v4345 = vrot.slane %v4344, 1
    %v4346 = vadd.f32 %v4344, %v4345
    %v4347 = vmul.f32 %v4346, %v3536
    %v4349 = vrot.slane %v3990, 7
    %v4351 = vsel %vm3462, %v3412, %v4349
    %v4352 = vsel %vm3462, %v3864, %v4347
    %v4353 = vld [vmem:[%s65] sm:$0xff]
    %v4354 = vld [vmem:[%s65 + $0x8] sm:$0xff]
    %v4355 = vld [vmem:[%s67] sm:$0xff]
    %v4356 = vld [vmem:[%s67 + $0x8] sm:$0xff]
    %v4357 = vld [vmem:[%s67 + $0x10] sm:$0xff]
    %v4358 = vld [vmem:[%s67 + $0x18] sm:$0xff]
    %v4360 = vsel %vm3470, %v4352, 0
    %4362 = vmatpush.msra.mxu0 0.0
    %4363 = vmatpush.msra.mxu0 0.0
    %4364 = vmatpush.msra.mxu0 0.0
    %4365 = vmatpush.msra.mxu0 0.0
    %4366 = vmatpush.msra.mxu0 0.0
    %4367 = vmatpush.msra.mxu0 0.0
    %4368 = vmatpush.msra.mxu0 0.0
    %4369 = vmatpush.msra.mxu0 0.0
    %4370 = vmatpush.msra.mxu0 0.0
    %4371 = vmatpush.msra.mxu0 0.0
    %4372 = vmatpush.msra.mxu0 0.0
    %4373 = vmatpush.msra.mxu0 0.0
    %4374 = vmatpush.msra.mxu0 %v4358
    %4375 = vmatpush.msra.mxu0 %v4357
    %4376 = vmatpush.msra.mxu0 %v4356
    %4377 = vmatpush.msra.mxu0 %v4355
    %4378 = vmatmul.f32.gmra.mxu0 %v4360
    %v4379 = vpop.f32.mrf.mxu0
    %v4380 = vadd.f32 0.0, %v4379
    %4381 = vdwg.mxu0
    %v4383 = vsel %vm208, %v4351, 0
    %4385 = vmatpush.msra.mxu0 0.0
    %4386 = vmatpush.msra.mxu0 0.0
    %4387 = vmatpush.msra.mxu0 0.0
    %4388 = vmatpush.msra.mxu0 0.0
    %4389 = vmatpush.msra.mxu0 0.0
    %4390 = vmatpush.msra.mxu0 0.0
    %4391 = vmatpush.msra.mxu0 0.0
    %4392 = vmatpush.msra.mxu0 0.0
    %4393 = vmatpush.msra.mxu0 0.0
    %4394 = vmatpush.msra.mxu0 0.0
    %4395 = vmatpush.msra.mxu0 0.0
    %4396 = vmatpush.msra.mxu0 0.0
    %4397 = vmatpush.msra.mxu0 0.0
    %4398 = vmatpush.msra.mxu0 0.0
    %4399 = vmatpush.msra.mxu0 %v4354
    %4400 = vmatpush.msra.mxu0 %v4353
    %4401 = vmatmul.f32.gmra.mxu0 %v4383
    %v4402 = vpop.f32.mrf.mxu0
    %v4403 = vadd.f32 %v4380, %v4402
    %4404 = vdwg.mxu0
    %v4405 = vld [vmem:[%s69] sm:$0x1]
    %v4407 = vperm.slane %v4405, 0
    %v4409 = vadd.f32 %v4403, %v4407
    %vm4410 = vcmask 33792
    %v4411 = vsel %vm4410, %v4409, -inf
    %4412 = vmax.xlane.f32.xlu0 %v4411
    %v4413 = vpop.xlane.xlu0 %4412
    %v4414 = vsub.f32 %v4409, %v4413
    %v4415 = vmul.f32 %v4414, 1.442695
    %v4416 = vpow.pop %v4415
    %4417 = vst.msk [vmem:[#allocation2] sm:$0x3] %vm4410, %v4409
    %v4418 = vsel %vm4410, %v4416, 0.0
    %4419 = vadd.xlane.f32.xlu0 %v4418
    %v4420 = vpop.xlane.xlu0 %4419
    %v4421 = vrcp.pop %v4420
    %v4422 = vmul.f32 %v4420, %v4421
    %v4423 = vsub.f32 1.0, %v4422
    %v4424 = vmul.f32 %v4421, %v4423
    %v4425 = vadd.f32 %v4421, %v4424
    %vm4426 = vweird.f32 %v4420
    %vm4427 = vweird.f32 %v4421
    %vm4428 = vmor %vm4426, %vm4427
    %v4429 = vsel %vm4428, %v4421, %v4425
    %v4430 = vand.u32 2147483647, %v4420
    %vm4431 = vcmp.eq.f32.partialorder %v4430, 8.507059e+37
    %v4432 = vand.u32 %v4420, 2147483648
    %v4433 = vor.u32 1.1754944e-38, %v4432
    %v4434 = vsel %vm4431, %v4433, %v4429
    %v4435 = vmul.f32 %v4416, %v4434
    %4436 = vst.msk [vmem:[#allocation4] sm:$0x3] %vm4410, %v4435
    // Predicated region
    $region142: #{dfenet_forward.1} parent=1 // pred_check
      _
    $region143: #{dfenet_forward.1} parent=1 // pred_check_branch
      %4438 = sbr.rel (0) target = $region145
    $region144: #{dfenet_forward.1} parent=1 // pred_region
      %4440 = vsyncadd [#allocation3], 0
      %s4442 = sshll.u32 [#allocation2], 4
      %s4443 = int_to_ptr.vmem [resolvable:$true] %s4442
      %s4444 = sshll.u32 %s71, 4
      %s4445 = int_to_ptr.hbm [resolvable:$true] %s4444
      %4447 = dma.vmem_to_hbm [thread:$0]  %s4443, 32, %s4445, [#allocation3]
    $region145: #{dfenet_forward.1} parent=1 // pred_fallthru
      _
    // Predicated region
    $region146: #{dfenet_forward.1} parent=1 // pred_check
      _
    $region147: #{dfenet_forward.1} parent=1 // pred_check_branch
      %4449 = sbr.rel (0) target = $region149
    $region148: #{dfenet_forward.1} parent=1 // pred_region
      %4451 = vsyncadd [#allocation5], 0
      %s4453 = sshll.u32 [#allocation4], 4
      %s4454 = int_to_ptr.vmem [resolvable:$true] %s4453
      %s4455 = sshll.u32 %s73, 4
      %s4456 = int_to_ptr.hbm [resolvable:$true] %s4455
      %4458 = dma.vmem_to_hbm [thread:$0]  %s4454, 32, %s4456, [#allocation5]
    $region149: #{dfenet_forward.1} parent=1 // pred_fallthru
      _
    // Predicated region
    $region150: #{dfenet_forward.1} parent=1 // pred_check
      _
    $region151: #{dfenet_forward.1} parent=1 // pred_check_branch
      %4460 = sbr.rel (0) target = $region153
    $region152: #{dfenet_forward.1} parent=1 // pred_region
      %4462 = dma.done [#allocation3], 32
    $region153: #{dfenet_forward.1} parent=1 // pred_fallthru
      _
    // Predicated region
    $region154: #{dfenet_forward.1} parent=1 // pred_check
      _
    $region155: #{dfenet_forward.1} parent=1 // pred_check_branch
      %4464 = sbr.rel (0) target = $region157
    $region156: #{dfenet_forward.1} parent=1 // pred_region
      %4466 = dma.done [#allocation5], 32
    $region157: #{dfenet_forward.1} parent=1 // pred_fallthru
      _
    %4467 = vsyncpa [#allocation3], 1
    %4468 = vsyncpa [#allocation5], 1

</llo_original>
